<compile_context>
chip_gen: v5e
topology: v5e:2x2
jax: 0.10.0
libtpu: 0.0.40
codegen_flags: <defaults>
</compile_context>

<pallas_src>
import functools

import jax
import jax.numpy as jnp
from jax.experimental import pallas as pl
from jax.experimental.pallas import tpu as pltpu

EPS = 1e-5  # PyTorch BatchNorm2d default eps


# --------------------------------------------------------------------------
# trace-time weight / vector preparation (cheap; cached per compilation)
# --------------------------------------------------------------------------
def _band_weights(w_hwio, w_padded, w_out, lanes):
    """Expand HWIO conv weights into Kh banded (lanes, Wout*Cout) matrices.

    With activations in the lane-dense layout (B, Hpad, lanes) where the first
    Wpad*Cin lanes hold the padded row (w*Cin + ci) and the rest are zero, a
    stride-1 conv becomes Kh accumulating matmuls:
      out[(b,i), j*Cout+co] += sum_l band_kh[(b,i), l] * Wb[kh][l, j*Cout+co]
    where Wb[kh][(j+kw)*Cin+ci, j*Cout+co] = w[kh, kw, ci, co] and 0 elsewhere.
    """
    Kh, Kw, Cin, Cout = w_hwio.shape
    wb = jnp.zeros((Kh, w_padded, Cin, w_out, Cout), w_hwio.dtype)
    for j in range(w_out):
        wb = wb.at[:, j:j + Kw, :, j, :].set(w_hwio)
    wb = wb.reshape(Kh, w_padded * Cin, w_out * Cout)
    if lanes > w_padded * Cin:  # zero rows for the lane-rounding padding
        wb = jnp.pad(wb, ((0, 0), (0, lanes - w_padded * Cin), (0, 0)))
    return wb


def _tile_lane(vec, w_out):
    """Per-channel (C,) vector -> (1, Wout*C) row matching the (.., W*C) lanes."""
    return jnp.tile(vec, (w_out,)).reshape(1, -1)


def _round128(n):
    return ((n + 127) // 128) * 128


# --------------------------------------------------------------------------
# fused forward
# --------------------------------------------------------------------------
def cnn_classifier_forward(x, params, kernel_sizes, paddings, batch_tile=None):
    """x: (B, H, W) float32, as in the PyTorch module (it unsqueezes channel=1)."""
    f32, bf16 = jnp.float32, jnp.bfloat16
    B, H, W = x.shape
    K1, K2 = kernel_sizes
    P1, P2 = paddings
    C0, C1, C2 = 1, params["w1"].shape[-1], params["w2"].shape[-1]

    # batch tile: big enough to feed the MXU (M = Bt*H1 rows per conv matmul)
    if batch_tile is None:
        batch_tile = min(B, 16)
    if B % batch_tile != 0:
        batch_tile = B
    Bt = batch_tile
    grid = (B // Bt,)

    # spatial sizes (stride = 1 everywhere, including the max-pools)
    H1, W1 = H + 2 * P1 - K1 + 1, W + 2 * P1 - K1 + 1          # conv1 out
    H1p, W1p = H1 + 2 * P1 - K1 + 1, W1 + 2 * P1 - K1 + 1      # maxpool1 out
    H2, W2 = H1p + 2 * P2 - K2 + 1, W1p + 2 * P2 - K2 + 1      # conv2 out
    H2p, W2p = H2 + 2 * P2 - K2 + 1, W2 + 2 * P2 - K2 + 1      # maxpool2 out

    # lane-dense padded-scratch widths, rounded up to full vregs (128 lanes)
    Lx = _round128((W + 2 * P1) * C0)
    La1 = _round128((W1 + 2 * P1) * C1)
    Lp1 = _round128((W1p + 2 * P2) * C1)
    La2 = _round128((W2 + 2 * P2) * C2)

    # conv weights -> banded matrices (Kh accumulating matmuls), bf16 operands
    w1b = _band_weights(params["w1"], W + 2 * P1, W1, Lx).astype(bf16)
    w2b = _band_weights(params["w2"], W1p + 2 * P2, W2, Lp1).astype(bf16)

    # BatchNorm (eval) folded into scale/shift; bias/scale/shift tiled to lanes
    s1 = params["g1"] * jax.lax.rsqrt(params["var1"] + EPS)
    s2 = params["g2"] * jax.lax.rsqrt(params["var2"] + EPS)
    bias1 = _tile_lane(params["b1"], W1)
    scale1 = _tile_lane(s1, W1)
    shift1 = _tile_lane(params["beta1"] - params["mu1"] * s1, W1)
    bias2 = _tile_lane(params["b2"], W2)
    scale2 = _tile_lane(s2, W2)
    shift2 = _tile_lane(params["beta2"] - params["mu2"] * s2, W2)

    # AdaptiveAvgPool2d(1): mean over W folded into fc1's weights; mean over H
    # is a cheap sublane reduction inside the kernel.
    fc1w = (jnp.tile(params["fc1_w"], (W2p, 1)) / W2p).astype(bf16)  # (W2p*C2, C2//2)
    fc1b = params["fc1_b"].reshape(1, -1)
    fc2w_row = params["fc2_w"].reshape(1, -1)                        # (1, C2//2)
    fc2b = params["fc2_b"].reshape(1, 1)

    def kernel(x_ref, w1b_ref, bias1_ref, scale1_ref, shift1_ref,
               w2b_ref, bias2_ref, scale2_ref, shift2_ref,
               fc1w_ref, fc1b_ref, fc2w_ref, fc2b_ref,
               o_ref,
               xpad, a1pad, p1pad, a2pad):

        def pad_into(ref, val, row_off, lane_off, fill):
            # write only the halo strips + interior (no full-buffer double write)
            Btl, Hp, Lp = ref.shape
            hin, win = val.shape[1], val.shape[2]
            if row_off > 0:                                   # top rows
                ref[:, 0:row_off, :] = jnp.full((Btl, row_off, Lp), fill, f32)
            bot = Hp - (row_off + hin)
            if bot > 0:                                       # bottom rows
                ref[:, row_off + hin:Hp, :] = jnp.full((Btl, bot, Lp), fill, f32)
            if lane_off > 0:                                  # left lane strip
                ref[:, row_off:row_off + hin, 0:lane_off] = jnp.full(
                    (Btl, hin, lane_off), fill, f32)
            right = Lp - (lane_off + win)
            if right > 0:                                     # right strip (+rounding)
                ref[:, row_off:row_off + hin, lane_off + win:Lp] = jnp.full(
                    (Btl, hin, right), fill, f32)
            ref[:, row_off:row_off + hin, lane_off:lane_off + win] = val

        def conv_relu_bn(pad_ref, wb_ref, bias_ref, scale_ref, shift_ref,
                         kh_taps, h_out, w_out, c_out):
            lanes = pad_ref.shape[2]
            acc = None
            for kh in range(kh_taps):    # Kh accumulating matmuls (no patch copy)
                band = pad_ref[:, kh:kh + h_out, :].reshape(Bt * h_out, lanes)
                part = jnp.dot(band.astype(bf16), wb_ref[kh],
                               preferred_element_type=f32)
                acc = part if acc is None else acc + part
            acc = jnp.maximum(acc + bias_ref[...], 0.0)       # conv bias + ReLU
            acc = acc * scale_ref[...] + shift_ref[...]       # folded BatchNorm (eval)
            return acc.reshape(Bt, h_out, w_out * c_out)      # lane-dense (B, H, W*C)

        def maxpool(pad_ref, k, h_out, w_out, c):
            # separable max: kh (sublane) direction first, then kw (lane) shifts
            hred = pad_ref[:, 0:h_out, :]
            for kh in range(1, k):
                hred = jnp.maximum(hred, pad_ref[:, kh:kh + h_out, :])
            out = hred[:, :, 0:w_out * c]
            for kw in range(1, k):
                out = jnp.maximum(out, hred[:, :, kw * c:kw * c + w_out * c])
            return out

        # conv1 -> ReLU -> BN1 -> maxpool1
        pad_into(xpad, x_ref[...], P1, P1 * C0, 0.0)
        a1 = conv_relu_bn(xpad, w1b_ref, bias1_ref, scale1_ref, shift1_ref,
                          K1, H1, W1, C1)
        pad_into(a1pad, a1, P1, P1 * C1, -jnp.inf)
        p1 = maxpool(a1pad, K1, H1p, W1p, C1)

        # conv2 -> ReLU -> BN2 -> maxpool2
        pad_into(p1pad, p1, P2, P2 * C1, 0.0)
        a2 = conv_relu_bn(p1pad, w2b_ref, bias2_ref, scale2_ref, shift2_ref,
                          K2, H2, W2, C2)
        pad_into(a2pad, a2, P2, P2 * C2, -jnp.inf)
        p2 = maxpool(a2pad, K2, H2p, W2p, C2)

        # AdaptiveAvgPool2d(1) -> fc1 -> ReLU -> dropout(eval=id) -> fc2 (VPU)
        s = jnp.mean(p2, axis=1)                              # (Bt, W2p*C2): mean over H
        h1 = jnp.dot(s.astype(bf16), fc1w_ref[...],           # mean over W folded in fc1w
                     preferred_element_type=f32) + fc1b_ref[...]
        h1 = jnp.maximum(h1, 0.0)
        # TODO(synk): reference forward calls self.dropout (module defines
        # dropout_layer); dropout is identity at inference, so omitted.
        o_ref[...] = (jnp.sum(h1 * fc2w_ref[...], axis=-1, keepdims=True)
                      + fc2b_ref[...])

    args = (x.astype(f32), w1b, bias1, scale1, shift1,
            w2b, bias2, scale2, shift2, fc1w, fc1b, fc2w_row, fc2b)

    def _const_spec(a):
        nd = a.ndim
        return pl.BlockSpec(a.shape, lambda i, _nd=nd: (0,) * _nd)

    in_specs = [pl.BlockSpec((Bt, H, W), lambda i: (i, 0, 0))]
    in_specs += [_const_spec(a) for a in args[1:]]            # weights stay VMEM-resident

    grid_spec = pltpu.PrefetchScalarGridSpec(
        num_scalar_prefetch=0,
        grid=grid,
        in_specs=in_specs,
        out_specs=pl.BlockSpec((Bt, 1), lambda i: (i, 0)),
        scratch_shapes=[
            pltpu.VMEM((Bt, H + 2 * P1, Lx), f32),            # padded input  (0 halo)
            pltpu.VMEM((Bt, H1 + 2 * P1, La1), f32),          # conv1 act (-inf halo)
            pltpu.VMEM((Bt, H1p + 2 * P2, Lp1), f32),         # pool1 out (0 halo)
            pltpu.VMEM((Bt, H2 + 2 * P2, La2), f32),          # conv2 act (-inf halo)
        ],
    )

    return pl.pallas_call(
        kernel,
        out_shape=jax.ShapeDtypeStruct((B, 1), f32),
        grid_spec=grid_spec,
        compiler_params=pltpu.CompilerParams(
            dimension_semantics=("parallel",),
            vmem_limit_bytes=32 * 1024 * 1024,
        ),
    )(*args)


# --------------------------------------------------------------------------
# pure-JAX reference (for a loose self-check of the fused kernel)
# --------------------------------------------------------------------------
def _reference_forward(x, params, kernel_sizes, paddings):
    h = x.astype(jnp.float32)[..., None]                      # NHWC, Cin=1
    for i in (1, 2):
        w, b = params[f"w{i}"], params[f"b{i}"]
        g, beta = params[f"g{i}"], params[f"beta{i}"]
        mu, var = params[f"mu{i}"], params[f"var{i}"]
        k, p = kernel_sizes[i - 1], paddings[i - 1]
        h = jax.lax.conv_general_dilated(
            h, w, window_strides=(1, 1), padding=[(p, p), (p, p)],
            dimension_numbers=("NHWC", "HWIO", "NHWC")) + b
        h = jnp.maximum(h, 0.0)
        h = (h - mu) * g * jax.lax.rsqrt(var + EPS) + beta
        h = jax.lax.reduce_window(h, -jnp.inf, jax.lax.max,
                                  (1, k, k, 1), (1, 1, 1, 1),
                                  [(0, 0), (p, p), (p, p), (0, 0)])
    feat = jnp.mean(h, axis=(1, 2))
    hid = jnp.maximum(feat @ params["fc1_w"] + params["fc1_b"], 0.0)
    return hid @ params["fc2_w"] + params["fc2_b"]


# --------------------------------------------------------------------------
if __name__ == "__main__":
    channels = [8, 16]
    kernel_sizes = (3, 3)
    paddings = (1, 1)
    B, H, W = 16, 16, 16
    batch_tile = 8            # grid=(2,): exercises pipelining / megacore sharding

    key = jax.random.PRNGKey(0)
    ks = jax.random.split(key, 16)

    params = {
        # conv1: Conv2d(1, channels[0], k=3, p=1)  (weights stored HWIO)
        "w1": 0.1 * jax.random.normal(ks[0], (3, 3, 1, channels[0]), jnp.float32),
        "b1": 0.1 * jax.random.normal(ks[1], (channels[0],), jnp.float32),
        # bn1 (eval: gamma, beta, running_mean, running_var)
        "g1": 1.0 + 0.1 * jax.random.normal(ks[2], (channels[0],), jnp.float32),
        "beta1": 0.1 * jax.random.normal(ks[3], (channels[0],), jnp.float32),
        "mu1": 0.05 * jax.random.normal(ks[4], (channels[0],), jnp.float32),
        "var1": 1.0 + 0.1 * jax.random.uniform(ks[5], (channels[0],), jnp.float32),
        # conv2: Conv2d(channels[0], channels[1], k=3, p=1)
        "w2": 0.1 * jax.random.normal(ks[6], (3, 3, channels[0], channels[1]), jnp.float32),
        "b2": 0.1 * jax.random.normal(ks[7], (channels[1],), jnp.float32),
        # bn2
        "g2": 1.0 + 0.1 * jax.random.normal(ks[8], (channels[1],), jnp.float32),
        "beta2": 0.1 * jax.random.normal(ks[9], (channels[1],), jnp.float32),
        "mu2": 0.05 * jax.random.normal(ks[10], (channels[1],), jnp.float32),
        "var2": 1.0 + 0.1 * jax.random.uniform(ks[11], (channels[1],), jnp.float32),
        # fc1: Linear(channels[1], channels[1] // 2)   (stored as (in, out))
        "fc1_w": 0.1 * jax.random.normal(ks[12], (channels[1], channels[1] // 2), jnp.float32),
        "fc1_b": 0.1 * jax.random.normal(ks[13], (channels[1] // 2,), jnp.float32),
        # fc2: Linear(channels[1] // 2, 1)
        "fc2_w": 0.1 * jax.random.normal(ks[14], (channels[1] // 2, 1), jnp.float32),
        "fc2_b": 0.1 * jax.random.normal(ks[15], (1,), jnp.float32),
    }

    x = jax.random.normal(key, (B, H, W), jnp.float32)

    fwd = jax.jit(functools.partial(cnn_classifier_forward,
                                    kernel_sizes=kernel_sizes,
                                    paddings=paddings,
                                    batch_tile=batch_tile))
    out = jax.block_until_ready(fwd(x, params))

    ref = _reference_forward(x, params, kernel_sizes, paddings)
    assert out.shape == (B, 1)
    assert bool(jnp.all(jnp.isfinite(out)))
    # loose tolerance: conv/fc matmuls use bf16 operands with f32 accumulation
    assert float(jnp.max(jnp.abs(out - ref))) < 5e-2

    print("KERNEL_OK")
</pallas_src>

<mosaic_0001>
module attributes {stable_mosaic.version = 11 : i64} {
  func.func @kernel(%arg0: i32, %arg1: memref<8x16x16xf32, #tpu.memory_space<vmem>>, %arg2: memref<3x128x128xbf16, #tpu.memory_space<vmem>>, %arg3: memref<1x128xf32, #tpu.memory_space<vmem>>, %arg4: memref<1x128xf32, #tpu.memory_space<vmem>>, %arg5: memref<1x128xf32, #tpu.memory_space<vmem>>, %arg6: memref<3x256x256xbf16, #tpu.memory_space<vmem>>, %arg7: memref<1x256xf32, #tpu.memory_space<vmem>>, %arg8: memref<1x256xf32, #tpu.memory_space<vmem>>, %arg9: memref<1x256xf32, #tpu.memory_space<vmem>>, %arg10: memref<256x8xbf16, #tpu.memory_space<vmem>>, %arg11: memref<1x8xf32, #tpu.memory_space<vmem>>, %arg12: memref<1x8xf32, #tpu.memory_space<vmem>>, %arg13: memref<1x1xf32, #tpu.memory_space<vmem>>, %arg14: memref<8x1xf32, #tpu.memory_space<vmem>>, %arg15: memref<8x18x128xf32, #tpu.memory_space<vmem>>, %arg16: memref<8x18x256xf32, #tpu.memory_space<vmem>>, %arg17: memref<8x18x256xf32, #tpu.memory_space<vmem>>, %arg18: memref<8x18x384xf32, #tpu.memory_space<vmem>>) attributes {dimension_semantics = [#tpu.dimension_semantics<parallel>], iteration_bounds = array<i64: 2>, scalar_prefetch = 0 : i64, scratch_operands = 4 : i64, tpu.core_type = #tpu.core_type<tc>, window_params = [{transform_indices = @transform_0, window_bounds = array<i64: 8, 16, 16>}, {pipeline_mode = #tpu.pipeline_mode<synchronous>, transform_indices = @transform_1, window_bounds = array<i64: 3, 128, 128>}, {pipeline_mode = #tpu.pipeline_mode<synchronous>, transform_indices = @transform_2, window_bounds = array<i64: 1, 128>}, {pipeline_mode = #tpu.pipeline_mode<synchronous>, transform_indices = @transform_3, window_bounds = array<i64: 1, 128>}, {pipeline_mode = #tpu.pipeline_mode<synchronous>, transform_indices = @transform_4, window_bounds = array<i64: 1, 128>}, {pipeline_mode = #tpu.pipeline_mode<synchronous>, transform_indices = @transform_5, window_bounds = array<i64: 3, 256, 256>}, {pipeline_mode = #tpu.pipeline_mode<synchronous>, transform_indices = @transform_6, window_bounds = array<i64: 1, 256>}, {pipeline_mode = #tpu.pipeline_mode<synchronous>, transform_indices = @transform_7, window_bounds = array<i64: 1, 256>}, {pipeline_mode = #tpu.pipeline_mode<synchronous>, transform_indices = @transform_8, window_bounds = array<i64: 1, 256>}, {pipeline_mode = #tpu.pipeline_mode<synchronous>, transform_indices = @transform_9, window_bounds = array<i64: 256, 8>}, {pipeline_mode = #tpu.pipeline_mode<synchronous>, transform_indices = @transform_10, window_bounds = array<i64: 1, 8>}, {pipeline_mode = #tpu.pipeline_mode<synchronous>, transform_indices = @transform_11, window_bounds = array<i64: 1, 8>}, {pipeline_mode = #tpu.pipeline_mode<synchronous>, transform_indices = @transform_12, window_bounds = array<i64: 1, 1>}, {transform_indices = @transform_13, window_bounds = array<i64: 8, 1>}]} {
    %c0 = arith.constant 0 : index
    %c0_0 = arith.constant 0 : index
    %c0_1 = arith.constant 0 : index
    %0 = vector.load %arg1[%c0, %c0_0, %c0_1] : memref<8x16x16xf32, #tpu.memory_space<vmem>>, vector<8x16x16xf32>
    %cst = arith.constant 0.000000e+00 : f32
    %1 = vector.broadcast %cst : f32 to vector<8x1x128xf32>
    %c0_2 = arith.constant 0 : index
    %c0_3 = arith.constant 0 : index
    %c0_4 = arith.constant 0 : index
    %2 = vector.load %arg15[%c0_2, %c0_3, %c0_4] : memref<8x18x128xf32, #tpu.memory_space<vmem>>, vector<8x1x128xf32>
    tpu.vector_store %arg15[%c0_2, %c0_3, %c0_4], %1 {strides = array<i32>} : memref<8x18x128xf32, #tpu.memory_space<vmem>>, vector<8x1x128xf32>,
    %cst_5 = arith.constant 0.000000e+00 : f32
    %3 = vector.broadcast %cst_5 : f32 to vector<8x1x128xf32>
    %c0_6 = arith.constant 0 : index
    %c17 = arith.constant 17 : index
    %c0_7 = arith.constant 0 : index
    %4 = vector.load %arg15[%c0_6, %c17, %c0_7] : memref<8x18x128xf32, #tpu.memory_space<vmem>>, vector<8x1x128xf32>
    tpu.vector_store %arg15[%c0_6, %c17, %c0_7], %3 {strides = array<i32>} : memref<8x18x128xf32, #tpu.memory_space<vmem>>, vector<8x1x128xf32>,
    %cst_8 = arith.constant 0.000000e+00 : f32
    %5 = vector.broadcast %cst_8 : f32 to vector<8x16x1xf32>
    %c0_9 = arith.constant 0 : index
    %c1 = arith.constant 1 : index
    %c0_10 = arith.constant 0 : index
    %6 = vector.load %arg15[%c0_9, %c1, %c0_10] : memref<8x18x128xf32, #tpu.memory_space<vmem>>, vector<8x16x1xf32>
    tpu.vector_store %arg15[%c0_9, %c1, %c0_10], %5 {strides = array<i32>} : memref<8x18x128xf32, #tpu.memory_space<vmem>>, vector<8x16x1xf32>,
    %cst_11 = arith.constant 0.000000e+00 : f32
    %7 = vector.broadcast %cst_11 : f32 to vector<8x16x111xf32>
    %c0_12 = arith.constant 0 : index
    %c1_13 = arith.constant 1 : index
    %c17_14 = arith.constant 17 : index
    %8 = vector.load %arg15[%c0_12, %c1_13, %c17_14] : memref<8x18x128xf32, #tpu.memory_space<vmem>>, vector<8x16x111xf32>
    tpu.vector_store %arg15[%c0_12, %c1_13, %c17_14], %7 {strides = array<i32>} : memref<8x18x128xf32, #tpu.memory_space<vmem>>, vector<8x16x111xf32>,
    %c0_15 = arith.constant 0 : index
    %c1_16 = arith.constant 1 : index
    %c1_17 = arith.constant 1 : index
    %9 = vector.load %arg15[%c0_15, %c1_16, %c1_17] : memref<8x18x128xf32, #tpu.memory_space<vmem>>, vector<8x16x16xf32>
    tpu.vector_store %arg15[%c0_15, %c1_16, %c1_17], %0 {strides = array<i32>} : memref<8x18x128xf32, #tpu.memory_space<vmem>>, vector<8x16x16xf32>,
    %c0_18 = arith.constant 0 : index
    %c0_19 = arith.constant 0 : index
    %c0_20 = arith.constant 0 : index
    %10 = vector.load %arg15[%c0_18, %c0_19, %c0_20] : memref<8x18x128xf32, #tpu.memory_space<vmem>>, vector<8x16x128xf32>
    %11 = vector.shape_cast %10 : vector<8x16x128xf32> to vector<128x128xf32>
    %12 = arith.truncf %11 : vector<128x128xf32> to vector<128x128xbf16>
    %c0_21 = arith.constant 0 : index
    %c0_22 = arith.constant 0 : index
    %c0_23 = arith.constant 0 : index
    %13 = vector.load %arg2[%c0_21, %c0_22, %c0_23] : memref<3x128x128xbf16, #tpu.memory_space<vmem>>, vector<1x128x128xbf16>
    %14 = vector.shape_cast %13 : vector<1x128x128xbf16> to vector<128x128xbf16>
    %cst_24 = arith.constant dense<0.000000e+00> : vector<128x128xf32>
    %15 = tpu.matmul %12, %14, %cst_24 {dimension_numbers = #tpu.dot_dimension_numbers<[1], [0], [0], [1], [0, 0, 1, 1], [], []>} : vector<128x128xbf16>, vector<128x128xbf16>, vector<128x128xf32> -> vector<128x128xf32>
    %c0_25 = arith.constant 0 : index
    %c1_26 = arith.constant 1 : index
    %c0_27 = arith.constant 0 : index
    %16 = vector.load %arg15[%c0_25, %c1_26, %c0_27] : memref<8x18x128xf32, #tpu.memory_space<vmem>>, vector<8x16x128xf32>
    %17 = vector.shape_cast %16 : vector<8x16x128xf32> to vector<128x128xf32>
    %18 = arith.truncf %17 : vector<128x128xf32> to vector<128x128xbf16>
    %c1_28 = arith.constant 1 : index
    %c0_29 = arith.constant 0 : index
    %c0_30 = arith.constant 0 : index
    %19 = vector.load %arg2[%c1_28, %c0_29, %c0_30] : memref<3x128x128xbf16, #tpu.memory_space<vmem>>, vector<1x128x128xbf16>
    %20 = vector.shape_cast %19 : vector<1x128x128xbf16> to vector<128x128xbf16>
    %cst_31 = arith.constant dense<0.000000e+00> : vector<128x128xf32>
    %21 = tpu.matmul %18, %20, %cst_31 {dimension_numbers = #tpu.dot_dimension_numbers<[1], [0], [0], [1], [0, 0, 1, 1], [], []>} : vector<128x128xbf16>, vector<128x128xbf16>, vector<128x128xf32> -> vector<128x128xf32>
    %22 = arith.addf %15, %21 : vector<128x128xf32>
    %c0_32 = arith.constant 0 : index
    %c2 = arith.constant 2 : index
    %c0_33 = arith.constant 0 : index
    %23 = vector.load %arg15[%c0_32, %c2, %c0_33] : memref<8x18x128xf32, #tpu.memory_space<vmem>>, vector<8x16x128xf32>
    %24 = vector.shape_cast %23 : vector<8x16x128xf32> to vector<128x128xf32>
    %25 = arith.truncf %24 : vector<128x128xf32> to vector<128x128xbf16>
    %c2_34 = arith.constant 2 : index
    %c0_35 = arith.constant 0 : index
    %c0_36 = arith.constant 0 : index
    %26 = vector.load %arg2[%c2_34, %c0_35, %c0_36] : memref<3x128x128xbf16, #tpu.memory_space<vmem>>, vector<1x128x128xbf16>
    %27 = vector.shape_cast %26 : vector<1x128x128xbf16> to vector<128x128xbf16>
    %cst_37 = arith.constant dense<0.000000e+00> : vector<128x128xf32>
    %28 = tpu.matmul %25, %27, %cst_37 {dimension_numbers = #tpu.dot_dimension_numbers<[1], [0], [0], [1], [0, 0, 1, 1], [], []>} : vector<128x128xbf16>, vector<128x128xbf16>, vector<128x128xf32> -> vector<128x128xf32>
    %29 = arith.addf %22, %28 : vector<128x128xf32>
    %c0_38 = arith.constant 0 : index
    %c0_39 = arith.constant 0 : index
    %30 = vector.load %arg3[%c0_38, %c0_39] : memref<1x128xf32, #tpu.memory_space<vmem>>, vector<1x128xf32>
    %31 = vector.broadcast %30 : vector<1x128xf32> to vector<128x128xf32>
    %32 = arith.addf %29, %31 : vector<128x128xf32>
    %cst_40 = arith.constant 0.000000e+00 : f32
    %33 = vector.broadcast %cst_40 : f32 to vector<128x128xf32>
    %34 = arith.maximumf %32, %33 : vector<128x128xf32>
    %c0_41 = arith.constant 0 : index
    %c0_42 = arith.constant 0 : index
    %35 = vector.load %arg4[%c0_41, %c0_42] : memref<1x128xf32, #tpu.memory_space<vmem>>, vector<1x128xf32>
    %36 = vector.broadcast %35 : vector<1x128xf32> to vector<128x128xf32>
    %37 = arith.mulf %34, %36 : vector<128x128xf32>
    %c0_43 = arith.constant 0 : index
    %c0_44 = arith.constant 0 : index
    %38 = vector.load %arg5[%c0_43, %c0_44] : memref<1x128xf32, #tpu.memory_space<vmem>>, vector<1x128xf32>
    %39 = vector.broadcast %38 : vector<1x128xf32> to vector<128x128xf32>
    %40 = arith.addf %37, %39 : vector<128x128xf32>
    %41 = vector.shape_cast %40 : vector<128x128xf32> to vector<8x16x128xf32>
    %cst_45 = arith.constant 0xFF800000 : f32
    %42 = vector.broadcast %cst_45 : f32 to vector<8x1x256xf32>
    %c0_46 = arith.constant 0 : index
    %c0_47 = arith.constant 0 : index
    %c0_48 = arith.constant 0 : index
    %43 = vector.load %arg16[%c0_46, %c0_47, %c0_48] : memref<8x18x256xf32, #tpu.memory_space<vmem>>, vector<8x1x256xf32>
    tpu.vector_store %arg16[%c0_46, %c0_47, %c0_48], %42 {strides = array<i32>} : memref<8x18x256xf32, #tpu.memory_space<vmem>>, vector<8x1x256xf32>,
    %cst_49 = arith.constant 0xFF800000 : f32
    %44 = vector.broadcast %cst_49 : f32 to vector<8x1x256xf32>
    %c0_50 = arith.constant 0 : index
    %c17_51 = arith.constant 17 : index
    %c0_52 = arith.constant 0 : index
    %45 = vector.load %arg16[%c0_50, %c17_51, %c0_52] : memref<8x18x256xf32, #tpu.memory_space<vmem>>, vector<8x1x256xf32>
    tpu.vector_store %arg16[%c0_50, %c17_51, %c0_52], %44 {strides = array<i32>} : memref<8x18x256xf32, #tpu.memory_space<vmem>>, vector<8x1x256xf32>,
    %cst_53 = arith.constant 0xFF800000 : f32
    %46 = vector.broadcast %cst_53 : f32 to vector<8x16x8xf32>
    %c0_54 = arith.constant 0 : index
    %c1_55 = arith.constant 1 : index
    %c0_56 = arith.constant 0 : index
    %47 = vector.load %arg16[%c0_54, %c1_55, %c0_56] : memref<8x18x256xf32, #tpu.memory_space<vmem>>, vector<8x16x8xf32>
    tpu.vector_store %arg16[%c0_54, %c1_55, %c0_56], %46 {strides = array<i32>} : memref<8x18x256xf32, #tpu.memory_space<vmem>>, vector<8x16x8xf32>,
    %cst_57 = arith.constant 0xFF800000 : f32
    %48 = vector.broadcast %cst_57 : f32 to vector<8x16x120xf32>
    %c0_58 = arith.constant 0 : index
    %c1_59 = arith.constant 1 : index
    %c136 = arith.constant 136 : index
    %49 = vector.load %arg16[%c0_58, %c1_59, %c136] : memref<8x18x256xf32, #tpu.memory_space<vmem>>, vector<8x16x120xf32>
    tpu.vector_store %arg16[%c0_58, %c1_59, %c136], %48 {strides = array<i32>} : memref<8x18x256xf32, #tpu.memory_space<vmem>>, vector<8x16x120xf32>,
    %c0_60 = arith.constant 0 : index
    %c1_61 = arith.constant 1 : index
    %c8 = arith.constant 8 : index
    %50 = vector.load %arg16[%c0_60, %c1_61, %c8] : memref<8x18x256xf32, #tpu.memory_space<vmem>>, vector<8x16x128xf32>
    tpu.vector_store %arg16[%c0_60, %c1_61, %c8], %41 {strides = array<i32>} : memref<8x18x256xf32, #tpu.memory_space<vmem>>, vector<8x16x128xf32>,
    %c0_62 = arith.constant 0 : index
    %c0_63 = arith.constant 0 : index
    %c0_64 = arith.constant 0 : index
    %51 = vector.load %arg16[%c0_62, %c0_63, %c0_64] : memref<8x18x256xf32, #tpu.memory_space<vmem>>, vector<8x16x256xf32>
    %c0_65 = arith.constant 0 : index
    %c1_66 = arith.constant 1 : index
    %c0_67 = arith.constant 0 : index
    %52 = vector.load %arg16[%c0_65, %c1_66, %c0_67] : memref<8x18x256xf32, #tpu.memory_space<vmem>>, vector<8x16x256xf32>
    %53 = arith.maximumf %51, %52 : vector<8x16x256xf32>
    %c0_68 = arith.constant 0 : index
    %c2_69 = arith.constant 2 : index
    %c0_70 = arith.constant 0 : index
    %54 = vector.load %arg16[%c0_68, %c2_69, %c0_70] : memref<8x18x256xf32, #tpu.memory_space<vmem>>, vector<8x16x256xf32>
    %55 = arith.maximumf %53, %54 : vector<8x16x256xf32>
    %56 = vector.extract_strided_slice %55 {offsets = [0, 0, 0], sizes = [8, 16, 128], strides = [1, 1, 1]} : vector<8x16x256xf32> to vector<8x16x128xf32>
    %57 = vector.extract_strided_slice %55 {offsets = [0, 0, 8], sizes = [8, 16, 128], strides = [1, 1, 1]} : vector<8x16x256xf32> to vector<8x16x128xf32>
    %58 = arith.maximumf %56, %57 : vector<8x16x128xf32>
    %59 = vector.extract_strided_slice %55 {offsets = [0, 0, 16], sizes = [8, 16, 128], strides = [1, 1, 1]} : vector<8x16x256xf32> to vector<8x16x128xf32>
    %60 = arith.maximumf %58, %59 : vector<8x16x128xf32>
    %cst_71 = arith.constant 0.000000e+00 : f32
    %61 = vector.broadcast %cst_71 : f32 to vector<8x1x256xf32>
    %c0_72 = arith.constant 0 : index
    %c0_73 = arith.constant 0 : index
    %c0_74 = arith.constant 0 : index
    %62 = vector.load %arg17[%c0_72, %c0_73, %c0_74] : memref<8x18x256xf32, #tpu.memory_space<vmem>>, vector<8x1x256xf32>
    tpu.vector_store %arg17[%c0_72, %c0_73, %c0_74], %61 {strides = array<i32>} : memref<8x18x256xf32, #tpu.memory_space<vmem>>, vector<8x1x256xf32>,
    %cst_75 = arith.constant 0.000000e+00 : f32
    %63 = vector.broadcast %cst_75 : f32 to vector<8x1x256xf32>
    %c0_76 = arith.constant 0 : index
    %c17_77 = arith.constant 17 : index
    %c0_78 = arith.constant 0 : index
    %64 = vector.load %arg17[%c0_76, %c17_77, %c0_78] : memref<8x18x256xf32, #tpu.memory_space<vmem>>, vector<8x1x256xf32>
    tpu.vector_store %arg17[%c0_76, %c17_77, %c0_78], %63 {strides = array<i32>} : memref<8x18x256xf32, #tpu.memory_space<vmem>>, vector<8x1x256xf32>,
    %cst_79 = arith.constant 0.000000e+00 : f32
    %65 = vector.broadcast %cst_79 : f32 to vector<8x16x8xf32>
    %c0_80 = arith.constant 0 : index
    %c1_81 = arith.constant 1 : index
    %c0_82 = arith.constant 0 : index
    %66 = vector.load %arg17[%c0_80, %c1_81, %c0_82] : memref<8x18x256xf32, #tpu.memory_space<vmem>>, vector<8x16x8xf32>
    tpu.vector_store %arg17[%c0_80, %c1_81, %c0_82], %65 {strides = array<i32>} : memref<8x18x256xf32, #tpu.memory_space<vmem>>, vector<8x16x8xf32>,
    %cst_83 = arith.constant 0.000000e+00 : f32
    %67 = vector.broadcast %cst_83 : f32 to vector<8x16x120xf32>
    %c0_84 = arith.constant 0 : index
    %c1_85 = arith.constant 1 : index
    %c136_86 = arith.constant 136 : index
    %68 = vector.load %arg17[%c0_84, %c1_85, %c136_86] : memref<8x18x256xf32, #tpu.memory_space<vmem>>, vector<8x16x120xf32>
    tpu.vector_store %arg17[%c0_84, %c1_85, %c136_86], %67 {strides = array<i32>} : memref<8x18x256xf32, #tpu.memory_space<vmem>>, vector<8x16x120xf32>,
    %c0_87 = arith.constant 0 : index
    %c1_88 = arith.constant 1 : index
    %c8_89 = arith.constant 8 : index
    %69 = vector.load %arg17[%c0_87, %c1_88, %c8_89] : memref<8x18x256xf32, #tpu.memory_space<vmem>>, vector<8x16x128xf32>
    tpu.vector_store %arg17[%c0_87, %c1_88, %c8_89], %60 {strides = array<i32>} : memref<8x18x256xf32, #tpu.memory_space<vmem>>, vector<8x16x128xf32>,
    %c0_90 = arith.constant 0 : index
    %c0_91 = arith.constant 0 : index
    %c0_92 = arith.constant 0 : index
    %70 = vector.load %arg17[%c0_90, %c0_91, %c0_92] : memref<8x18x256xf32, #tpu.memory_space<vmem>>, vector<8x16x256xf32>
    %71 = vector.shape_cast %70 : vector<8x16x256xf32> to vector<128x256xf32>
    %72 = arith.truncf %71 : vector<128x256xf32> to vector<128x256xbf16>
    %c0_93 = arith.constant 0 : index
    %c0_94 = arith.constant 0 : index
    %c0_95 = arith.constant 0 : index
    %73 = vector.load %arg6[%c0_93, %c0_94, %c0_95] : memref<3x256x256xbf16, #tpu.memory_space<vmem>>, vector<1x256x256xbf16>
    %74 = vector.shape_cast %73 : vector<1x256x256xbf16> to vector<256x256xbf16>
    %cst_96 = arith.constant dense<0.000000e+00> : vector<128x256xf32>
    %75 = tpu.matmul %72, %74, %cst_96 {dimension_numbers = #tpu.dot_dimension_numbers<[1], [0], [0], [1], [0, 0, 1, 1], [], []>} : vector<128x256xbf16>, vector<256x256xbf16>, vector<128x256xf32> -> vector<128x256xf32>
    %c0_97 = arith.constant 0 : index
    %c1_98 = arith.constant 1 : index
    %c0_99 = arith.constant 0 : index
    %76 = vector.load %arg17[%c0_97, %c1_98, %c0_99] : memref<8x18x256xf32, #tpu.memory_space<vmem>>, vector<8x16x256xf32>
    %77 = vector.shape_cast %76 : vector<8x16x256xf32> to vector<128x256xf32>
    %78 = arith.truncf %77 : vector<128x256xf32> to vector<128x256xbf16>
    %c1_100 = arith.constant 1 : index
    %c0_101 = arith.constant 0 : index
    %c0_102 = arith.constant 0 : index
    %79 = vector.load %arg6[%c1_100, %c0_101, %c0_102] : memref<3x256x256xbf16, #tpu.memory_space<vmem>>, vector<1x256x256xbf16>
    %80 = vector.shape_cast %79 : vector<1x256x256xbf16> to vector<256x256xbf16>
    %cst_103 = arith.constant dense<0.000000e+00> : vector<128x256xf32>
    %81 = tpu.matmul %78, %80, %cst_103 {dimension_numbers = #tpu.dot_dimension_numbers<[1], [0], [0], [1], [0, 0, 1, 1], [], []>} : vector<128x256xbf16>, vector<256x256xbf16>, vector<128x256xf32> -> vector<128x256xf32>
    %82 = arith.addf %75, %81 : vector<128x256xf32>
    %c0_104 = arith.constant 0 : index
    %c2_105 = arith.constant 2 : index
    %c0_106 = arith.constant 0 : index
    %83 = vector.load %arg17[%c0_104, %c2_105, %c0_106] : memref<8x18x256xf32, #tpu.memory_space<vmem>>, vector<8x16x256xf32>
    %84 = vector.shape_cast %83 : vector<8x16x256xf32> to vector<128x256xf32>
    %85 = arith.truncf %84 : vector<128x256xf32> to vector<128x256xbf16>
    %c2_107 = arith.constant 2 : index
    %c0_108 = arith.constant 0 : index
    %c0_109 = arith.constant 0 : index
    %86 = vector.load %arg6[%c2_107, %c0_108, %c0_109] : memref<3x256x256xbf16, #tpu.memory_space<vmem>>, vector<1x256x256xbf16>
    %87 = vector.shape_cast %86 : vector<1x256x256xbf16> to vector<256x256xbf16>
    %cst_110 = arith.constant dense<0.000000e+00> : vector<128x256xf32>
    %88 = tpu.matmul %85, %87, %cst_110 {dimension_numbers = #tpu.dot_dimension_numbers<[1], [0], [0], [1], [0, 0, 1, 1], [], []>} : vector<128x256xbf16>, vector<256x256xbf16>, vector<128x256xf32> -> vector<128x256xf32>
    %89 = arith.addf %82, %88 : vector<128x256xf32>
    %c0_111 = arith.constant 0 : index
    %c0_112 = arith.constant 0 : index
    %90 = vector.load %arg7[%c0_111, %c0_112] : memref<1x256xf32, #tpu.memory_space<vmem>>, vector<1x256xf32>
    %91 = vector.broadcast %90 : vector<1x256xf32> to vector<128x256xf32>
    %92 = arith.addf %89, %91 : vector<128x256xf32>
    %cst_113 = arith.constant 0.000000e+00 : f32
    %93 = vector.broadcast %cst_113 : f32 to vector<128x256xf32>
    %94 = arith.maximumf %92, %93 : vector<128x256xf32>
    %c0_114 = arith.constant 0 : index
    %c0_115 = arith.constant 0 : index
    %95 = vector.load %arg8[%c0_114, %c0_115] : memref<1x256xf32, #tpu.memory_space<vmem>>, vector<1x256xf32>
    %96 = vector.broadcast %95 : vector<1x256xf32> to vector<128x256xf32>
    %97 = arith.mulf %94, %96 : vector<128x256xf32>
    %c0_116 = arith.constant 0 : index
    %c0_117 = arith.constant 0 : index
    %98 = vector.load %arg9[%c0_116, %c0_117] : memref<1x256xf32, #tpu.memory_space<vmem>>, vector<1x256xf32>
    %99 = vector.broadcast %98 : vector<1x256xf32> to vector<128x256xf32>
    %100 = arith.addf %97, %99 : vector<128x256xf32>
    %101 = vector.shape_cast %100 : vector<128x256xf32> to vector<8x16x256xf32>
    %cst_118 = arith.constant 0xFF800000 : f32
    %102 = vector.broadcast %cst_118 : f32 to vector<8x1x384xf32>
    %c0_119 = arith.constant 0 : index
    %c0_120 = arith.constant 0 : index
    %c0_121 = arith.constant 0 : index
    %103 = vector.load %arg18[%c0_119, %c0_120, %c0_121] : memref<8x18x384xf32, #tpu.memory_space<vmem>>, vector<8x1x384xf32>
    tpu.vector_store %arg18[%c0_119, %c0_120, %c0_121], %102 {strides = array<i32>} : memref<8x18x384xf32, #tpu.memory_space<vmem>>, vector<8x1x384xf32>,
    %cst_122 = arith.constant 0xFF800000 : f32
    %104 = vector.broadcast %cst_122 : f32 to vector<8x1x384xf32>
    %c0_123 = arith.constant 0 : index
    %c17_124 = arith.constant 17 : index
    %c0_125 = arith.constant 0 : index
    %105 = vector.load %arg18[%c0_123, %c17_124, %c0_125] : memref<8x18x384xf32, #tpu.memory_space<vmem>>, vector<8x1x384xf32>
    tpu.vector_store %arg18[%c0_123, %c17_124, %c0_125], %104 {strides = array<i32>} : memref<8x18x384xf32, #tpu.memory_space<vmem>>, vector<8x1x384xf32>,
    %cst_126 = arith.constant 0xFF800000 : f32
    %106 = vector.broadcast %cst_126 : f32 to vector<8x16x16xf32>
    %c0_127 = arith.constant 0 : index
    %c1_128 = arith.constant 1 : index
    %c0_129 = arith.constant 0 : index
    %107 = vector.load %arg18[%c0_127, %c1_128, %c0_129] : memref<8x18x384xf32, #tpu.memory_space<vmem>>, vector<8x16x16xf32>
    tpu.vector_store %arg18[%c0_127, %c1_128, %c0_129], %106 {strides = array<i32>} : memref<8x18x384xf32, #tpu.memory_space<vmem>>, vector<8x16x16xf32>,
    %cst_130 = arith.constant 0xFF800000 : f32
    %108 = vector.broadcast %cst_130 : f32 to vector<8x16x112xf32>
    %c0_131 = arith.constant 0 : index
    %c1_132 = arith.constant 1 : index
    %c272 = arith.constant 272 : index
    %109 = vector.load %arg18[%c0_131, %c1_132, %c272] : memref<8x18x384xf32, #tpu.memory_space<vmem>>, vector<8x16x112xf32>
    tpu.vector_store %arg18[%c0_131, %c1_132, %c272], %108 {strides = array<i32>} : memref<8x18x384xf32, #tpu.memory_space<vmem>>, vector<8x16x112xf32>,
    %c0_133 = arith.constant 0 : index
    %c1_134 = arith.constant 1 : index
    %c16 = arith.constant 16 : index
    %110 = vector.load %arg18[%c0_133, %c1_134, %c16] : memref<8x18x384xf32, #tpu.memory_space<vmem>>, vector<8x16x256xf32>
    tpu.vector_store %arg18[%c0_133, %c1_134, %c16], %101 {strides = array<i32>} : memref<8x18x384xf32, #tpu.memory_space<vmem>>, vector<8x16x256xf32>,
    %c0_135 = arith.constant 0 : index
    %c0_136 = arith.constant 0 : index
    %c0_137 = arith.constant 0 : index
    %111 = vector.load %arg18[%c0_135, %c0_136, %c0_137] : memref<8x18x384xf32, #tpu.memory_space<vmem>>, vector<8x16x384xf32>
    %c0_138 = arith.constant 0 : index
    %c1_139 = arith.constant 1 : index
    %c0_140 = arith.constant 0 : index
    %112 = vector.load %arg18[%c0_138, %c1_139, %c0_140] : memref<8x18x384xf32, #tpu.memory_space<vmem>>, vector<8x16x384xf32>
    %113 = arith.maximumf %111, %112 : vector<8x16x384xf32>
    %c0_141 = arith.constant 0 : index
    %c2_142 = arith.constant 2 : index
    %c0_143 = arith.constant 0 : index
    %114 = vector.load %arg18[%c0_141, %c2_142, %c0_143] : memref<8x18x384xf32, #tpu.memory_space<vmem>>, vector<8x16x384xf32>
    %115 = arith.maximumf %113, %114 : vector<8x16x384xf32>
    %116 = vector.extract_strided_slice %115 {offsets = [0, 0, 0], sizes = [8, 16, 256], strides = [1, 1, 1]} : vector<8x16x384xf32> to vector<8x16x256xf32>
    %117 = vector.extract_strided_slice %115 {offsets = [0, 0, 16], sizes = [8, 16, 256], strides = [1, 1, 1]} : vector<8x16x384xf32> to vector<8x16x256xf32>
    %118 = arith.maximumf %116, %117 : vector<8x16x256xf32>
    %119 = vector.extract_strided_slice %115 {offsets = [0, 0, 32], sizes = [8, 16, 256], strides = [1, 1, 1]} : vector<8x16x384xf32> to vector<8x16x256xf32>
    %120 = arith.maximumf %118, %119 : vector<8x16x256xf32>
    %cst_144 = arith.constant dense<0.000000e+00> : vector<8x256xf32>
    %121 = vector.multi_reduction <add>, %120, %cst_144 [1] : vector<8x16x256xf32> to vector<8x256xf32>
    %cst_145 = arith.constant 1.600000e+01 : f32
    %122 = vector.broadcast %cst_145 : f32 to vector<8x256xf32>
    %123 = arith.divf %121, %122 : vector<8x256xf32>
    %124 = arith.truncf %123 : vector<8x256xf32> to vector<8x256xbf16>
    %c0_146 = arith.constant 0 : index
    %c0_147 = arith.constant 0 : index
    %125 = vector.load %arg10[%c0_146, %c0_147] : memref<256x8xbf16, #tpu.memory_space<vmem>>, vector<256x8xbf16>
    %cst_148 = arith.constant dense<0.000000e+00> : vector<8x8xf32>
    %126 = tpu.matmul %124, %125, %cst_148 {dimension_numbers = #tpu.dot_dimension_numbers<[1], [0], [0], [1], [0, 0, 1, 1], [], []>} : vector<8x256xbf16>, vector<256x8xbf16>, vector<8x8xf32> -> vector<8x8xf32>
    %c0_149 = arith.constant 0 : index
    %c0_150 = arith.constant 0 : index
    %127 = vector.load %arg11[%c0_149, %c0_150] : memref<1x8xf32, #tpu.memory_space<vmem>>, vector<1x8xf32>
    %128 = vector.broadcast %127 : vector<1x8xf32> to vector<8x8xf32>
    %129 = arith.addf %126, %128 : vector<8x8xf32>
    %cst_151 = arith.constant 0.000000e+00 : f32
    %130 = vector.broadcast %cst_151 : f32 to vector<8x8xf32>
    %131 = arith.maximumf %129, %130 : vector<8x8xf32>
    %c0_152 = arith.constant 0 : index
    %c0_153 = arith.constant 0 : index
    %132 = vector.load %arg12[%c0_152, %c0_153] : memref<1x8xf32, #tpu.memory_space<vmem>>, vector<1x8xf32>
    %133 = vector.broadcast %132 : vector<1x8xf32> to vector<8x8xf32>
    %134 = arith.mulf %131, %133 : vector<8x8xf32>
    %cst_154 = arith.constant dense<0.000000e+00> : vector<8xf32>
    %135 = vector.multi_reduction <add>, %134, %cst_154 [1] : vector<8x8xf32> to vector<8xf32>
    %136 = vector.shape_cast %135 : vector<8xf32> to vector<8x1xf32>
    %c0_155 = arith.constant 0 : index
    %c0_156 = arith.constant 0 : index
    %137 = vector.load %arg13[%c0_155, %c0_156] : memref<1x1xf32, #tpu.memory_space<vmem>>, vector<1x1xf32>
    %138 = vector.broadcast %137 : vector<1x1xf32> to vector<8x1xf32>
    %139 = arith.addf %136, %138 : vector<8x1xf32>
    %c0_157 = arith.constant 0 : index
    %c0_158 = arith.constant 0 : index
    %140 = vector.load %arg14[%c0_157, %c0_158] : memref<8x1xf32, #tpu.memory_space<vmem>>, vector<8x1xf32>
    tpu.vector_store %arg14[%c0_157, %c0_158], %139 {strides = array<i32>} : memref<8x1xf32, #tpu.memory_space<vmem>>, vector<8x1xf32>,
    return
  }
  func.func @transform_0(%arg0: i32) -> (i32, i32, i32) {
    %c0_i32 = arith.constant 0 : i32
    %c0_i32_0 = arith.constant 0 : i32
    %c0_i32_1 = arith.constant 0 : i32
    return %arg0, %c0_i32, %c0_i32_0 : i32, i32, i32
  }
  func.func @transform_1(%arg0: i32) -> (i32, i32, i32) {
    %c0_i32 = arith.constant 0 : i32
    %c0_i32_0 = arith.constant 0 : i32
    %c0_i32_1 = arith.constant 0 : i32
    %c0_i32_2 = arith.constant 0 : i32
    return %c0_i32, %c0_i32_0, %c0_i32_1 : i32, i32, i32
  }
  func.func @transform_2(%arg0: i32) -> (i32, i32) {
    %c0_i32 = arith.constant 0 : i32
    %c0_i32_0 = arith.constant 0 : i32
    %c0_i32_1 = arith.constant 0 : i32
    return %c0_i32, %c0_i32_0 : i32, i32
  }
  func.func @transform_3(%arg0: i32) -> (i32, i32) {
    %c0_i32 = arith.constant 0 : i32
    %c0_i32_0 = arith.constant 0 : i32
    %c0_i32_1 = arith.constant 0 : i32
    return %c0_i32, %c0_i32_0 : i32, i32
  }
  func.func @transform_4(%arg0: i32) -> (i32, i32) {
    %c0_i32 = arith.constant 0 : i32
    %c0_i32_0 = arith.constant 0 : i32
    %c0_i32_1 = arith.constant 0 : i32
    return %c0_i32, %c0_i32_0 : i32, i32
  }
  func.func @transform_5(%arg0: i32) -> (i32, i32, i32) {
    %c0_i32 = arith.constant 0 : i32
    %c0_i32_0 = arith.constant 0 : i32
    %c0_i32_1 = arith.constant 0 : i32
    %c0_i32_2 = arith.constant 0 : i32
    return %c0_i32, %c0_i32_0, %c0_i32_1 : i32, i32, i32
  }
  func.func @transform_6(%arg0: i32) -> (i32, i32) {
    %c0_i32 = arith.constant 0 : i32
    %c0_i32_0 = arith.constant 0 : i32
    %c0_i32_1 = arith.constant 0 : i32
    return %c0_i32, %c0_i32_0 : i32, i32
  }
  func.func @transform_7(%arg0: i32) -> (i32, i32) {
    %c0_i32 = arith.constant 0 : i32
    %c0_i32_0 = arith.constant 0 : i32
    %c0_i32_1 = arith.constant 0 : i32
    return %c0_i32, %c0_i32_0 : i32, i32
  }
  func.func @transform_8(%arg0: i32) -> (i32, i32) {
    %c0_i32 = arith.constant 0 : i32
    %c0_i32_0 = arith.constant 0 : i32
    %c0_i32_1 = arith.constant 0 : i32
    return %c0_i32, %c0_i32_0 : i32, i32
  }
  func.func @transform_9(%arg0: i32) -> (i32, i32) {
    %c0_i32 = arith.constant 0 : i32
    %c0_i32_0 = arith.constant 0 : i32
    %c0_i32_1 = arith.constant 0 : i32
    return %c0_i32, %c0_i32_0 : i32, i32
  }
  func.func @transform_10(%arg0: i32) -> (i32, i32) {
    %c0_i32 = arith.constant 0 : i32
    %c0_i32_0 = arith.constant 0 : i32
    %c0_i32_1 = arith.constant 0 : i32
    return %c0_i32, %c0_i32_0 : i32, i32
  }
  func.func @transform_11(%arg0: i32) -> (i32, i32) {
    %c0_i32 = arith.constant 0 : i32
    %c0_i32_0 = arith.constant 0 : i32
    %c0_i32_1 = arith.constant 0 : i32
    return %c0_i32, %c0_i32_0 : i32, i32
  }
  func.func @transform_12(%arg0: i32) -> (i32, i32) {
    %c0_i32 = arith.constant 0 : i32
    %c0_i32_0 = arith.constant 0 : i32
    %c0_i32_1 = arith.constant 0 : i32
    return %c0_i32, %c0_i32_0 : i32, i32
  }
  func.func @transform_13(%arg0: i32) -> (i32, i32) {
    %c0_i32 = arith.constant 0 : i32
    %c0_i32_0 = arith.constant 0 : i32
    return %arg0, %c0_i32 : i32, i32
  }
}

</mosaic_0001>

<llo_original>
// kernel: tile.58
$region0: #{tile.58}
  #allocation0 [shape = 's32[1]{0}', space=sflag, size = 0x4, scoped, tag = 'scoped memory for tile.58']
  %s0 = inlined_call_operand.vmem [shape: f32[16], index: 0, kind: input, shape index: {}]
  %s1 = inlined_call_operand.vmem [shape: f32[16,16], index: 1, kind: output, shape index: {}]
  // Predicated region
  $region2: #{tile.58} parent=0 // pred_check
    _
  $region3: #{tile.58} parent=0 // pred_check_branch
    %3 = sbr.rel (0) target = $region5
  $region4: #{tile.58} parent=0 // pred_region
    _
  $region5: #{tile.58} parent=0 // pred_fallthru
    _
  %v4 = vld [vmem:[%s0] ss:$0 sm:$0xff]
  %5 = vst [vmem:[%s1] sm:$0xff] %v4
  %s6 = scalar_lea.vmem %s1, 8
  %7 = vst [vmem:[%s6] sm:$0xff] %v4

// kernel: tile.59
$region0: #{tile.59}
  %s0 = inlined_call_operand.vmem [shape: f32[16,16], index: 0, kind: input, shape index: {}]
  %s1 = inlined_call_operand.vmem [shape: f32[1,256], index: 1, kind: output, shape index: {}]
  $region1: #{tile.59} parent=0
    #allocation0 [shape = 'u8[8192]{0}', space=vmem, size = 0x2000, scoped, tag = 'scoped mem for output reshape']
    %s2 = smov 3
    %v3 = vld [vmem:[%s0] ss:$8 sm:%s2]
    %vm4 = vcmask 130048
    %5 = vst.msk [vmem:[#allocation0] ss:$8 sm:$0x3] %vm4, %v3
    %s6 = scalar_lea.vmem %s0, 7
    %s7 = smov 3
    %v8 = vld [vmem:[%s6] ss:$8 sm:%s7]
    %9 = vrot.lane.b32.xlu0 %v8, 112
    %v10 = vpop.permute.xlu0 %9
    %vm11 = vcmask 1048448
    %12 = vst.msk [vmem:[#allocation0] ss:$8 sm:$0x3] %vm11, %v10
    %s13 = scalar_lea.vmem %s0, 6
    %s14 = smov 3
    %v15 = vld [vmem:[%s13] ss:$8 sm:%s14]
    %16 = vrot.lane.b32.xlu0 %v15, 96
    %v17 = vpop.permute.xlu0 %16
    %vm18 = vcmask 917248
    %19 = vst.msk [vmem:[#allocation0] ss:$8 sm:$0x3] %vm18, %v17
    %s20 = scalar_lea.vmem %s0, 5
    %s21 = smov 3
    %v22 = vld [vmem:[%s20] ss:$8 sm:%s21]
    %23 = vrot.lane.b32.xlu0 %v22, 80
    %v24 = vpop.permute.xlu0 %23
    %vm25 = vcmask 786048
    %26 = vst.msk [vmem:[#allocation0] ss:$8 sm:$0x3] %vm25, %v24
    %s27 = scalar_lea.vmem %s0, 4
    %s28 = smov 3
    %v29 = vld [vmem:[%s27] ss:$8 sm:%s28]
    %30 = vrot.lane.b32.xlu0 %v29, 64
    %v31 = vpop.permute.xlu0 %30
    %vm32 = vcmask 654848
    %33 = vst.msk [vmem:[#allocation0] ss:$8 sm:$0x3] %vm32, %v31
    %s34 = scalar_lea.vmem %s0, 3
    %s35 = smov 3
    %v36 = vld [vmem:[%s34] ss:$8 sm:%s35]
    %37 = vrot.lane.b32.xlu0 %v36, 48
    %v38 = vpop.permute.xlu0 %37
    %vm39 = vcmask 523648
    %40 = vst.msk [vmem:[#allocation0] ss:$8 sm:$0x3] %vm39, %v38
    %s41 = scalar_lea.vmem %s0, 2
    %s42 = smov 3
    %v43 = vld [vmem:[%s41] ss:$8 sm:%s42]
    %44 = vrot.lane.b32.xlu0 %v43, 32
    %v45 = vpop.permute.xlu0 %44
    %vm46 = vcmask 392448
    %47 = vst.msk [vmem:[#allocation0] ss:$8 sm:$0x3] %vm46, %v45
    %s48 = scalar_lea.vmem %s0, 1
    %s49 = smov 3
    %v50 = vld [vmem:[%s48] ss:$8 sm:%s49]
    %51 = vrot.lane.b32.xlu0 %v50, 16
    %v52 = vpop.permute.xlu0 %51
    %vm53 = vcmask 261248
    %54 = vst.msk [vmem:[#allocation0] ss:$8 sm:$0x3] %vm53, %v52
    %s56 = ssub.s32 2, 1
    %v57 = vld [vmem:[#allocation0] sm:%s56]
    %s59 = ssub.s32 2, 1
    %60 = vst [vmem:[%s1] sm:%s59] %v57
    %s61 = scalar_lea.vmem [#allocation0], 8
    %v62 = vld [vmem:[%s61] sm:%s56]
    %s64 = ssub.s32 2, 1
    %s65 = scalar_lea.vmem %s1, 1
    %66 = vst [vmem:[%s65] sm:%s64] %v62

// kernel: tile.43
$region0: #{tile.43}
  #allocation0 [shape = 's32[1]{0}', space=sflag, size = 0x4, scoped, tag = 'scoped memory for tile.43']
  %s0 = inlined_call_operand.vmem [shape: f32[8], index: 0, kind: input, shape index: {}]
  %s1 = inlined_call_operand.vmem [shape: f32[16,8], index: 1, kind: output, shape index: {}]
  // Predicated region
  $region2: #{tile.43} parent=0 // pred_check
    _
  $region3: #{tile.43} parent=0 // pred_check_branch
    %3 = sbr.rel (0) target = $region5
  $region4: #{tile.43} parent=0 // pred_region
    _
  $region5: #{tile.43} parent=0 // pred_fallthru
    _
  %v4 = vld [vmem:[%s0] ss:$0 sm:$0xff]
  %5 = vst [vmem:[%s1] sm:$0xff] %v4
  %s6 = scalar_lea.vmem %s1, 8
  %7 = vst [vmem:[%s6] sm:$0xff] %v4

// kernel: tile.44
$region0: #{tile.44}
  %s0 = inlined_call_operand.vmem [shape: f32[16,8], index: 0, kind: input, shape index: {}]
  %s1 = inlined_call_operand.vmem [shape: f32[1,128], index: 1, kind: output, shape index: {}]
  $region1: #{tile.44} parent=0
    #allocation0 [shape = 'u8[4096]{0}', space=vmem, size = 0x1000, scoped, tag = 'scoped mem for output reshape']
    %v2 = vld [vmem:[%s0] sm:$0x1]
    %vm3 = vcmask 64512
    %4 = vst.msk [vmem:[#allocation0] sm:$0x1] %vm3, %v2
    %s5 = scalar_lea.vmem %s0, 15
    %v6 = vld [vmem:[%s5] sm:$0x1]
    %7 = vrot.lane.b32.xlu0 %v6, 120
    %v8 = vpop.permute.xlu0 %7
    %vm9 = vcmask 1048512
    %10 = vst.msk [vmem:[#allocation0] sm:$0x1] %vm9, %v8
    %s11 = scalar_lea.vmem %s0, 14
    %v12 = vld [vmem:[%s11] sm:$0x1]
    %13 = vrot.lane.b32.xlu0 %v12, 112
    %v14 = vpop.permute.xlu0 %13
    %vm15 = vcmask 982912
    %16 = vst.msk [vmem:[#allocation0] sm:$0x1] %vm15, %v14
    %s17 = scalar_lea.vmem %s0, 13
    %v18 = vld [vmem:[%s17] sm:$0x1]
    %19 = vrot.lane.b32.xlu0 %v18, 104
    %v20 = vpop.permute.xlu0 %19
    %vm21 = vcmask 917312
    %22 = vst.msk [vmem:[#allocation0] sm:$0x1] %vm21, %v20
    %s23 = scalar_lea.vmem %s0, 12
    %v24 = vld [vmem:[%s23] sm:$0x1]
    %25 = vrot.lane.b32.xlu0 %v24, 96
    %v26 = vpop.permute.xlu0 %25
    %vm27 = vcmask 851712
    %28 = vst.msk [vmem:[#allocation0] sm:$0x1] %vm27, %v26
    %s29 = scalar_lea.vmem %s0, 11
    %v30 = vld [vmem:[%s29] sm:$0x1]
    %31 = vrot.lane.b32.xlu0 %v30, 88
    %v32 = vpop.permute.xlu0 %31
    %vm33 = vcmask 786112
    %34 = vst.msk [vmem:[#allocation0] sm:$0x1] %vm33, %v32
    %s35 = scalar_lea.vmem %s0, 10
    %v36 = vld [vmem:[%s35] sm:$0x1]
    %37 = vrot.lane.b32.xlu0 %v36, 80
    %v38 = vpop.permute.xlu0 %37
    %vm39 = vcmask 720512
    %40 = vst.msk [vmem:[#allocation0] sm:$0x1] %vm39, %v38
    %s41 = scalar_lea.vmem %s0, 9
    %v42 = vld [vmem:[%s41] sm:$0x1]
    %43 = vrot.lane.b32.xlu0 %v42, 72
    %v44 = vpop.permute.xlu0 %43
    %vm45 = vcmask 654912
    %46 = vst.msk [vmem:[#allocation0] sm:$0x1] %vm45, %v44
    %s47 = scalar_lea.vmem %s0, 8
    %v48 = vld [vmem:[%s47] sm:$0x1]
    %49 = vrot.lane.b32.xlu0 %v48, 64
    %v50 = vpop.permute.xlu0 %49
    %vm51 = vcmask 589312
    %52 = vst.msk [vmem:[#allocation0] sm:$0x1] %vm51, %v50
    %s53 = scalar_lea.vmem %s0, 7
    %v54 = vld [vmem:[%s53] sm:$0x1]
    %55 = vrot.lane.b32.xlu0 %v54, 56
    %v56 = vpop.permute.xlu0 %55
    %vm57 = vcmask 523712
    %58 = vst.msk [vmem:[#allocation0] sm:$0x1] %vm57, %v56
    %s59 = scalar_lea.vmem %s0, 6
    %v60 = vld [vmem:[%s59] sm:$0x1]
    %61 = vrot.lane.b32.xlu0 %v60, 48
    %v62 = vpop.permute.xlu0 %61
    %vm63 = vcmask 458112
    %64 = vst.msk [vmem:[#allocation0] sm:$0x1] %vm63, %v62
    %s65 = scalar_lea.vmem %s0, 5
    %v66 = vld [vmem:[%s65] sm:$0x1]
    %67 = vrot.lane.b32.xlu0 %v66, 40
    %v68 = vpop.permute.xlu0 %67
    %vm69 = vcmask 392512
    %70 = vst.msk [vmem:[#allocation0] sm:$0x1] %vm69, %v68
    %s71 = scalar_lea.vmem %s0, 4
    %v72 = vld [vmem:[%s71] sm:$0x1]
    %73 = vrot.lane.b32.xlu0 %v72, 32
    %v74 = vpop.permute.xlu0 %73
    %vm75 = vcmask 326912
    %76 = vst.msk [vmem:[#allocation0] sm:$0x1] %vm75, %v74
    %s77 = scalar_lea.vmem %s0, 3
    %v78 = vld [vmem:[%s77] sm:$0x1]
    %79 = vrot.lane.b32.xlu0 %v78, 24
    %v80 = vpop.permute.xlu0 %79
    %vm81 = vcmask 261312
    %82 = vst.msk [vmem:[#allocation0] sm:$0x1] %vm81, %v80
    %s83 = scalar_lea.vmem %s0, 2
    %v84 = vld [vmem:[%s83] sm:$0x1]
    %85 = vrot.lane.b32.xlu0 %v84, 16
    %v86 = vpop.permute.xlu0 %85
    %vm87 = vcmask 195712
    %88 = vst.msk [vmem:[#allocation0] sm:$0x1] %vm87, %v86
    %s89 = scalar_lea.vmem %s0, 1
    %v90 = vld [vmem:[%s89] sm:$0x1]
    %91 = vrot.lane.b32.xlu0 %v90, 8
    %v92 = vpop.permute.xlu0 %91
    %vm93 = vcmask 130112
    %94 = vst.msk [vmem:[#allocation0] sm:$0x1] %vm93, %v92
    %s96 = ssub.s32 2, 1
    %v97 = vld [vmem:[#allocation0] sm:%s96]
    %s99 = ssub.s32 2, 1
    %100 = vst [vmem:[%s1] sm:%s99] %v97

// kernel: cnn_classifier_forward.1
$region0: #{cnn_classifier_forward.1}
  #allocation0 [shape = 'u32[]', space=smem, size = 0x4, offset = 0x4, fixed_abs, tag = 'smem constant byte address 0x4 - core index']
  #allocation1 [shape = 'u32[72,128]{1,0:T(1,128)}', space=vmem, size = 0x9000, scoped, tag = 'internal scratch']
  #allocation2 [shape = 'f32[8,18,128]{2,1,0:T(8,128)}', space=vmem, size = 0x18000, scoped, tag = 'scratch operand']
  #allocation3 [shape = 'f32[8,18,256]{2,1,0:T(8,128)}', space=vmem, size = 0x30000, scoped, tag = 'scratch operand']
  #allocation4 [shape = 'f32[8,18,256]{2,1,0:T(8,128)}', space=vmem, size = 0x30000, scoped, tag = 'scratch operand']
  #allocation5 [shape = 'f32[8,18,384]{2,1,0:T(8,128)}', space=vmem, size = 0x48000, scoped, tag = 'scratch operand']
  #allocation6 [shape = 'f32[1,1]{1,0:T(1,128)S(1)}', space=vmem, size = 0x200, scoped, tag = 'scoped memory for cnn_classifier_forward.1']
  %s0 = inlined_call_operand.vmem [shape: f32[16,16,16], index: 0, kind: input, shape index: {}]
  %s1 = inlined_call_operand.vmem [shape: bf16[3,128,128], index: 1, kind: input, shape index: {}]
  %s2 = inlined_call_operand.vmem [shape: f32[1,128], index: 2, kind: input, shape index: {}]
  %s3 = inlined_call_operand.vmem [shape: f32[1,128], index: 3, kind: input, shape index: {}]
  %s4 = inlined_call_operand.vmem [shape: f32[1,128], index: 4, kind: input, shape index: {}]
  %s5 = inlined_call_operand.vmem [shape: bf16[3,256,256], index: 5, kind: input, shape index: {}]
  %s6 = inlined_call_operand.vmem [shape: f32[1,256], index: 6, kind: input, shape index: {}]
  %s7 = inlined_call_operand.vmem [shape: f32[1,256], index: 7, kind: input, shape index: {}]
  %s8 = inlined_call_operand.vmem [shape: f32[1,256], index: 8, kind: input, shape index: {}]
  %s9 = inlined_call_operand.vmem [shape: bf16[256,8], index: 9, kind: input, shape index: {}]
  %s10 = inlined_call_operand.vmem [shape: f32[1,8], index: 10, kind: input, shape index: {}]
  %s11 = inlined_call_operand.vmem [shape: f32[1,8], index: 11, kind: input, shape index: {}]
  %s12 = inlined_call_operand.<no memory space> [shape: f32[1,1], index: 12, kind: input, shape index: {}]
  %s13 = inlined_call_operand.vmem [shape: f32[16,1], index: 13, kind: output, shape index: {}]
  %s14 = sld [smem:[#allocation0]]
  $region85: #{cnn_classifier_forward.1} parent=0
    _
  %s16 = ssub.s32 1, %s14
  %s17 = scalar_select 0, %s16, %s14
  %v18 = vstv %s12
  %19 = vst [vmem:[#allocation6] sm:$0x1] %v18
  loop: start=0, step=1, limit=4
  $region2: #{cnn_classifier_forward.1} parent=0 // loop_pre_header
    _
  $region3: #{cnn_classifier_forward.1} parent=0 // loop_header
    %s21 = sphi 0, %s25
    %p22 = scmp.ge.s32.totalorder %s21, 4
    %s31 = sphi 0, %s33
    %s34 = sphi 0, %s31
    %s35 = sphi 0, %s34
    %s51 = sphi 0, %s35
    %s55 = sphi 0, %s55
    %s57 = sphi 0, %s55
    %s58 = sphi 0, %s57
    %s72 = sphi 0, %s58
    %s76 = sphi 0, %s76
    %s78 = sphi 0, %s76
    %s79 = sphi 0, %s78
    %s93 = sphi 0, %s79
    %s97 = sphi 0, %s97
    %s99 = sphi 0, %s97
    %s100 = sphi 0, %s99
    %s114 = sphi 0, %s100
    %s118 = sphi 0, %s118
    %s120 = sphi 0, %s118
    %s121 = sphi 0, %s120
    %s135 = sphi 0, %s121
    %s139 = sphi 0, %s139
    %s141 = sphi 0, %s139
    %s142 = sphi 0, %s141
    %s156 = sphi 0, %s142
    %s160 = sphi 0, %s160
    %s162 = sphi 0, %s160
    %s163 = sphi 0, %s162
    %s177 = sphi 0, %s163
    %s181 = sphi 0, %s181
    %s183 = sphi 0, %s181
    %s184 = sphi 0, %s183
    %s198 = sphi 0, %s184
    %s202 = sphi 0, %s202
    %s204 = sphi 0, %s202
    %s205 = sphi 0, %s204
    %s219 = sphi 0, %s205
    %s223 = sphi 0, %s223
    %s225 = sphi 0, %s223
    %s226 = sphi 0, %s225
    %s240 = sphi 0, %s226
    %s244 = sphi 0, %s244
    %s246 = sphi 0, %s244
    %s247 = sphi 0, %s246
    %s261 = sphi 0, %s247
    %s265 = sphi 0, %s265
    %s267 = sphi 0, %s265
    %s268 = sphi 0, %s267
    %s282 = sphi 0, %s268
    %s286 = sphi 0, %s286
    %s288 = sphi 0, %s286
    %s289 = sphi 0, %s288
    %s303 = sphi 0, %s289
    %s309 = sphi 0, %s311
    %s312 = sphi 0, %s309
    %s313 = sphi 0, %s312
    %s329 = sphi 0, %s313
  $region4: #{cnn_classifier_forward.1} parent=0 // loop_header_branch
    %24 = sbr.rel (%p22) target = $region8
  $region5: #{cnn_classifier_forward.1} parent=0 // loop_body
    %s26 = ssub.s32 %s21, 1
    %s27 = ssub.s32 %s21, 2
    %s28 = sadd.s32 %s21, 1
    %s29 = ssub.s32 %s21, %s28
    %p30 = scmp.eq.s32.totalorder %s29, 0
    %s32 = sadd.s32 %s31, 1
    %s33 = scalar_select %p30, %s31, %s32
    %p36 = pneg %p30
    %p37 = scmp.eq.s32.totalorder %s21, 1
    %p38 = por %p36, %p37
    %p39 = scmp.ne.s32.totalorder %s31, %s34
    %p40 = scmp.eq.s32.totalorder %s21, 0
    %p41 = por %p39, %p40
    %p42 = scmp.ne.s32.totalorder %s31, %s34
    %p43 = scmp.eq.s32.totalorder %s26, 1
    %p44 = por %p42, %p43
    %p45 = scmp.ne.s32.totalorder %s34, %s35
    %p46 = scmp.eq.s32.totalorder %s26, 0
    %p47 = por %p45, %p46
    %p48 = scmp.ne.s32.totalorder %s34, %s35
    %p49 = scmp.eq.s32.totalorder %s27, 1
    %p50 = por %p48, %p49
    %p52 = scmp.ne.s32.totalorder %s35, %s51
    %p53 = scmp.eq.s32.totalorder %s27, 0
    %p54 = por %p52, %p53
    %s56 = sadd.s32 %s55, 1
    %p59 = scmp.eq.s32.totalorder %s21, 1
    %p60 = scmp.ne.s32.totalorder %s55, %s57
    %p61 = scmp.eq.s32.totalorder %s21, 0
    %p62 = por %p60, %p61
    %p63 = scmp.ne.s32.totalorder %s55, %s57
    %p64 = scmp.eq.s32.totalorder %s26, 1
    %p65 = por %p63, %p64
    %p66 = scmp.ne.s32.totalorder %s57, %s58
    %p67 = scmp.eq.s32.totalorder %s26, 0
    %p68 = por %p66, %p67
    %p69 = scmp.ne.s32.totalorder %s57, %s58
    %p70 = scmp.eq.s32.totalorder %s27, 1
    %p71 = por %p69, %p70
    %p73 = scmp.ne.s32.totalorder %s58, %s72
    %p74 = scmp.eq.s32.totalorder %s27, 0
    %p75 = por %p73, %p74
    %s77 = sadd.s32 %s76, 1
    %p80 = scmp.eq.s32.totalorder %s21, 1
    %p81 = scmp.ne.s32.totalorder %s76, %s78
    %p82 = scmp.eq.s32.totalorder %s21, 0
    %p83 = por %p81, %p82
    %p84 = scmp.ne.s32.totalorder %s76, %s78
    %p85 = scmp.eq.s32.totalorder %s26, 1
    %p86 = por %p84, %p85
    %p87 = scmp.ne.s32.totalorder %s78, %s79
    %p88 = scmp.eq.s32.totalorder %s26, 0
    %p89 = por %p87, %p88
    %p90 = scmp.ne.s32.totalorder %s78, %s79
    %p91 = scmp.eq.s32.totalorder %s27, 1
    %p92 = por %p90, %p91
    %p94 = scmp.ne.s32.totalorder %s79, %s93
    %p95 = scmp.eq.s32.totalorder %s27, 0
    %p96 = por %p94, %p95
    %s98 = sadd.s32 %s97, 1
    %p101 = scmp.eq.s32.totalorder %s21, 1
    %p102 = scmp.ne.s32.totalorder %s97, %s99
    %p103 = scmp.eq.s32.totalorder %s21, 0
    %p104 = por %p102, %p103
    %p105 = scmp.ne.s32.totalorder %s97, %s99
    %p106 = scmp.eq.s32.totalorder %s26, 1
    %p107 = por %p105, %p106
    %p108 = scmp.ne.s32.totalorder %s99, %s100
    %p109 = scmp.eq.s32.totalorder %s26, 0
    %p110 = por %p108, %p109
    %p111 = scmp.ne.s32.totalorder %s99, %s100
    %p112 = scmp.eq.s32.totalorder %s27, 1
    %p113 = por %p111, %p112
    %p115 = scmp.ne.s32.totalorder %s100, %s114
    %p116 = scmp.eq.s32.totalorder %s27, 0
    %p117 = por %p115, %p116
    %s119 = sadd.s32 %s118, 1
    %p122 = scmp.eq.s32.totalorder %s21, 1
    %p123 = scmp.ne.s32.totalorder %s118, %s120
    %p124 = scmp.eq.s32.totalorder %s21, 0
    %p125 = por %p123, %p124
    %p126 = scmp.ne.s32.totalorder %s118, %s120
    %p127 = scmp.eq.s32.totalorder %s26, 1
    %p128 = por %p126, %p127
    %p129 = scmp.ne.s32.totalorder %s120, %s121
    %p130 = scmp.eq.s32.totalorder %s26, 0
    %p131 = por %p129, %p130
    %p132 = scmp.ne.s32.totalorder %s120, %s121
    %p133 = scmp.eq.s32.totalorder %s27, 1
    %p134 = por %p132, %p133
    %p136 = scmp.ne.s32.totalorder %s121, %s135
    %p137 = scmp.eq.s32.totalorder %s27, 0
    %p138 = por %p136, %p137
    %s140 = sadd.s32 %s139, 1
    %p143 = scmp.eq.s32.totalorder %s21, 1
    %p144 = scmp.ne.s32.totalorder %s139, %s141
    %p145 = scmp.eq.s32.totalorder %s21, 0
    %p146 = por %p144, %p145
    %p147 = scmp.ne.s32.totalorder %s139, %s141
    %p148 = scmp.eq.s32.totalorder %s26, 1
    %p149 = por %p147, %p148
    %p150 = scmp.ne.s32.totalorder %s141, %s142
    %p151 = scmp.eq.s32.totalorder %s26, 0
    %p152 = por %p150, %p151
    %p153 = scmp.ne.s32.totalorder %s141, %s142
    %p154 = scmp.eq.s32.totalorder %s27, 1
    %p155 = por %p153, %p154
    %p157 = scmp.ne.s32.totalorder %s142, %s156
    %p158 = scmp.eq.s32.totalorder %s27, 0
    %p159 = por %p157, %p158
    %s161 = sadd.s32 %s160, 1
    %p164 = scmp.eq.s32.totalorder %s21, 1
    %p165 = scmp.ne.s32.totalorder %s160, %s162
    %p166 = scmp.eq.s32.totalorder %s21, 0
    %p167 = por %p165, %p166
    %p168 = scmp.ne.s32.totalorder %s160, %s162
    %p169 = scmp.eq.s32.totalorder %s26, 1
    %p170 = por %p168, %p169
    %p171 = scmp.ne.s32.totalorder %s162, %s163
    %p172 = scmp.eq.s32.totalorder %s26, 0
    %p173 = por %p171, %p172
    %p174 = scmp.ne.s32.totalorder %s162, %s163
    %p175 = scmp.eq.s32.totalorder %s27, 1
    %p176 = por %p174, %p175
    %p178 = scmp.ne.s32.totalorder %s163, %s177
    %p179 = scmp.eq.s32.totalorder %s27, 0
    %p180 = por %p178, %p179
    %s182 = sadd.s32 %s181, 1
    %p185 = scmp.eq.s32.totalorder %s21, 1
    %p186 = scmp.ne.s32.totalorder %s181, %s183
    %p187 = scmp.eq.s32.totalorder %s21, 0
    %p188 = por %p186, %p187
    %p189 = scmp.ne.s32.totalorder %s181, %s183
    %p190 = scmp.eq.s32.totalorder %s26, 1
    %p191 = por %p189, %p190
    %p192 = scmp.ne.s32.totalorder %s183, %s184
    %p193 = scmp.eq.s32.totalorder %s26, 0
    %p194 = por %p192, %p193
    %p195 = scmp.ne.s32.totalorder %s183, %s184
    %p196 = scmp.eq.s32.totalorder %s27, 1
    %p197 = por %p195, %p196
    %p199 = scmp.ne.s32.totalorder %s184, %s198
    %p200 = scmp.eq.s32.totalorder %s27, 0
    %p201 = por %p199, %p200
    %s203 = sadd.s32 %s202, 1
    %p206 = scmp.eq.s32.totalorder %s21, 1
    %p207 = scmp.ne.s32.totalorder %s202, %s204
    %p208 = scmp.eq.s32.totalorder %s21, 0
    %p209 = por %p207, %p208
    %p210 = scmp.ne.s32.totalorder %s202, %s204
    %p211 = scmp.eq.s32.totalorder %s26, 1
    %p212 = por %p210, %p211
    %p213 = scmp.ne.s32.totalorder %s204, %s205
    %p214 = scmp.eq.s32.totalorder %s26, 0
    %p215 = por %p213, %p214
    %p216 = scmp.ne.s32.totalorder %s204, %s205
    %p217 = scmp.eq.s32.totalorder %s27, 1
    %p218 = por %p216, %p217
    %p220 = scmp.ne.s32.totalorder %s205, %s219
    %p221 = scmp.eq.s32.totalorder %s27, 0
    %p222 = por %p220, %p221
    %s224 = sadd.s32 %s223, 1
    %p227 = scmp.eq.s32.totalorder %s21, 1
    %p228 = scmp.ne.s32.totalorder %s223, %s225
    %p229 = scmp.eq.s32.totalorder %s21, 0
    %p230 = por %p228, %p229
    %p231 = scmp.ne.s32.totalorder %s223, %s225
    %p232 = scmp.eq.s32.totalorder %s26, 1
    %p233 = por %p231, %p232
    %p234 = scmp.ne.s32.totalorder %s225, %s226
    %p235 = scmp.eq.s32.totalorder %s26, 0
    %p236 = por %p234, %p235
    %p237 = scmp.ne.s32.totalorder %s225, %s226
    %p238 = scmp.eq.s32.totalorder %s27, 1
    %p239 = por %p237, %p238
    %p241 = scmp.ne.s32.totalorder %s226, %s240
    %p242 = scmp.eq.s32.totalorder %s27, 0
    %p243 = por %p241, %p242
    %s245 = sadd.s32 %s244, 1
    %p248 = scmp.eq.s32.totalorder %s21, 1
    %p249 = scmp.ne.s32.totalorder %s244, %s246
    %p250 = scmp.eq.s32.totalorder %s21, 0
    %p251 = por %p249, %p250
    %p252 = scmp.ne.s32.totalorder %s244, %s246
    %p253 = scmp.eq.s32.totalorder %s26, 1
    %p254 = por %p252, %p253
    %p255 = scmp.ne.s32.totalorder %s246, %s247
    %p256 = scmp.eq.s32.totalorder %s26, 0
    %p257 = por %p255, %p256
    %p258 = scmp.ne.s32.totalorder %s246, %s247
    %p259 = scmp.eq.s32.totalorder %s27, 1
    %p260 = por %p258, %p259
    %p262 = scmp.ne.s32.totalorder %s247, %s261
    %p263 = scmp.eq.s32.totalorder %s27, 0
    %p264 = por %p262, %p263
    %s266 = sadd.s32 %s265, 1
    %p269 = scmp.eq.s32.totalorder %s21, 1
    %p270 = scmp.ne.s32.totalorder %s265, %s267
    %p271 = scmp.eq.s32.totalorder %s21, 0
    %p272 = por %p270, %p271
    %p273 = scmp.ne.s32.totalorder %s265, %s267
    %p274 = scmp.eq.s32.totalorder %s26, 1
    %p275 = por %p273, %p274
    %p276 = scmp.ne.s32.totalorder %s267, %s268
    %p277 = scmp.eq.s32.totalorder %s26, 0
    %p278 = por %p276, %p277
    %p279 = scmp.ne.s32.totalorder %s267, %s268
    %p280 = scmp.eq.s32.totalorder %s27, 1
    %p281 = por %p279, %p280
    %p283 = scmp.ne.s32.totalorder %s268, %s282
    %p284 = scmp.eq.s32.totalorder %s27, 0
    %p285 = por %p283, %p284
    %s287 = sadd.s32 %s286, 1
    %p290 = scmp.eq.s32.totalorder %s21, 1
    %p291 = scmp.ne.s32.totalorder %s286, %s288
    %p292 = scmp.eq.s32.totalorder %s21, 0
    %p293 = por %p291, %p292
    %p294 = scmp.ne.s32.totalorder %s286, %s288
    %p295 = scmp.eq.s32.totalorder %s26, 1
    %p296 = por %p294, %p295
    %p297 = scmp.ne.s32.totalorder %s288, %s289
    %p298 = scmp.eq.s32.totalorder %s26, 0
    %p299 = por %p297, %p298
    %p300 = scmp.ne.s32.totalorder %s288, %s289
    %p301 = scmp.eq.s32.totalorder %s27, 1
    %p302 = por %p300, %p301
    %p304 = scmp.ne.s32.totalorder %s289, %s303
    %p305 = scmp.eq.s32.totalorder %s27, 0
    %p306 = por %p304, %p305
    %s307 = ssub.s32 %s21, %s28
    %p308 = scmp.eq.s32.totalorder %s307, 0
    %s310 = sadd.s32 %s309, 1
    %s311 = scalar_select %p308, %s309, %s310
    %p314 = pneg %p308
    %p315 = scmp.eq.s32.totalorder %s21, 1
    %p316 = por %p314, %p315
    %p317 = scmp.ne.s32.totalorder %s309, %s312
    %p318 = scmp.eq.s32.totalorder %s21, 0
    %p319 = por %p317, %p318
    %p320 = scmp.ne.s32.totalorder %s309, %s312
    %p321 = scmp.eq.s32.totalorder %s26, 1
    %p322 = por %p320, %p321
    %p323 = scmp.ne.s32.totalorder %s312, %s313
    %p324 = scmp.eq.s32.totalorder %s26, 0
    %p325 = por %p323, %p324
    %p326 = scmp.ne.s32.totalorder %s312, %s313
    %p327 = scmp.eq.s32.totalorder %s27, 1
    %p328 = por %p326, %p327
    %p330 = scmp.ne.s32.totalorder %s313, %s329
    %p331 = scmp.eq.s32.totalorder %s27, 0
    %p332 = por %p330, %p331
    %p333 = scmp.le.s32.totalorder 1, %s21
    %p334 = scmp.lt.s32.totalorder %s21, 3
    %p335 = pnand %p333, %p334
    %p336 = pneg %p335
    // Predicated region
    $region9: #{cnn_classifier_forward.1} parent=5 // pred_check
      _
    $region10: #{cnn_classifier_forward.1} parent=5 // pred_check_branch
      %338 = sbr.rel (%p335) target = $region12
    $region11: #{cnn_classifier_forward.1} parent=5 // pred_region
      %s339 = ssub.s32 %s21, 1
      // Predicated region
      $region13: #{cnn_classifier_forward.1} parent=11 // pred_check
        %p340 = pneg %p68
      $region14: #{cnn_classifier_forward.1} parent=11 // pred_check_branch
        %342 = sbr.rel (%p340) target = $region16
      $region15: #{cnn_classifier_forward.1} parent=11 // pred_region
        _
      $region16: #{cnn_classifier_forward.1} parent=11 // pred_fallthru
        _
      // Predicated region
      $region17: #{cnn_classifier_forward.1} parent=11 // pred_check
        %p343 = pneg %p89
      $region18: #{cnn_classifier_forward.1} parent=11 // pred_check_branch
        %345 = sbr.rel (%p343) target = $region20
      $region19: #{cnn_classifier_forward.1} parent=11 // pred_region
        _
      $region20: #{cnn_classifier_forward.1} parent=11 // pred_fallthru
        _
      // Predicated region
      $region21: #{cnn_classifier_forward.1} parent=11 // pred_check
        %p346 = pneg %p110
      $region22: #{cnn_classifier_forward.1} parent=11 // pred_check_branch
        %348 = sbr.rel (%p346) target = $region24
      $region23: #{cnn_classifier_forward.1} parent=11 // pred_region
        _
      $region24: #{cnn_classifier_forward.1} parent=11 // pred_fallthru
        _
      // Predicated region
      $region25: #{cnn_classifier_forward.1} parent=11 // pred_check
        %p349 = pneg %p131
      $region26: #{cnn_classifier_forward.1} parent=11 // pred_check_branch
        %351 = sbr.rel (%p349) target = $region28
      $region27: #{cnn_classifier_forward.1} parent=11 // pred_region
        _
      $region28: #{cnn_classifier_forward.1} parent=11 // pred_fallthru
        _
      // Predicated region
      $region29: #{cnn_classifier_forward.1} parent=11 // pred_check
        %p352 = pneg %p152
      $region30: #{cnn_classifier_forward.1} parent=11 // pred_check_branch
        %354 = sbr.rel (%p352) target = $region32
      $region31: #{cnn_classifier_forward.1} parent=11 // pred_region
        _
      $region32: #{cnn_classifier_forward.1} parent=11 // pred_fallthru
        _
      // Predicated region
      $region33: #{cnn_classifier_forward.1} parent=11 // pred_check
        %p355 = pneg %p173
      $region34: #{cnn_classifier_forward.1} parent=11 // pred_check_branch
        %357 = sbr.rel (%p355) target = $region36
      $region35: #{cnn_classifier_forward.1} parent=11 // pred_region
        _
      $region36: #{cnn_classifier_forward.1} parent=11 // pred_fallthru
        _
      // Predicated region
      $region37: #{cnn_classifier_forward.1} parent=11 // pred_check
        %p358 = pneg %p194
      $region38: #{cnn_classifier_forward.1} parent=11 // pred_check_branch
        %360 = sbr.rel (%p358) target = $region40
      $region39: #{cnn_classifier_forward.1} parent=11 // pred_region
        _
      $region40: #{cnn_classifier_forward.1} parent=11 // pred_fallthru
        _
      // Predicated region
      $region41: #{cnn_classifier_forward.1} parent=11 // pred_check
        %p361 = pneg %p215
      $region42: #{cnn_classifier_forward.1} parent=11 // pred_check_branch
        %363 = sbr.rel (%p361) target = $region44
      $region43: #{cnn_classifier_forward.1} parent=11 // pred_region
        _
      $region44: #{cnn_classifier_forward.1} parent=11 // pred_fallthru
        _
      // Predicated region
      $region45: #{cnn_classifier_forward.1} parent=11 // pred_check
        %p364 = pneg %p236
      $region46: #{cnn_classifier_forward.1} parent=11 // pred_check_branch
        %366 = sbr.rel (%p364) target = $region48
      $region47: #{cnn_classifier_forward.1} parent=11 // pred_region
        _
      $region48: #{cnn_classifier_forward.1} parent=11 // pred_fallthru
        _
      // Predicated region
      $region49: #{cnn_classifier_forward.1} parent=11 // pred_check
        %p367 = pneg %p257
      $region50: #{cnn_classifier_forward.1} parent=11 // pred_check_branch
        %369 = sbr.rel (%p367) target = $region52
      $region51: #{cnn_classifier_forward.1} parent=11 // pred_region
        _
      $region52: #{cnn_classifier_forward.1} parent=11 // pred_fallthru
        _
      // Predicated region
      $region53: #{cnn_classifier_forward.1} parent=11 // pred_check
        %p370 = pneg %p278
      $region54: #{cnn_classifier_forward.1} parent=11 // pred_check_branch
        %372 = sbr.rel (%p370) target = $region56
      $region55: #{cnn_classifier_forward.1} parent=11 // pred_region
        _
      $region56: #{cnn_classifier_forward.1} parent=11 // pred_fallthru
        _
      // Predicated region
      $region57: #{cnn_classifier_forward.1} parent=11 // pred_check
        %p373 = pneg %p299
      $region58: #{cnn_classifier_forward.1} parent=11 // pred_check_branch
        %375 = sbr.rel (%p373) target = $region60
      $region59: #{cnn_classifier_forward.1} parent=11 // pred_region
        _
      $region60: #{cnn_classifier_forward.1} parent=11 // pred_fallthru
        _
    $region12: #{cnn_classifier_forward.1} parent=5 // pred_fallthru
      _
    %p376 = scmp.lt.s32.totalorder %s21, 2
    // Predicated region
    $region61: #{cnn_classifier_forward.1} parent=5 // pred_check
      %p377 = pneg %p376
    $region62: #{cnn_classifier_forward.1} parent=5 // pred_check_branch
      %379 = sbr.rel (%p377) target = $region64
    $region63: #{cnn_classifier_forward.1} parent=5 // pred_region
      // Predicated region
      $region65: #{cnn_classifier_forward.1} parent=63 // pred_check
        %p380 = pneg %p41
      $region66: #{cnn_classifier_forward.1} parent=63 // pred_check_branch
        %382 = sbr.rel (%p380) target = $region68
      $region67: #{cnn_classifier_forward.1} parent=63 // pred_region
        %s383 = smul.u32 8, %s21
        %p384 = scmp.lt.s32.totalorder %s383, 15
        %s385 = scalar_select %p384, %s383, 15
        %s386 = smul.addr %s385, 2
        %s387 = smul.addr %s386, 8
        %s388 = scalar_lea.vmem %s0, %s387
        %s389 = smul.u32 8, %s21
      $region68: #{cnn_classifier_forward.1} parent=63 // pred_fallthru
        _
    $region64: #{cnn_classifier_forward.1} parent=5 // pred_fallthru
      _
    %p390 = scmp.le.s32.totalorder 1, %s21
    %p391 = scmp.lt.s32.totalorder %s21, 3
    %p392 = pnand %p390, %p391
    %p393 = pneg %p392
    // Predicated region
    $region69: #{cnn_classifier_forward.1} parent=5 // pred_check
      _
    $region70: #{cnn_classifier_forward.1} parent=5 // pred_check_branch
      %395 = sbr.rel (%p392) target = $region72
    $region71: #{cnn_classifier_forward.1} parent=5 // pred_region
      %s396 = ssub.s32 %s21, 1
      %s397 = smul.u32 8, %s26
      %p398 = scmp.lt.s32.totalorder %s397, 15
      %s399 = scalar_select %p398, %s397, 15
      %s400 = smul.addr %s399, 2
      %s401 = smul.addr %s400, 8
      %s402 = scalar_lea.vmem %s0, %s401
      %p403 = pneg %p47
      %p404 = pneg %p44
      %p405 = pneg %p68
      %p406 = pneg %p65
      %p407 = pneg %p89
      %p408 = pneg %p86
      %p409 = pneg %p110
      %p410 = pneg %p107
      %p411 = pneg %p131
      %p412 = pneg %p128
      %p413 = pneg %p152
      %p414 = pneg %p149
      %p415 = pneg %p173
      %p416 = pneg %p170
      %p417 = pneg %p194
      %p418 = pneg %p191
      %p419 = pneg %p215
      %p420 = pneg %p212
      %p421 = pneg %p236
      %p422 = pneg %p233
      %p423 = pneg %p257
      %p424 = pneg %p254
      %p425 = pneg %p278
      %p426 = pneg %p275
      %p427 = pneg %p299
      %p428 = pneg %p296
      %p429 = pneg %p325
      %p430 = pneg %p322
      %p431 = scmp.lt.s32.totalorder %s26, 1
      %s432 = scalar_select %p431, %s26, 1
      %s433 = smul.addr %s432, 8
      %s434 = scalar_lea.vmem %s13, %s433
      %s435 = smul.u32 8, %s26
      %p436 = scmp.lt.s32.totalorder %s435, 15
      %s437 = scalar_select %p436, %s435, 15
      %s438 = smul.addr %s437, 2
      %s439 = smul.addr %s438, 8
      %s440 = scalar_lea.vmem %s0, %s439
      %s441 = smul.u32 8, %s26
      %p442 = scmp.lt.s32.totalorder %s26, 1
      %s443 = scalar_select %p442, %s26, 1
      %s444 = smul.addr %s443, 8
      %s445 = scalar_lea.vmem %s13, %s444
      %v446 = vld [vmem:[%s440] sm:$0xff]
      %v447 = vld [vmem:[%s440 + $0x8] sm:$0xff]
      %v448 = vld [vmem:[%s440 + $0x10] sm:$0xff]
      %v449 = vld [vmem:[%s440 + $0x18] sm:$0xff]
      %v450 = vld [vmem:[%s440 + $0x20] sm:$0xff]
      %v451 = vld [vmem:[%s440 + $0x28] sm:$0xff]
      %v452 = vld [vmem:[%s440 + $0x30] sm:$0xff]
      %v453 = vld [vmem:[%s440 + $0x38] sm:$0xff]
      %v454 = vld [vmem:[%s440 + $0x40] sm:$0xff]
      %v455 = vld [vmem:[%s440 + $0x48] sm:$0xff]
      %v456 = vld [vmem:[%s440 + $0x50] sm:$0xff]
      %v457 = vld [vmem:[%s440 + $0x58] sm:$0xff]
      %v458 = vld [vmem:[%s440 + $0x60] sm:$0xff]
      %v459 = vld [vmem:[%s440 + $0x68] sm:$0xff]
      %v460 = vld [vmem:[%s440 + $0x70] sm:$0xff]
      %v461 = vld [vmem:[%s440 + $0x78] sm:$0xff]
      %462 = vst [vmem:[#allocation2] sm:$0x1] 0.0
      %463 = vst [vmem:[#allocation2 + $0x18] sm:$0x1] 0.0
      %464 = vst [vmem:[#allocation2 + $0x30] sm:$0x1] 0.0
      %465 = vst [vmem:[#allocation2 + $0x48] sm:$0x1] 0.0
      %466 = vst [vmem:[#allocation2 + $0x60] sm:$0x1] 0.0
      %467 = vst [vmem:[#allocation2 + $0x78] sm:$0x1] 0.0
      %468 = vst [vmem:[#allocation2 + $0x90] sm:$0x1] 0.0
      %469 = vst [vmem:[#allocation2 + $0xa8] sm:$0x1] 0.0
      %470 = vst [vmem:[#allocation2 + $0x11] sm:$0x1] 0.0
      %471 = vst [vmem:[#allocation2 + $0x29] sm:$0x1] 0.0
      %472 = vst [vmem:[#allocation2 + $0x41] sm:$0x1] 0.0
      %473 = vst [vmem:[#allocation2 + $0x59] sm:$0x1] 0.0
      %474 = vst [vmem:[#allocation2 + $0x71] sm:$0x1] 0.0
      %475 = vst [vmem:[#allocation2 + $0x89] sm:$0x1] 0.0
      %476 = vst [vmem:[#allocation2 + $0xa1] sm:$0x1] 0.0
      %477 = vst [vmem:[#allocation2 + $0xb9] sm:$0x1] 0.0
      %vm478 = vcmask 7168
      %479 = vst.msk [vmem:[#allocation2 + $0x1] sm:$0xff] %vm478, 0.0
      %480 = vst.msk [vmem:[#allocation2 + $0x9] sm:$0xff] %vm478, 0.0
      %481 = vst.msk [vmem:[#allocation2 + $0x19] sm:$0xff] %vm478, 0.0
      %482 = vst.msk [vmem:[#allocation2 + $0x21] sm:$0xff] %vm478, 0.0
      %483 = vst.msk [vmem:[#allocation2 + $0x31] sm:$0xff] %vm478, 0.0
      %484 = vst.msk [vmem:[#allocation2 + $0x39] sm:$0xff] %vm478, 0.0
      %485 = vst.msk [vmem:[#allocation2 + $0x49] sm:$0xff] %vm478, 0.0
      %486 = vst.msk [vmem:[#allocation2 + $0x51] sm:$0xff] %vm478, 0.0
      %487 = vst.msk [vmem:[#allocation2 + $0x61] sm:$0xff] %vm478, 0.0
      %488 = vst.msk [vmem:[#allocation2 + $0x69] sm:$0xff] %vm478, 0.0
      %489 = vst.msk [vmem:[#allocation2 + $0x79] sm:$0xff] %vm478, 0.0
      %490 = vst.msk [vmem:[#allocation2 + $0x81] sm:$0xff] %vm478, 0.0
      %491 = vst.msk [vmem:[#allocation2 + $0x91] sm:$0xff] %vm478, 0.0
      %492 = vst.msk [vmem:[#allocation2 + $0x99] sm:$0xff] %vm478, 0.0
      %493 = vst.msk [vmem:[#allocation2 + $0xa9] sm:$0xff] %vm478, 0.0
      %494 = vst.msk [vmem:[#allocation2 + $0xb1] sm:$0xff] %vm478, 0.0
      %vm495 = vcmask 1047688
      %496 = vst.msk [vmem:[#allocation2 + $0x1] sm:$0xff] %vm495, 0.0
      %497 = vst.msk [vmem:[#allocation2 + $0x9] sm:$0xff] %vm495, 0.0
      %498 = vst.msk [vmem:[#allocation2 + $0x19] sm:$0xff] %vm495, 0.0
      %499 = vst.msk [vmem:[#allocation2 + $0x21] sm:$0xff] %vm495, 0.0
      %500 = vst.msk [vmem:[#allocation2 + $0x31] sm:$0xff] %vm495, 0.0
      %501 = vst.msk [vmem:[#allocation2 + $0x39] sm:$0xff] %vm495, 0.0
      %502 = vst.msk [vmem:[#allocation2 + $0x49] sm:$0xff] %vm495, 0.0
      %503 = vst.msk [vmem:[#allocation2 + $0x51] sm:$0xff] %vm495, 0.0
      %504 = vst.msk [vmem:[#allocation2 + $0x61] sm:$0xff] %vm495, 0.0
      %505 = vst.msk [vmem:[#allocation2 + $0x69] sm:$0xff] %vm495, 0.0
      %506 = vst.msk [vmem:[#allocation2 + $0x79] sm:$0xff] %vm495, 0.0
      %507 = vst.msk [vmem:[#allocation2 + $0x81] sm:$0xff] %vm495, 0.0
      %508 = vst.msk [vmem:[#allocation2 + $0x91] sm:$0xff] %vm495, 0.0
      %509 = vst.msk [vmem:[#allocation2 + $0x99] sm:$0xff] %vm495, 0.0
      %510 = vst.msk [vmem:[#allocation2 + $0xa9] sm:$0xff] %vm495, 0.0
      %511 = vst.msk [vmem:[#allocation2 + $0xb1] sm:$0xff] %vm495, 0.0
      %528 = vrot.lane.b32.xlu0 %v446, 1
      %v529 = vpop.permute.xlu0 %528
      %530 = vrot.lane.b32.xlu0 %v447, 1
      %v531 = vpop.permute.xlu0 %530
      %532 = vrot.lane.b32.xlu0 %v448, 1
      %v533 = vpop.permute.xlu0 %532
      %534 = vrot.lane.b32.xlu0 %v449, 1
      %v535 = vpop.permute.xlu0 %534
      %536 = vrot.lane.b32.xlu0 %v450, 1
      %v537 = vpop.permute.xlu0 %536
      %538 = vrot.lane.b32.xlu0 %v451, 1
      %v539 = vpop.permute.xlu0 %538
      %540 = vrot.lane.b32.xlu0 %v452, 1
      %v541 = vpop.permute.xlu0 %540
      %542 = vrot.lane.b32.xlu0 %v453, 1
      %v543 = vpop.permute.xlu0 %542
      %544 = vrot.lane.b32.xlu0 %v454, 1
      %v545 = vpop.permute.xlu0 %544
      %546 = vrot.lane.b32.xlu0 %v455, 1
      %v547 = vpop.permute.xlu0 %546
      %548 = vrot.lane.b32.xlu0 %v456, 1
      %v549 = vpop.permute.xlu0 %548
      %550 = vrot.lane.b32.xlu0 %v457, 1
      %v551 = vpop.permute.xlu0 %550
      %552 = vrot.lane.b32.xlu0 %v458, 1
      %v553 = vpop.permute.xlu0 %552
      %554 = vrot.lane.b32.xlu0 %v459, 1
      %v555 = vpop.permute.xlu0 %554
      %556 = vrot.lane.b32.xlu0 %v460, 1
      %v557 = vpop.permute.xlu0 %556
      %558 = vrot.lane.b32.xlu0 %v461, 1
      %v559 = vpop.permute.xlu0 %558
      %vm576 = vcmask 138248
      %577 = vst.msk [vmem:[#allocation2 + $0x1] sm:$0xff] %vm576, %v529
      %578 = vst.msk [vmem:[#allocation2 + $0x9] sm:$0xff] %vm576, %v531
      %579 = vst.msk [vmem:[#allocation2 + $0x19] sm:$0xff] %vm576, %v533
      %580 = vst.msk [vmem:[#allocation2 + $0x21] sm:$0xff] %vm576, %v535
      %581 = vst.msk [vmem:[#allocation2 + $0x31] sm:$0xff] %vm576, %v537
      %582 = vst.msk [vmem:[#allocation2 + $0x39] sm:$0xff] %vm576, %v539
      %583 = vst.msk [vmem:[#allocation2 + $0x49] sm:$0xff] %vm576, %v541
      %584 = vst.msk [vmem:[#allocation2 + $0x51] sm:$0xff] %vm576, %v543
      %585 = vst.msk [vmem:[#allocation2 + $0x61] sm:$0xff] %vm576, %v545
      %586 = vst.msk [vmem:[#allocation2 + $0x69] sm:$0xff] %vm576, %v547
      %587 = vst.msk [vmem:[#allocation2 + $0x79] sm:$0xff] %vm576, %v549
      %588 = vst.msk [vmem:[#allocation2 + $0x81] sm:$0xff] %vm576, %v551
      %589 = vst.msk [vmem:[#allocation2 + $0x91] sm:$0xff] %vm576, %v553
      %590 = vst.msk [vmem:[#allocation2 + $0x99] sm:$0xff] %vm576, %v555
      %591 = vst.msk [vmem:[#allocation2 + $0xa9] sm:$0xff] %vm576, %v557
      %592 = vst.msk [vmem:[#allocation2 + $0xb1] sm:$0xff] %vm576, %v559
      %v593 = vld [vmem:[#allocation2] sm:$0xff]
      %v594 = vld [vmem:[#allocation2 + $0x8] sm:$0xff]
      %v595 = vld [vmem:[#allocation2 + $0x18] sm:$0xff]
      %v596 = vld [vmem:[#allocation2 + $0x20] sm:$0xff]
      %v597 = vld [vmem:[#allocation2 + $0x30] sm:$0xff]
      %v598 = vld [vmem:[#allocation2 + $0x38] sm:$0xff]
      %v599 = vld [vmem:[#allocation2 + $0x48] sm:$0xff]
      %v600 = vld [vmem:[#allocation2 + $0x50] sm:$0xff]
      %v601 = vld [vmem:[#allocation2 + $0x60] sm:$0xff]
      %v602 = vld [vmem:[#allocation2 + $0x68] sm:$0xff]
      %v603 = vld [vmem:[#allocation2 + $0x78] sm:$0xff]
      %v604 = vld [vmem:[#allocation2 + $0x80] sm:$0xff]
      %v605 = vld [vmem:[#allocation2 + $0x90] sm:$0xff]
      %v606 = vld [vmem:[#allocation2 + $0x98] sm:$0xff]
      %v607 = vld [vmem:[#allocation2 + $0xa8] sm:$0xff]
      %v608 = vld [vmem:[#allocation2 + $0xb0] sm:$0xff]
      %v609 = vpack.c.bf16 %v594, %v593
      %v610 = vpack.c.bf16 %v596, %v595
      %v611 = vpack.c.bf16 %v598, %v597
      %v612 = vpack.c.bf16 %v600, %v599
      %v613 = vpack.c.bf16 %v602, %v601
      %v614 = vpack.c.bf16 %v604, %v603
      %v615 = vpack.c.bf16 %v606, %v605
      %v616 = vpack.c.bf16 %v608, %v607
      %v617 = vld [vmem:[%s1] sm:$0xf]
      %v618 = vld [vmem:[%s1 + $0x4] sm:$0xf]
      %v619 = vld [vmem:[%s1 + $0x8] sm:$0xf]
      %v620 = vld [vmem:[%s1 + $0xc] sm:$0xf]
      %v621 = vld [vmem:[%s1 + $0x10] sm:$0xf]
      %v622 = vld [vmem:[%s1 + $0x14] sm:$0xf]
      %v623 = vld [vmem:[%s1 + $0x18] sm:$0xf]
      %v624 = vld [vmem:[%s1 + $0x1c] sm:$0xf]
      %v625 = vld [vmem:[%s1 + $0x20] sm:$0xf]
      %v626 = vld [vmem:[%s1 + $0x24] sm:$0xf]
      %v627 = vld [vmem:[%s1 + $0x28] sm:$0xf]
      %v628 = vld [vmem:[%s1 + $0x2c] sm:$0xf]
      %v629 = vld [vmem:[%s1 + $0x30] sm:$0xf]
      %v630 = vld [vmem:[%s1 + $0x34] sm:$0xf]
      %v631 = vld [vmem:[%s1 + $0x38] sm:$0xf]
      %v632 = vld [vmem:[%s1 + $0x3c] sm:$0xf]
      %v633 = vld [vmem:[#allocation2 + $0x1] sm:$0xff]
      %v634 = vld [vmem:[#allocation2 + $0x9] sm:$0xff]
      %v635 = vld [vmem:[#allocation2 + $0x19] sm:$0xff]
      %v636 = vld [vmem:[#allocation2 + $0x21] sm:$0xff]
      %v637 = vld [vmem:[#allocation2 + $0x31] sm:$0xff]
      %v638 = vld [vmem:[#allocation2 + $0x39] sm:$0xff]
      %v639 = vld [vmem:[#allocation2 + $0x49] sm:$0xff]
      %v640 = vld [vmem:[#allocation2 + $0x51] sm:$0xff]
      %v641 = vld [vmem:[#allocation2 + $0x61] sm:$0xff]
      %v642 = vld [vmem:[#allocation2 + $0x69] sm:$0xff]
      %v643 = vld [vmem:[#allocation2 + $0x79] sm:$0xff]
      %v644 = vld [vmem:[#allocation2 + $0x81] sm:$0xff]
      %v645 = vld [vmem:[#allocation2 + $0x91] sm:$0xff]
      %v646 = vld [vmem:[#allocation2 + $0x99] sm:$0xff]
      %v647 = vld [vmem:[#allocation2 + $0xa9] sm:$0xff]
      %v648 = vld [vmem:[#allocation2 + $0xb1] sm:$0xff]
      %v649 = vpack.c.bf16 %v634, %v633
      %v650 = vpack.c.bf16 %v636, %v635
      %v651 = vpack.c.bf16 %v638, %v637
      %v652 = vpack.c.bf16 %v640, %v639
      %v653 = vpack.c.bf16 %v642, %v641
      %v654 = vpack.c.bf16 %v644, %v643
      %v655 = vpack.c.bf16 %v646, %v645
      %v656 = vpack.c.bf16 %v648, %v647
      %s657 = scalar_lea.vmem %s1, 64
      %v658 = vld [vmem:[%s657] sm:$0xf]
      %v659 = vld [vmem:[%s657 + $0x4] sm:$0xf]
      %v660 = vld [vmem:[%s657 + $0x8] sm:$0xf]
      %v661 = vld [vmem:[%s657 + $0xc] sm:$0xf]
      %v662 = vld [vmem:[%s657 + $0x10] sm:$0xf]
      %v663 = vld [vmem:[%s657 + $0x14] sm:$0xf]
      %v664 = vld [vmem:[%s657 + $0x18] sm:$0xf]
      %v665 = vld [vmem:[%s657 + $0x1c] sm:$0xf]
      %v666 = vld [vmem:[%s657 + $0x20] sm:$0xf]
      %v667 = vld [vmem:[%s657 + $0x24] sm:$0xf]
      %v668 = vld [vmem:[%s657 + $0x28] sm:$0xf]
      %v669 = vld [vmem:[%s657 + $0x2c] sm:$0xf]
      %v670 = vld [vmem:[%s657 + $0x30] sm:$0xf]
      %v671 = vld [vmem:[%s657 + $0x34] sm:$0xf]
      %v672 = vld [vmem:[%s657 + $0x38] sm:$0xf]
      %v673 = vld [vmem:[%s657 + $0x3c] sm:$0xf]
      %v690 = vunpack.c.l.b16 %v658
      %v691 = vunpack.c.l.b16 %v659
      %v692 = vunpack.c.l.b16 %v660
      %v693 = vunpack.c.l.b16 %v661
      %v694 = vunpack.c.l.b16 %v662
      %v695 = vunpack.c.l.b16 %v663
      %v696 = vunpack.c.l.b16 %v664
      %v697 = vunpack.c.l.b16 %v665
      %v698 = vunpack.c.l.b16 %v666
      %v699 = vunpack.c.l.b16 %v667
      %v700 = vunpack.c.l.b16 %v668
      %v701 = vunpack.c.l.b16 %v669
      %v702 = vunpack.c.l.b16 %v670
      %v703 = vunpack.c.l.b16 %v671
      %v704 = vunpack.c.l.b16 %v672
      %v705 = vunpack.c.l.b16 %v673
      %v706 = vpack.c.b16 %v691, %v690
      %v707 = vpack.c.b16 %v693, %v692
      %v708 = vpack.c.b16 %v695, %v694
      %v709 = vpack.c.b16 %v697, %v696
      %v710 = vpack.c.b16 %v699, %v698
      %v711 = vpack.c.b16 %v701, %v700
      %v712 = vpack.c.b16 %v703, %v702
      %v713 = vpack.c.b16 %v705, %v704
      %722 = vmatpush.bf16.msra.mxu0 %v713
      %723 = vmatpush.bf16.msra.mxu0 %v712
      %724 = vmatpush.bf16.msra.mxu0 %v711
      %725 = vmatpush.bf16.msra.mxu0 %v710
      %726 = vmatpush.bf16.msra.mxu0 %v709
      %727 = vmatpush.bf16.msra.mxu0 %v708
      %728 = vmatpush.bf16.msra.mxu0 %v707
      %729 = vmatpush.bf16.msra.mxu0 %v706
      %730 = vmatmul.bf16.gmra.mxu0 %v649
      %v731 = vpop.f32.mrf.mxu0
      %v732 = vadd.f32 0.0, %v731
      %v733 = vpop.f32.mrf.mxu0
      %v734 = vadd.f32 0.0, %v733
      %735 = vmatmul.bf16.gmra.mxu0 %v650
      %v736 = vpop.f32.mrf.mxu0
      %v737 = vadd.f32 0.0, %v736
      %v738 = vpop.f32.mrf.mxu0
      %v739 = vadd.f32 0.0, %v738
      %740 = vmatmul.bf16.gmra.mxu0 %v651
      %v741 = vpop.f32.mrf.mxu0
      %v742 = vadd.f32 0.0, %v741
      %v743 = vpop.f32.mrf.mxu0
      %v744 = vadd.f32 0.0, %v743
      %745 = vmatmul.bf16.gmra.mxu0 %v652
      %v746 = vpop.f32.mrf.mxu0
      %v747 = vadd.f32 0.0, %v746
      %v748 = vpop.f32.mrf.mxu0
      %v749 = vadd.f32 0.0, %v748
      %750 = vmatmul.bf16.gmra.mxu0 %v653
      %v751 = vpop.f32.mrf.mxu0
      %v752 = vadd.f32 0.0, %v751
      %v753 = vpop.f32.mrf.mxu0
      %v754 = vadd.f32 0.0, %v753
      %755 = vmatmul.bf16.gmra.mxu0 %v654
      %v756 = vpop.f32.mrf.mxu0
      %v757 = vadd.f32 0.0, %v756
      %v758 = vpop.f32.mrf.mxu0
      %v759 = vadd.f32 0.0, %v758
      %760 = vmatmul.bf16.gmra.mxu0 %v655
      %v761 = vpop.f32.mrf.mxu0
      %v762 = vadd.f32 0.0, %v761
      %v763 = vpop.f32.mrf.mxu0
      %v764 = vadd.f32 0.0, %v763
      %765 = vmatmul.bf16.gmra.mxu0 %v656
      %v766 = vpop.f32.mrf.mxu0
      %v767 = vadd.f32 0.0, %v766
      %v768 = vpop.f32.mrf.mxu0
      %v769 = vadd.f32 0.0, %v768
      %770 = vdwg.mxu0
      %v787 = vunpack.c.l.b16 %v617
      %v788 = vunpack.c.l.b16 %v618
      %v789 = vunpack.c.l.b16 %v619
      %v790 = vunpack.c.l.b16 %v620
      %v791 = vunpack.c.l.b16 %v621
      %v792 = vunpack.c.l.b16 %v622
      %v793 = vunpack.c.l.b16 %v623
      %v794 = vunpack.c.l.b16 %v624
      %v795 = vunpack.c.l.b16 %v625
      %v796 = vunpack.c.l.b16 %v626
      %v797 = vunpack.c.l.b16 %v627
      %v798 = vunpack.c.l.b16 %v628
      %v799 = vunpack.c.l.b16 %v629
      %v800 = vunpack.c.l.b16 %v630
      %v801 = vunpack.c.l.b16 %v631
      %v802 = vunpack.c.l.b16 %v632
      %v803 = vpack.c.b16 %v788, %v787
      %v804 = vpack.c.b16 %v790, %v789
      %v805 = vpack.c.b16 %v792, %v791
      %v806 = vpack.c.b16 %v794, %v793
      %v807 = vpack.c.b16 %v796, %v795
      %v808 = vpack.c.b16 %v798, %v797
      %v809 = vpack.c.b16 %v800, %v799
      %v810 = vpack.c.b16 %v802, %v801
      %819 = vmatpush.bf16.msra.mxu0 %v810
      %820 = vmatpush.bf16.msra.mxu0 %v809
      %821 = vmatpush.bf16.msra.mxu0 %v808
      %822 = vmatpush.bf16.msra.mxu0 %v807
      %823 = vmatpush.bf16.msra.mxu0 %v806
      %824 = vmatpush.bf16.msra.mxu0 %v805
      %825 = vmatpush.bf16.msra.mxu0 %v804
      %826 = vmatpush.bf16.msra.mxu0 %v803
      %827 = vmatmul.bf16.gmra.mxu0 %v609
      %v828 = vpop.f32.mrf.mxu0
      %v829 = vadd.f32 %v732, %v828
      %v830 = vpop.f32.mrf.mxu0
      %v831 = vadd.f32 %v734, %v830
      %832 = vmatmul.bf16.gmra.mxu0 %v610
      %v833 = vpop.f32.mrf.mxu0
      %v834 = vadd.f32 %v737, %v833
      %v835 = vpop.f32.mrf.mxu0
      %v836 = vadd.f32 %v739, %v835
      %837 = vmatmul.bf16.gmra.mxu0 %v611
      %v838 = vpop.f32.mrf.mxu0
      %v839 = vadd.f32 %v742, %v838
      %v840 = vpop.f32.mrf.mxu0
      %v841 = vadd.f32 %v744, %v840
      %842 = vmatmul.bf16.gmra.mxu0 %v612
      %v843 = vpop.f32.mrf.mxu0
      %v844 = vadd.f32 %v747, %v843
      %v845 = vpop.f32.mrf.mxu0
      %v846 = vadd.f32 %v749, %v845
      %847 = vmatmul.bf16.gmra.mxu0 %v613
      %v848 = vpop.f32.mrf.mxu0
      %v849 = vadd.f32 %v752, %v848
      %v850 = vpop.f32.mrf.mxu0
      %v851 = vadd.f32 %v754, %v850
      %852 = vmatmul.bf16.gmra.mxu0 %v614
      %v853 = vpop.f32.mrf.mxu0
      %v854 = vadd.f32 %v757, %v853
      %v855 = vpop.f32.mrf.mxu0
      %v856 = vadd.f32 %v759, %v855
      %857 = vmatmul.bf16.gmra.mxu0 %v615
      %v858 = vpop.f32.mrf.mxu0
      %v859 = vadd.f32 %v762, %v858
      %v860 = vpop.f32.mrf.mxu0
      %v861 = vadd.f32 %v764, %v860
      %862 = vmatmul.bf16.gmra.mxu0 %v616
      %v863 = vpop.f32.mrf.mxu0
      %v864 = vadd.f32 %v767, %v863
      %v865 = vpop.f32.mrf.mxu0
      %v866 = vadd.f32 %v769, %v865
      %867 = vdwg.mxu0
      %v868 = vld [vmem:[#allocation2 + $0x2] sm:$0xff]
      %v869 = vld [vmem:[#allocation2 + $0xa] sm:$0xff]
      %v870 = vld [vmem:[#allocation2 + $0x1a] sm:$0xff]
      %v871 = vld [vmem:[#allocation2 + $0x22] sm:$0xff]
      %v872 = vld [vmem:[#allocation2 + $0x32] sm:$0xff]
      %v873 = vld [vmem:[#allocation2 + $0x3a] sm:$0xff]
      %v874 = vld [vmem:[#allocation2 + $0x4a] sm:$0xff]
      %v875 = vld [vmem:[#allocation2 + $0x52] sm:$0xff]
      %v876 = vld [vmem:[#allocation2 + $0x62] sm:$0xff]
      %v877 = vld [vmem:[#allocation2 + $0x6a] sm:$0xff]
      %v878 = vld [vmem:[#allocation2 + $0x7a] sm:$0xff]
      %v879 = vld [vmem:[#allocation2 + $0x82] sm:$0xff]
      %v880 = vld [vmem:[#allocation2 + $0x92] sm:$0xff]
      %v881 = vld [vmem:[#allocation2 + $0x9a] sm:$0xff]
      %v882 = vld [vmem:[#allocation2 + $0xaa] sm:$0xff]
      %v883 = vld [vmem:[#allocation2 + $0xb2] sm:$0xff]
      %v884 = vpack.c.bf16 %v869, %v868
      %v885 = vpack.c.bf16 %v871, %v870
      %v886 = vpack.c.bf16 %v873, %v872
      %v887 = vpack.c.bf16 %v875, %v874
      %v888 = vpack.c.bf16 %v877, %v876
      %v889 = vpack.c.bf16 %v879, %v878
      %v890 = vpack.c.bf16 %v881, %v880
      %v891 = vpack.c.bf16 %v883, %v882
      %s892 = scalar_lea.vmem %s1, 128
      %v893 = vld [vmem:[%s892] sm:$0xf]
      %v894 = vld [vmem:[%s892 + $0x4] sm:$0xf]
      %v895 = vld [vmem:[%s892 + $0x8] sm:$0xf]
      %v896 = vld [vmem:[%s892 + $0xc] sm:$0xf]
      %v897 = vld [vmem:[%s892 + $0x10] sm:$0xf]
      %v898 = vld [vmem:[%s892 + $0x14] sm:$0xf]
      %v899 = vld [vmem:[%s892 + $0x18] sm:$0xf]
      %v900 = vld [vmem:[%s892 + $0x1c] sm:$0xf]
      %v901 = vld [vmem:[%s892 + $0x20] sm:$0xf]
      %v902 = vld [vmem:[%s892 + $0x24] sm:$0xf]
      %v903 = vld [vmem:[%s892 + $0x28] sm:$0xf]
      %v904 = vld [vmem:[%s892 + $0x2c] sm:$0xf]
      %v905 = vld [vmem:[%s892 + $0x30] sm:$0xf]
      %v906 = vld [vmem:[%s892 + $0x34] sm:$0xf]
      %v907 = vld [vmem:[%s892 + $0x38] sm:$0xf]
      %v908 = vld [vmem:[%s892 + $0x3c] sm:$0xf]
      %v925 = vunpack.c.l.b16 %v893
      %v926 = vunpack.c.l.b16 %v894
      %v927 = vunpack.c.l.b16 %v895
      %v928 = vunpack.c.l.b16 %v896
      %v929 = vunpack.c.l.b16 %v897
      %v930 = vunpack.c.l.b16 %v898
      %v931 = vunpack.c.l.b16 %v899
      %v932 = vunpack.c.l.b16 %v900
      %v933 = vunpack.c.l.b16 %v901
      %v934 = vunpack.c.l.b16 %v902
      %v935 = vunpack.c.l.b16 %v903
      %v936 = vunpack.c.l.b16 %v904
      %v937 = vunpack.c.l.b16 %v905
      %v938 = vunpack.c.l.b16 %v906
      %v939 = vunpack.c.l.b16 %v907
      %v940 = vunpack.c.l.b16 %v908
      %v941 = vpack.c.b16 %v926, %v925
      %v942 = vpack.c.b16 %v928, %v927
      %v943 = vpack.c.b16 %v930, %v929
      %v944 = vpack.c.b16 %v932, %v931
      %v945 = vpack.c.b16 %v934, %v933
      %v946 = vpack.c.b16 %v936, %v935
      %v947 = vpack.c.b16 %v938, %v937
      %v948 = vpack.c.b16 %v940, %v939
      %957 = vmatpush.bf16.msra.mxu0 %v948
      %958 = vmatpush.bf16.msra.mxu0 %v947
      %959 = vmatpush.bf16.msra.mxu0 %v946
      %960 = vmatpush.bf16.msra.mxu0 %v945
      %961 = vmatpush.bf16.msra.mxu0 %v944
      %962 = vmatpush.bf16.msra.mxu0 %v943
      %963 = vmatpush.bf16.msra.mxu0 %v942
      %964 = vmatpush.bf16.msra.mxu0 %v941
      %965 = vmatmul.bf16.gmra.mxu0 %v884
      %v966 = vpop.f32.mrf.mxu0
      %v967 = vadd.f32 0.0, %v966
      %v968 = vpop.f32.mrf.mxu0
      %v969 = vadd.f32 0.0, %v968
      %970 = vmatmul.bf16.gmra.mxu0 %v885
      %v971 = vpop.f32.mrf.mxu0
      %v972 = vadd.f32 0.0, %v971
      %v973 = vpop.f32.mrf.mxu0
      %v974 = vadd.f32 0.0, %v973
      %975 = vmatmul.bf16.gmra.mxu0 %v886
      %v976 = vpop.f32.mrf.mxu0
      %v977 = vadd.f32 0.0, %v976
      %v978 = vpop.f32.mrf.mxu0
      %v979 = vadd.f32 0.0, %v978
      %980 = vmatmul.bf16.gmra.mxu0 %v887
      %v981 = vpop.f32.mrf.mxu0
      %v982 = vadd.f32 0.0, %v981
      %v983 = vpop.f32.mrf.mxu0
      %v984 = vadd.f32 0.0, %v983
      %985 = vmatmul.bf16.gmra.mxu0 %v888
      %v986 = vpop.f32.mrf.mxu0
      %v987 = vadd.f32 0.0, %v986
      %v988 = vpop.f32.mrf.mxu0
      %v989 = vadd.f32 0.0, %v988
      %990 = vmatmul.bf16.gmra.mxu0 %v889
      %v991 = vpop.f32.mrf.mxu0
      %v992 = vadd.f32 0.0, %v991
      %v993 = vpop.f32.mrf.mxu0
      %v994 = vadd.f32 0.0, %v993
      %995 = vmatmul.bf16.gmra.mxu0 %v890
      %v996 = vpop.f32.mrf.mxu0
      %v997 = vadd.f32 0.0, %v996
      %v998 = vpop.f32.mrf.mxu0
      %v999 = vadd.f32 0.0, %v998
      %1000 = vmatmul.bf16.gmra.mxu0 %v891
      %v1001 = vpop.f32.mrf.mxu0
      %v1002 = vadd.f32 0.0, %v1001
      %v1003 = vpop.f32.mrf.mxu0
      %v1004 = vadd.f32 0.0, %v1003
      %1005 = vdwg.mxu0
      %v1006 = vadd.f32 %v829, %v967
      %v1007 = vadd.f32 %v831, %v969
      %v1008 = vadd.f32 %v834, %v972
      %v1009 = vadd.f32 %v836, %v974
      %v1010 = vadd.f32 %v839, %v977
      %v1011 = vadd.f32 %v841, %v979
      %v1012 = vadd.f32 %v844, %v982
      %v1013 = vadd.f32 %v846, %v984
      %v1014 = vadd.f32 %v849, %v987
      %v1015 = vadd.f32 %v851, %v989
      %v1016 = vadd.f32 %v854, %v992
      %v1017 = vadd.f32 %v856, %v994
      %v1018 = vadd.f32 %v859, %v997
      %v1019 = vadd.f32 %v861, %v999
      %v1020 = vadd.f32 %v864, %v1002
      %v1021 = vadd.f32 %v866, %v1004
      %v1022 = vld [vmem:[%s2] sm:$0x1]
      %v1024 = vperm.slane %v1022, 0
      %v1026 = vadd.f32 %v1006, %v1024
      %v1027 = vadd.f32 %v1007, %v1024
      %v1028 = vadd.f32 %v1008, %v1024
      %v1029 = vadd.f32 %v1009, %v1024
      %v1030 = vadd.f32 %v1010, %v1024
      %v1031 = vadd.f32 %v1011, %v1024
      %v1032 = vadd.f32 %v1012, %v1024
      %v1033 = vadd.f32 %v1013, %v1024
      %v1034 = vadd.f32 %v1014, %v1024
      %v1035 = vadd.f32 %v1015, %v1024
      %v1036 = vadd.f32 %v1016, %v1024
      %v1037 = vadd.f32 %v1017, %v1024
      %v1038 = vadd.f32 %v1018, %v1024
      %v1039 = vadd.f32 %v1019, %v1024
      %v1040 = vadd.f32 %v1020, %v1024
      %v1041 = vadd.f32 %v1021, %v1024
      %v1042 = vmax.f32 %v1026, 0.0
      %v1043 = vmax.f32 %v1027, 0.0
      %v1044 = vmax.f32 %v1028, 0.0
      %v1045 = vmax.f32 %v1029, 0.0
      %v1046 = vmax.f32 %v1030, 0.0
      %v1047 = vmax.f32 %v1031, 0.0
      %v1048 = vmax.f32 %v1032, 0.0
      %v1049 = vmax.f32 %v1033, 0.0
      %v1050 = vmax.f32 %v1034, 0.0
      %v1051 = vmax.f32 %v1035, 0.0
      %v1052 = vmax.f32 %v1036, 0.0
      %v1053 = vmax.f32 %v1037, 0.0
      %v1054 = vmax.f32 %v1038, 0.0
      %v1055 = vmax.f32 %v1039, 0.0
      %v1056 = vmax.f32 %v1040, 0.0
      %v1057 = vmax.f32 %v1041, 0.0
      %v1058 = vld [vmem:[%s3] sm:$0x1]
      %v1060 = vperm.slane %v1058, 0
      %v1062 = vmul.f32 %v1042, %v1060
      %v1063 = vmul.f32 %v1043, %v1060
      %v1064 = vmul.f32 %v1044, %v1060
      %v1065 = vmul.f32 %v1045, %v1060
      %v1066 = vmul.f32 %v1046, %v1060
      %v1067 = vmul.f32 %v1047, %v1060
      %v1068 = vmul.f32 %v1048, %v1060
      %v1069 = vmul.f32 %v1049, %v1060
      %v1070 = vmul.f32 %v1050, %v1060
      %v1071 = vmul.f32 %v1051, %v1060
      %v1072 = vmul.f32 %v1052, %v1060
      %v1073 = vmul.f32 %v1053, %v1060
      %v1074 = vmul.f32 %v1054, %v1060
      %v1075 = vmul.f32 %v1055, %v1060
      %v1076 = vmul.f32 %v1056, %v1060
      %v1077 = vmul.f32 %v1057, %v1060
      %v1078 = vld [vmem:[%s4] sm:$0x1]
      %v1080 = vperm.slane %v1078, 0
      %v1082 = vadd.f32 %v1062, %v1080
      %v1083 = vadd.f32 %v1063, %v1080
      %v1084 = vadd.f32 %v1064, %v1080
      %v1085 = vadd.f32 %v1065, %v1080
      %v1086 = vadd.f32 %v1066, %v1080
      %v1087 = vadd.f32 %v1067, %v1080
      %v1088 = vadd.f32 %v1068, %v1080
      %v1089 = vadd.f32 %v1069, %v1080
      %v1090 = vadd.f32 %v1070, %v1080
      %v1091 = vadd.f32 %v1071, %v1080
      %v1092 = vadd.f32 %v1072, %v1080
      %v1093 = vadd.f32 %v1073, %v1080
      %v1094 = vadd.f32 %v1074, %v1080
      %v1095 = vadd.f32 %v1075, %v1080
      %v1096 = vadd.f32 %v1076, %v1080
      %v1097 = vadd.f32 %v1077, %v1080
      %v1098 = vlaneseq
      %vm1099 = vcmp.ge.s32.totalorder %v1098, 0
      %vm1100 = vcmp.lt.s32.totalorder %v1098, 256
      %vm1101 = vmand %vm1099, %vm1100
      %1102 = vst.msk [vmem:[#allocation3] ss:$8 sm:$0x3] %vm1101, -inf
      %1103 = vst.msk [vmem:[#allocation3] ss:$8 sm:$0x0] %vm1101, -inf
      %s1104 = scalar_lea.vmem [#allocation3], 48
      %1105 = vst.msk [vmem:[%s1104] ss:$8 sm:$0x3] %vm1101, -inf
      %1106 = vst.msk [vmem:[%s1104] ss:$8 sm:$0x0] %vm1101, -inf
      %s1107 = scalar_lea.vmem [#allocation3], 96
      %1108 = vst.msk [vmem:[%s1107] ss:$8 sm:$0x3] %vm1101, -inf
      %1109 = vst.msk [vmem:[%s1107] ss:$8 sm:$0x0] %vm1101, -inf
      %s1110 = scalar_lea.vmem [#allocation3], 144
      %1111 = vst.msk [vmem:[%s1110] ss:$8 sm:$0x3] %vm1101, -inf
      %1112 = vst.msk [vmem:[%s1110] ss:$8 sm:$0x0] %vm1101, -inf
      %s1113 = scalar_lea.vmem [#allocation3], 192
      %1114 = vst.msk [vmem:[%s1113] ss:$8 sm:$0x3] %vm1101, -inf
      %1115 = vst.msk [vmem:[%s1113] ss:$8 sm:$0x0] %vm1101, -inf
      %s1116 = scalar_lea.vmem [#allocation3], 240
      %1117 = vst.msk [vmem:[%s1116] ss:$8 sm:$0x3] %vm1101, -inf
      %1118 = vst.msk [vmem:[%s1116] ss:$8 sm:$0x0] %vm1101, -inf
      %s1119 = scalar_lea.vmem [#allocation3], 288
      %1120 = vst.msk [vmem:[%s1119] ss:$8 sm:$0x3] %vm1101, -inf
      %1121 = vst.msk [vmem:[%s1119] ss:$8 sm:$0x0] %vm1101, -inf
      %s1122 = scalar_lea.vmem [#allocation3], 336
      %1123 = vst.msk [vmem:[%s1122] ss:$8 sm:$0x3] %vm1101, -inf
      %1124 = vst.msk [vmem:[%s1122] ss:$8 sm:$0x0] %vm1101, -inf
      %s1125 = scalar_lea.vmem [#allocation3], 33
      %1126 = vst.msk [vmem:[%s1125] ss:$8 sm:$0x3] %vm1101, -inf
      %1127 = vst.msk [vmem:[%s1125] ss:$8 sm:$0x0] %vm1101, -inf
      %s1128 = scalar_lea.vmem [#allocation3], 81
      %1129 = vst.msk [vmem:[%s1128] ss:$8 sm:$0x3] %vm1101, -inf
      %1130 = vst.msk [vmem:[%s1128] ss:$8 sm:$0x0] %vm1101, -inf
      %s1131 = scalar_lea.vmem [#allocation3], 129
      %1132 = vst.msk [vmem:[%s1131] ss:$8 sm:$0x3] %vm1101, -inf
      %1133 = vst.msk [vmem:[%s1131] ss:$8 sm:$0x0] %vm1101, -inf
      %s1134 = scalar_lea.vmem [#allocation3], 177
      %1135 = vst.msk [vmem:[%s1134] ss:$8 sm:$0x3] %vm1101, -inf
      %1136 = vst.msk [vmem:[%s1134] ss:$8 sm:$0x0] %vm1101, -inf
      %s1137 = scalar_lea.vmem [#allocation3], 225
      %1138 = vst.msk [vmem:[%s1137] ss:$8 sm:$0x3] %vm1101, -inf
      %1139 = vst.msk [vmem:[%s1137] ss:$8 sm:$0x0] %vm1101, -inf
      %s1140 = scalar_lea.vmem [#allocation3], 273
      %1141 = vst.msk [vmem:[%s1140] ss:$8 sm:$0x3] %vm1101, -inf
      %1142 = vst.msk [vmem:[%s1140] ss:$8 sm:$0x0] %vm1101, -inf
      %s1143 = scalar_lea.vmem [#allocation3], 321
      %1144 = vst.msk [vmem:[%s1143] ss:$8 sm:$0x3] %vm1101, -inf
      %1145 = vst.msk [vmem:[%s1143] ss:$8 sm:$0x0] %vm1101, -inf
      %s1146 = scalar_lea.vmem [#allocation3], 369
      %1147 = vst.msk [vmem:[%s1146] ss:$8 sm:$0x3] %vm1101, -inf
      %1148 = vst.msk [vmem:[%s1146] ss:$8 sm:$0x0] %vm1101, -inf
      %vm1149 = vcmask 64513
      %1150 = vst.msk [vmem:[#allocation3] sm:$0xfe] %vm1149, -inf
      %vm1151 = vcmask 64512
      %1152 = vst.msk [vmem:[#allocation3 + $0x10] sm:$0xff] %vm1151, -inf
      %vm1153 = vcmask 57344
      %1154 = vst.msk [vmem:[#allocation3 + $0x20] sm:$0x1] %vm1153, -inf
      %1155 = vst.msk [vmem:[#allocation3 + $0x30] sm:$0xfe] %vm1149, -inf
      %1156 = vst.msk [vmem:[#allocation3 + $0x40] sm:$0xff] %vm1151, -inf
      %1157 = vst.msk [vmem:[#allocation3 + $0x50] sm:$0x1] %vm1153, -inf
      %1158 = vst.msk [vmem:[#allocation3 + $0x60] sm:$0xfe] %vm1149, -inf
      %1159 = vst.msk [vmem:[#allocation3 + $0x70] sm:$0xff] %vm1151, -inf
      %1160 = vst.msk [vmem:[#allocation3 + $0x80] sm:$0x1] %vm1153, -inf
      %1161 = vst.msk [vmem:[#allocation3 + $0x90] sm:$0xfe] %vm1149, -inf
      %1162 = vst.msk [vmem:[#allocation3 + $0xa0] sm:$0xff] %vm1151, -inf
      %1163 = vst.msk [vmem:[#allocation3 + $0xb0] sm:$0x1] %vm1153, -inf
      %1164 = vst.msk [vmem:[#allocation3 + $0xc0] sm:$0xfe] %vm1149, -inf
      %1165 = vst.msk [vmem:[#allocation3 + $0xd0] sm:$0xff] %vm1151, -inf
      %1166 = vst.msk [vmem:[#allocation3 + $0xe0] sm:$0x1] %vm1153, -inf
      %1167 = vst.msk [vmem:[#allocation3 + $0xf0] sm:$0xfe] %vm1149, -inf
      %1168 = vst.msk [vmem:[#allocation3 + $0x100] sm:$0xff] %vm1151, -inf
      %1169 = vst.msk [vmem:[#allocation3 + $0x110] sm:$0x1] %vm1153, -inf
      %1170 = vst.msk [vmem:[#allocation3 + $0x120] sm:$0xfe] %vm1149, -inf
      %1171 = vst.msk [vmem:[#allocation3 + $0x130] sm:$0xff] %vm1151, -inf
      %1172 = vst.msk [vmem:[#allocation3 + $0x140] sm:$0x1] %vm1153, -inf
      %1173 = vst.msk [vmem:[#allocation3 + $0x150] sm:$0xfe] %vm1149, -inf
      %1174 = vst.msk [vmem:[#allocation3 + $0x160] sm:$0xff] %vm1151, -inf
      %1175 = vst.msk [vmem:[#allocation3 + $0x170] sm:$0x1] %vm1153, -inf
      %vm1176 = vcmask 1047617
      %1177 = vst.msk [vmem:[#allocation3 + $0x8] sm:$0xfe] %vm1176, -inf
      %vm1178 = vcmask 1047616
      %1179 = vst.msk [vmem:[#allocation3 + $0x18] sm:$0xff] %vm1178, -inf
      %vm1180 = vcmask 1040448
      %1181 = vst.msk [vmem:[#allocation3 + $0x28] sm:$0x1] %vm1180, -inf
      %1182 = vst.msk [vmem:[#allocation3 + $0x38] sm:$0xfe] %vm1176, -inf
      %1183 = vst.msk [vmem:[#allocation3 + $0x48] sm:$0xff] %vm1178, -inf
      %1184 = vst.msk [vmem:[#allocation3 + $0x58] sm:$0x1] %vm1180, -inf
      %1185 = vst.msk [vmem:[#allocation3 + $0x68] sm:$0xfe] %vm1176, -inf
      %1186 = vst.msk [vmem:[#allocation3 + $0x78] sm:$0xff] %vm1178, -inf
      %1187 = vst.msk [vmem:[#allocation3 + $0x88] sm:$0x1] %vm1180, -inf
      %1188 = vst.msk [vmem:[#allocation3 + $0x98] sm:$0xfe] %vm1176, -inf
      %1189 = vst.msk [vmem:[#allocation3 + $0xa8] sm:$0xff] %vm1178, -inf
      %1190 = vst.msk [vmem:[#allocation3 + $0xb8] sm:$0x1] %vm1180, -inf
      %1191 = vst.msk [vmem:[#allocation3 + $0xc8] sm:$0xfe] %vm1176, -inf
      %1192 = vst.msk [vmem:[#allocation3 + $0xd8] sm:$0xff] %vm1178, -inf
      %1193 = vst.msk [vmem:[#allocation3 + $0xe8] sm:$0x1] %vm1180, -inf
      %1194 = vst.msk [vmem:[#allocation3 + $0xf8] sm:$0xfe] %vm1176, -inf
      %1195 = vst.msk [vmem:[#allocation3 + $0x108] sm:$0xff] %vm1178, -inf
      %1196 = vst.msk [vmem:[#allocation3 + $0x118] sm:$0x1] %vm1180, -inf
      %1197 = vst.msk [vmem:[#allocation3 + $0x128] sm:$0xfe] %vm1176, -inf
      %1198 = vst.msk [vmem:[#allocation3 + $0x138] sm:$0xff] %vm1178, -inf
      %1199 = vst.msk [vmem:[#allocation3 + $0x148] sm:$0x1] %vm1180, -inf
      %1200 = vst.msk [vmem:[#allocation3 + $0x158] sm:$0xfe] %vm1176, -inf
      %1201 = vst.msk [vmem:[#allocation3 + $0x168] sm:$0xff] %vm1178, -inf
      %1202 = vst.msk [vmem:[#allocation3 + $0x178] sm:$0x1] %vm1180, -inf
      %vm1219 = vcmask 1040384
      %v1220 = vrot.slane %v1082, 7
      %v1221 = vrot.slane %v1083, 7
      %v1222 = vsel %vm1219, %v1220, %v1221
      %v1223 = vrot.slane %v1084, 7
      %v1224 = vrot.slane %v1085, 7
      %v1225 = vsel %vm1219, %v1223, %v1224
      %v1226 = vrot.slane %v1086, 7
      %v1227 = vrot.slane %v1087, 7
      %v1228 = vsel %vm1219, %v1226, %v1227
      %v1229 = vrot.slane %v1088, 7
      %v1230 = vrot.slane %v1089, 7
      %v1231 = vsel %vm1219, %v1229, %v1230
      %v1232 = vrot.slane %v1090, 7
      %v1233 = vrot.slane %v1091, 7
      %v1234 = vsel %vm1219, %v1232, %v1233
      %v1235 = vrot.slane %v1092, 7
      %v1236 = vrot.slane %v1093, 7
      %v1237 = vsel %vm1219, %v1235, %v1236
      %v1238 = vrot.slane %v1094, 7
      %v1239 = vrot.slane %v1095, 7
      %v1240 = vsel %vm1219, %v1238, %v1239
      %v1241 = vrot.slane %v1096, 7
      %v1242 = vrot.slane %v1097, 7
      %v1243 = vsel %vm1219, %v1241, %v1242
      %1244 = vrot.lane.b32.xlu0 %v1220, 8
      %v1245 = vpop.permute.xlu0 %1244
      %1246 = vrot.lane.b32.xlu0 %v1222, 8
      %v1247 = vpop.permute.xlu0 %1246
      %1248 = vrot.lane.b32.xlu0 %v1221, 8
      %v1249 = vpop.permute.xlu0 %1248
      %1250 = vrot.lane.b32.xlu0 %v1223, 8
      %v1251 = vpop.permute.xlu0 %1250
      %1252 = vrot.lane.b32.xlu0 %v1225, 8
      %v1253 = vpop.permute.xlu0 %1252
      %1254 = vrot.lane.b32.xlu0 %v1224, 8
      %v1255 = vpop.permute.xlu0 %1254
      %1256 = vrot.lane.b32.xlu0 %v1226, 8
      %v1257 = vpop.permute.xlu0 %1256
      %1258 = vrot.lane.b32.xlu0 %v1228, 8
      %v1259 = vpop.permute.xlu0 %1258
      %1260 = vrot.lane.b32.xlu0 %v1227, 8
      %v1261 = vpop.permute.xlu0 %1260
      %1262 = vrot.lane.b32.xlu0 %v1229, 8
      %v1263 = vpop.permute.xlu0 %1262
      %1264 = vrot.lane.b32.xlu0 %v1231, 8
      %v1265 = vpop.permute.xlu0 %1264
      %1266 = vrot.lane.b32.xlu0 %v1230, 8
      %v1267 = vpop.permute.xlu0 %1266
      %1268 = vrot.lane.b32.xlu0 %v1232, 8
      %v1269 = vpop.permute.xlu0 %1268
      %1270 = vrot.lane.b32.xlu0 %v1234, 8
      %v1271 = vpop.permute.xlu0 %1270
      %1272 = vrot.lane.b32.xlu0 %v1233, 8
      %v1273 = vpop.permute.xlu0 %1272
      %1274 = vrot.lane.b32.xlu0 %v1235, 8
      %v1275 = vpop.permute.xlu0 %1274
      %1276 = vrot.lane.b32.xlu0 %v1237, 8
      %v1277 = vpop.permute.xlu0 %1276
      %1278 = vrot.lane.b32.xlu0 %v1236, 8
      %v1279 = vpop.permute.xlu0 %1278
      %1280 = vrot.lane.b32.xlu0 %v1238, 8
      %v1281 = vpop.permute.xlu0 %1280
      %1282 = vrot.lane.b32.xlu0 %v1240, 8
      %v1283 = vpop.permute.xlu0 %1282
      %1284 = vrot.lane.b32.xlu0 %v1239, 8
      %v1285 = vpop.permute.xlu0 %1284
      %1286 = vrot.lane.b32.xlu0 %v1241, 8
      %v1287 = vpop.permute.xlu0 %1286
      %1288 = vrot.lane.b32.xlu0 %v1243, 8
      %v1289 = vpop.permute.xlu0 %1288
      %1290 = vrot.lane.b32.xlu0 %v1242, 8
      %v1291 = vpop.permute.xlu0 %1290
      %1316 = vst.msk [vmem:[#allocation3] sm:$0xfe] %vm1176, %v1245
      %1317 = vst.msk [vmem:[#allocation3 + $0x8] sm:$0xfe] %vm1149, %v1245
      %1318 = vst.msk [vmem:[#allocation3 + $0x10] sm:$0xff] %vm1178, %v1247
      %1319 = vst.msk [vmem:[#allocation3 + $0x18] sm:$0xff] %vm1151, %v1247
      %1320 = vst.msk [vmem:[#allocation3 + $0x20] sm:$0x1] %vm1180, %v1249
      %1321 = vst.msk [vmem:[#allocation3 + $0x28] sm:$0x1] %vm1153, %v1249
      %1322 = vst.msk [vmem:[#allocation3 + $0x30] sm:$0xfe] %vm1176, %v1251
      %1323 = vst.msk [vmem:[#allocation3 + $0x38] sm:$0xfe] %vm1149, %v1251
      %1324 = vst.msk [vmem:[#allocation3 + $0x40] sm:$0xff] %vm1178, %v1253
      %1325 = vst.msk [vmem:[#allocation3 + $0x48] sm:$0xff] %vm1151, %v1253
      %1326 = vst.msk [vmem:[#allocation3 + $0x50] sm:$0x1] %vm1180, %v1255
      %1327 = vst.msk [vmem:[#allocation3 + $0x58] sm:$0x1] %vm1153, %v1255
      %1328 = vst.msk [vmem:[#allocation3 + $0x60] sm:$0xfe] %vm1176, %v1257
      %1329 = vst.msk [vmem:[#allocation3 + $0x68] sm:$0xfe] %vm1149, %v1257
      %1330 = vst.msk [vmem:[#allocation3 + $0x70] sm:$0xff] %vm1178, %v1259
      %1331 = vst.msk [vmem:[#allocation3 + $0x78] sm:$0xff] %vm1151, %v1259
      %1332 = vst.msk [vmem:[#allocation3 + $0x80] sm:$0x1] %vm1180, %v1261
      %1333 = vst.msk [vmem:[#allocation3 + $0x88] sm:$0x1] %vm1153, %v1261
      %1334 = vst.msk [vmem:[#allocation3 + $0x90] sm:$0xfe] %vm1176, %v1263
      %1335 = vst.msk [vmem:[#allocation3 + $0x98] sm:$0xfe] %vm1149, %v1263
      %1336 = vst.msk [vmem:[#allocation3 + $0xa0] sm:$0xff] %vm1178, %v1265
      %1337 = vst.msk [vmem:[#allocation3 + $0xa8] sm:$0xff] %vm1151, %v1265
      %1338 = vst.msk [vmem:[#allocation3 + $0xb0] sm:$0x1] %vm1180, %v1267
      %1339 = vst.msk [vmem:[#allocation3 + $0xb8] sm:$0x1] %vm1153, %v1267
      %1340 = vst.msk [vmem:[#allocation3 + $0xc0] sm:$0xfe] %vm1176, %v1269
      %1341 = vst.msk [vmem:[#allocation3 + $0xc8] sm:$0xfe] %vm1149, %v1269
      %1342 = vst.msk [vmem:[#allocation3 + $0xd0] sm:$0xff] %vm1178, %v1271
      %1343 = vst.msk [vmem:[#allocation3 + $0xd8] sm:$0xff] %vm1151, %v1271
      %1344 = vst.msk [vmem:[#allocation3 + $0xe0] sm:$0x1] %vm1180, %v1273
      %1345 = vst.msk [vmem:[#allocation3 + $0xe8] sm:$0x1] %vm1153, %v1273
      %1346 = vst.msk [vmem:[#allocation3 + $0xf0] sm:$0xfe] %vm1176, %v1275
      %1347 = vst.msk [vmem:[#allocation3 + $0xf8] sm:$0xfe] %vm1149, %v1275
      %1348 = vst.msk [vmem:[#allocation3 + $0x100] sm:$0xff] %vm1178, %v1277
      %1349 = vst.msk [vmem:[#allocation3 + $0x108] sm:$0xff] %vm1151, %v1277
      %1350 = vst.msk [vmem:[#allocation3 + $0x110] sm:$0x1] %vm1180, %v1279
      %1351 = vst.msk [vmem:[#allocation3 + $0x118] sm:$0x1] %vm1153, %v1279
      %1352 = vst.msk [vmem:[#allocation3 + $0x120] sm:$0xfe] %vm1176, %v1281
      %1353 = vst.msk [vmem:[#allocation3 + $0x128] sm:$0xfe] %vm1149, %v1281
      %1354 = vst.msk [vmem:[#allocation3 + $0x130] sm:$0xff] %vm1178, %v1283
      %1355 = vst.msk [vmem:[#allocation3 + $0x138] sm:$0xff] %vm1151, %v1283
      %1356 = vst.msk [vmem:[#allocation3 + $0x140] sm:$0x1] %vm1180, %v1285
      %1357 = vst.msk [vmem:[#allocation3 + $0x148] sm:$0x1] %vm1153, %v1285
      %1358 = vst.msk [vmem:[#allocation3 + $0x150] sm:$0xfe] %vm1176, %v1287
      %1359 = vst.msk [vmem:[#allocation3 + $0x158] sm:$0xfe] %vm1149, %v1287
      %1360 = vst.msk [vmem:[#allocation3 + $0x160] sm:$0xff] %vm1178, %v1289
      %1361 = vst.msk [vmem:[#allocation3 + $0x168] sm:$0xff] %vm1151, %v1289
      %1362 = vst.msk [vmem:[#allocation3 + $0x170] sm:$0x1] %vm1180, %v1291
      %1363 = vst.msk [vmem:[#allocation3 + $0x178] sm:$0x1] %vm1153, %v1291
      %v1364 = vld [vmem:[#allocation3] sm:$0xff]
      %v1365 = vld [vmem:[#allocation3 + $0x8] sm:$0xff]
      %v1366 = vld [vmem:[#allocation3 + $0x10] sm:$0xff]
      %v1367 = vld [vmem:[#allocation3 + $0x18] sm:$0xff]
      %v1368 = vld [vmem:[#allocation3 + $0x30] sm:$0xff]
      %v1369 = vld [vmem:[#allocation3 + $0x38] sm:$0xff]
      %v1370 = vld [vmem:[#allocation3 + $0x40] sm:$0xff]
      %v1371 = vld [vmem:[#allocation3 + $0x48] sm:$0xff]
      %v1372 = vld [vmem:[#allocation3 + $0x60] sm:$0xff]
      %v1373 = vld [vmem:[#allocation3 + $0x68] sm:$0xff]
      %v1374 = vld [vmem:[#allocation3 + $0x70] sm:$0xff]
      %v1375 = vld [vmem:[#allocation3 + $0x78] sm:$0xff]
      %v1376 = vld [vmem:[#allocation3 + $0x90] sm:$0xff]
      %v1377 = vld [vmem:[#allocation3 + $0x98] sm:$0xff]
      %v1378 = vld [vmem:[#allocation3 + $0xa0] sm:$0xff]
      %v1379 = vld [vmem:[#allocation3 + $0xa8] sm:$0xff]
      %v1380 = vld [vmem:[#allocation3 + $0xc0] sm:$0xff]
      %v1381 = vld [vmem:[#allocation3 + $0xc8] sm:$0xff]
      %v1382 = vld [vmem:[#allocation3 + $0xd0] sm:$0xff]
      %v1383 = vld [vmem:[#allocation3 + $0xd8] sm:$0xff]
      %v1384 = vld [vmem:[#allocation3 + $0xf0] sm:$0xff]
      %v1385 = vld [vmem:[#allocation3 + $0xf8] sm:$0xff]
      %v1386 = vld [vmem:[#allocation3 + $0x100] sm:$0xff]
      %v1387 = vld [vmem:[#allocation3 + $0x108] sm:$0xff]
      %v1388 = vld [vmem:[#allocation3 + $0x120] sm:$0xff]
      %v1389 = vld [vmem:[#allocation3 + $0x128] sm:$0xff]
      %v1390 = vld [vmem:[#allocation3 + $0x130] sm:$0xff]
      %v1391 = vld [vmem:[#allocation3 + $0x138] sm:$0xff]
      %v1392 = vld [vmem:[#allocation3 + $0x150] sm:$0xff]
      %v1393 = vld [vmem:[#allocation3 + $0x158] sm:$0xff]
      %v1394 = vld [vmem:[#allocation3 + $0x160] sm:$0xff]
      %v1395 = vld [vmem:[#allocation3 + $0x168] sm:$0xff]
      %v1396 = vld [vmem:[#allocation3] sm:$0xfe]
      %v1397 = vld [vmem:[#allocation3 + $0x8] sm:$0xfe]
      %v1398 = vld [vmem:[#allocation3 + $0x20] sm:$0x1]
      %v1399 = vld [vmem:[#allocation3 + $0x28] sm:$0x1]
      %v1400 = vld [vmem:[#allocation3 + $0x30] sm:$0xfe]
      %v1401 = vld [vmem:[#allocation3 + $0x38] sm:$0xfe]
      %v1402 = vld [vmem:[#allocation3 + $0x50] sm:$0x1]
      %v1403 = vld [vmem:[#allocation3 + $0x58] sm:$0x1]
      %v1404 = vld [vmem:[#allocation3 + $0x60] sm:$0xfe]
      %v1405 = vld [vmem:[#allocation3 + $0x68] sm:$0xfe]
      %v1406 = vld [vmem:[#allocation3 + $0x80] sm:$0x1]
      %v1407 = vld [vmem:[#allocation3 + $0x88] sm:$0x1]
      %v1408 = vld [vmem:[#allocation3 + $0x90] sm:$0xfe]
      %v1409 = vld [vmem:[#allocation3 + $0x98] sm:$0xfe]
      %v1410 = vld [vmem:[#allocation3 + $0xb0] sm:$0x1]
      %v1411 = vld [vmem:[#allocation3 + $0xb8] sm:$0x1]
      %v1412 = vld [vmem:[#allocation3 + $0xc0] sm:$0xfe]
      %v1413 = vld [vmem:[#allocation3 + $0xc8] sm:$0xfe]
      %v1414 = vld [vmem:[#allocation3 + $0xe0] sm:$0x1]
      %v1415 = vld [vmem:[#allocation3 + $0xe8] sm:$0x1]
      %v1416 = vld [vmem:[#allocation3 + $0xf0] sm:$0xfe]
      %v1417 = vld [vmem:[#allocation3 + $0xf8] sm:$0xfe]
      %v1418 = vld [vmem:[#allocation3 + $0x110] sm:$0x1]
      %v1419 = vld [vmem:[#allocation3 + $0x118] sm:$0x1]
      %v1420 = vld [vmem:[#allocation3 + $0x120] sm:$0xfe]
      %v1421 = vld [vmem:[#allocation3 + $0x128] sm:$0xfe]
      %v1422 = vld [vmem:[#allocation3 + $0x140] sm:$0x1]
      %v1423 = vld [vmem:[#allocation3 + $0x148] sm:$0x1]
      %v1424 = vld [vmem:[#allocation3 + $0x150] sm:$0xfe]
      %v1425 = vld [vmem:[#allocation3 + $0x158] sm:$0xfe]
      %v1426 = vld [vmem:[#allocation3 + $0x170] sm:$0x1]
      %v1427 = vld [vmem:[#allocation3 + $0x178] sm:$0x1]
      %vm1476 = vcmask 1046528
      %v1477 = vrot.slane %v1396, 1
      %v1478 = vrot.slane %v1366, 1
      %v1479 = vsel %vm1476, %v1477, %v1478
      %v1480 = vrot.slane %v1397, 1
      %v1481 = vrot.slane %v1367, 1
      %v1482 = vsel %vm1476, %v1480, %v1481
      %v1483 = vrot.slane %v1398, 1
      %v1484 = vsel %vm1476, %v1478, %v1483
      %v1485 = vrot.slane %v1399, 1
      %v1486 = vsel %vm1476, %v1481, %v1485
      %v1487 = vrot.slane %v1400, 1
      %v1488 = vrot.slane %v1370, 1
      %v1489 = vsel %vm1476, %v1487, %v1488
      %v1490 = vrot.slane %v1401, 1
      %v1491 = vrot.slane %v1371, 1
      %v1492 = vsel %vm1476, %v1490, %v1491
      %v1493 = vrot.slane %v1402, 1
      %v1494 = vsel %vm1476, %v1488, %v1493
      %v1495 = vrot.slane %v1403, 1
      %v1496 = vsel %vm1476, %v1491, %v1495
      %v1497 = vrot.slane %v1404, 1
      %v1498 = vrot.slane %v1374, 1
      %v1499 = vsel %vm1476, %v1497, %v1498
      %v1500 = vrot.slane %v1405, 1
      %v1501 = vrot.slane %v1375, 1
      %v1502 = vsel %vm1476, %v1500, %v1501
      %v1503 = vrot.slane %v1406, 1
      %v1504 = vsel %vm1476, %v1498, %v1503
      %v1505 = vrot.slane %v1407, 1
      %v1506 = vsel %vm1476, %v1501, %v1505
      %v1507 = vrot.slane %v1408, 1
      %v1508 = vrot.slane %v1378, 1
      %v1509 = vsel %vm1476, %v1507, %v1508
      %v1510 = vrot.slane %v1409, 1
      %v1511 = vrot.slane %v1379, 1
      %v1512 = vsel %vm1476, %v1510, %v1511
      %v1513 = vrot.slane %v1410, 1
      %v1514 = vsel %vm1476, %v1508, %v1513
      %v1515 = vrot.slane %v1411, 1
      %v1516 = vsel %vm1476, %v1511, %v1515
      %v1517 = vrot.slane %v1412, 1
      %v1518 = vrot.slane %v1382, 1
      %v1519 = vsel %vm1476, %v1517, %v1518
      %v1520 = vrot.slane %v1413, 1
      %v1521 = vrot.slane %v1383, 1
      %v1522 = vsel %vm1476, %v1520, %v1521
      %v1523 = vrot.slane %v1414, 1
      %v1524 = vsel %vm1476, %v1518, %v1523
      %v1525 = vrot.slane %v1415, 1
      %v1526 = vsel %vm1476, %v1521, %v1525
      %v1527 = vrot.slane %v1416, 1
      %v1528 = vrot.slane %v1386, 1
      %v1529 = vsel %vm1476, %v1527, %v1528
      %v1530 = vrot.slane %v1417, 1
      %v1531 = vrot.slane %v1387, 1
      %v1532 = vsel %vm1476, %v1530, %v1531
      %v1533 = vrot.slane %v1418, 1
      %v1534 = vsel %vm1476, %v1528, %v1533
      %v1535 = vrot.slane %v1419, 1
      %v1536 = vsel %vm1476, %v1531, %v1535
      %v1537 = vrot.slane %v1420, 1
      %v1538 = vrot.slane %v1390, 1
      %v1539 = vsel %vm1476, %v1537, %v1538
      %v1540 = vrot.slane %v1421, 1
      %v1541 = vrot.slane %v1391, 1
      %v1542 = vsel %vm1476, %v1540, %v1541
      %v1543 = vrot.slane %v1422, 1
      %v1544 = vsel %vm1476, %v1538, %v1543
      %v1545 = vrot.slane %v1423, 1
      %v1546 = vsel %vm1476, %v1541, %v1545
      %v1547 = vrot.slane %v1424, 1
      %v1548 = vrot.slane %v1394, 1
      %v1549 = vsel %vm1476, %v1547, %v1548
      %v1550 = vrot.slane %v1425, 1
      %v1551 = vrot.slane %v1395, 1
      %v1552 = vsel %vm1476, %v1550, %v1551
      %v1553 = vrot.slane %v1426, 1
      %v1554 = vsel %vm1476, %v1548, %v1553
      %v1555 = vrot.slane %v1427, 1
      %v1556 = vsel %vm1476, %v1551, %v1555
      %v1589 = vmax.f32 %v1364, %v1479
      %v1590 = vmax.f32 %v1365, %v1482
      %v1591 = vmax.f32 %v1366, %v1484
      %v1592 = vmax.f32 %v1367, %v1486
      %v1593 = vmax.f32 %v1368, %v1489
      %v1594 = vmax.f32 %v1369, %v1492
      %v1595 = vmax.f32 %v1370, %v1494
      %v1596 = vmax.f32 %v1371, %v1496
      %v1597 = vmax.f32 %v1372, %v1499
      %v1598 = vmax.f32 %v1373, %v1502
      %v1599 = vmax.f32 %v1374, %v1504
      %v1600 = vmax.f32 %v1375, %v1506
      %v1601 = vmax.f32 %v1376, %v1509
      %v1602 = vmax.f32 %v1377, %v1512
      %v1603 = vmax.f32 %v1378, %v1514
      %v1604 = vmax.f32 %v1379, %v1516
      %v1605 = vmax.f32 %v1380, %v1519
      %v1606 = vmax.f32 %v1381, %v1522
      %v1607 = vmax.f32 %v1382, %v1524
      %v1608 = vmax.f32 %v1383, %v1526
      %v1609 = vmax.f32 %v1384, %v1529
      %v1610 = vmax.f32 %v1385, %v1532
      %v1611 = vmax.f32 %v1386, %v1534
      %v1612 = vmax.f32 %v1387, %v1536
      %v1613 = vmax.f32 %v1388, %v1539
      %v1614 = vmax.f32 %v1389, %v1542
      %v1615 = vmax.f32 %v1390, %v1544
      %v1616 = vmax.f32 %v1391, %v1546
      %v1617 = vmax.f32 %v1392, %v1549
      %v1618 = vmax.f32 %v1393, %v1552
      %v1619 = vmax.f32 %v1394, %v1554
      %v1620 = vmax.f32 %v1395, %v1556
      %v1621 = vld [vmem:[#allocation3] sm:$0xfc]
      %v1622 = vld [vmem:[#allocation3 + $0x8] sm:$0xfc]
      %v1623 = vld [vmem:[#allocation3 + $0x20] sm:$0x3]
      %v1624 = vld [vmem:[#allocation3 + $0x28] sm:$0x3]
      %v1625 = vld [vmem:[#allocation3 + $0x30] sm:$0xfc]
      %v1626 = vld [vmem:[#allocation3 + $0x38] sm:$0xfc]
      %v1627 = vld [vmem:[#allocation3 + $0x50] sm:$0x3]
      %v1628 = vld [vmem:[#allocation3 + $0x58] sm:$0x3]
      %v1629 = vld [vmem:[#allocation3 + $0x60] sm:$0xfc]
      %v1630 = vld [vmem:[#allocation3 + $0x68] sm:$0xfc]
      %v1631 = vld [vmem:[#allocation3 + $0x80] sm:$0x3]
      %v1632 = vld [vmem:[#allocation3 + $0x88] sm:$0x3]
      %v1633 = vld [vmem:[#allocation3 + $0x90] sm:$0xfc]
      %v1634 = vld [vmem:[#allocation3 + $0x98] sm:$0xfc]
      %v1635 = vld [vmem:[#allocation3 + $0xb0] sm:$0x3]
      %v1636 = vld [vmem:[#allocation3 + $0xb8] sm:$0x3]
      %v1637 = vld [vmem:[#allocation3 + $0xc0] sm:$0xfc]
      %v1638 = vld [vmem:[#allocation3 + $0xc8] sm:$0xfc]
      %v1639 = vld [vmem:[#allocation3 + $0xe0] sm:$0x3]
      %v1640 = vld [vmem:[#allocation3 + $0xe8] sm:$0x3]
      %v1641 = vld [vmem:[#allocation3 + $0xf0] sm:$0xfc]
      %v1642 = vld [vmem:[#allocation3 + $0xf8] sm:$0xfc]
      %v1643 = vld [vmem:[#allocation3 + $0x110] sm:$0x3]
      %v1644 = vld [vmem:[#allocation3 + $0x118] sm:$0x3]
      %v1645 = vld [vmem:[#allocation3 + $0x120] sm:$0xfc]
      %v1646 = vld [vmem:[#allocation3 + $0x128] sm:$0xfc]
      %v1647 = vld [vmem:[#allocation3 + $0x140] sm:$0x3]
      %v1648 = vld [vmem:[#allocation3 + $0x148] sm:$0x3]
      %v1649 = vld [vmem:[#allocation3 + $0x150] sm:$0xfc]
      %v1650 = vld [vmem:[#allocation3 + $0x158] sm:$0xfc]
      %v1651 = vld [vmem:[#allocation3 + $0x170] sm:$0x3]
      %v1652 = vld [vmem:[#allocation3 + $0x178] sm:$0x3]
      %vm1685 = vcmask 1045504
      %v1686 = vrot.slane %v1621, 2
      %v1687 = vrot.slane %v1366, 2
      %v1688 = vsel %vm1685, %v1686, %v1687
      %v1689 = vrot.slane %v1622, 2
      %v1690 = vrot.slane %v1367, 2
      %v1691 = vsel %vm1685, %v1689, %v1690
      %v1692 = vrot.slane %v1623, 2
      %v1693 = vsel %vm1685, %v1687, %v1692
      %v1694 = vrot.slane %v1624, 2
      %v1695 = vsel %vm1685, %v1690, %v1694
      %v1696 = vrot.slane %v1625, 2
      %v1697 = vrot.slane %v1370, 2
      %v1698 = vsel %vm1685, %v1696, %v1697
      %v1699 = vrot.slane %v1626, 2
      %v1700 = vrot.slane %v1371, 2
      %v1701 = vsel %vm1685, %v1699, %v1700
      %v1702 = vrot.slane %v1627, 2
      %v1703 = vsel %vm1685, %v1697, %v1702
      %v1704 = vrot.slane %v1628, 2
      %v1705 = vsel %vm1685, %v1700, %v1704
      %v1706 = vrot.slane %v1629, 2
      %v1707 = vrot.slane %v1374, 2
      %v1708 = vsel %vm1685, %v1706, %v1707
      %v1709 = vrot.slane %v1630, 2
      %v1710 = vrot.slane %v1375, 2
      %v1711 = vsel %vm1685, %v1709, %v1710
      %v1712 = vrot.slane %v1631, 2
      %v1713 = vsel %vm1685, %v1707, %v1712
      %v1714 = vrot.slane %v1632, 2
      %v1715 = vsel %vm1685, %v1710, %v1714
      %v1716 = vrot.slane %v1633, 2
      %v1717 = vrot.slane %v1378, 2
      %v1718 = vsel %vm1685, %v1716, %v1717
      %v1719 = vrot.slane %v1634, 2
      %v1720 = vrot.slane %v1379, 2
      %v1721 = vsel %vm1685, %v1719, %v1720
      %v1722 = vrot.slane %v1635, 2
      %v1723 = vsel %vm1685, %v1717, %v1722
      %v1724 = vrot.slane %v1636, 2
      %v1725 = vsel %vm1685, %v1720, %v1724
      %v1726 = vrot.slane %v1637, 2
      %v1727 = vrot.slane %v1382, 2
      %v1728 = vsel %vm1685, %v1726, %v1727
      %v1729 = vrot.slane %v1638, 2
      %v1730 = vrot.slane %v1383, 2
      %v1731 = vsel %vm1685, %v1729, %v1730
      %v1732 = vrot.slane %v1639, 2
      %v1733 = vsel %vm1685, %v1727, %v1732
      %v1734 = vrot.slane %v1640, 2
      %v1735 = vsel %vm1685, %v1730, %v1734
      %v1736 = vrot.slane %v1641, 2
      %v1737 = vrot.slane %v1386, 2
      %v1738 = vsel %vm1685, %v1736, %v1737
      %v1739 = vrot.slane %v1642, 2
      %v1740 = vrot.slane %v1387, 2
      %v1741 = vsel %vm1685, %v1739, %v1740
      %v1742 = vrot.slane %v1643, 2
      %v1743 = vsel %vm1685, %v1737, %v1742
      %v1744 = vrot.slane %v1644, 2
      %v1745 = vsel %vm1685, %v1740, %v1744
      %v1746 = vrot.slane %v1645, 2
      %v1747 = vrot.slane %v1390, 2
      %v1748 = vsel %vm1685, %v1746, %v1747
      %v1749 = vrot.slane %v1646, 2
      %v1750 = vrot.slane %v1391, 2
      %v1751 = vsel %vm1685, %v1749, %v1750
      %v1752 = vrot.slane %v1647, 2
      %v1753 = vsel %vm1685, %v1747, %v1752
      %v1754 = vrot.slane %v1648, 2
      %v1755 = vsel %vm1685, %v1750, %v1754
      %v1756 = vrot.slane %v1649, 2
      %v1757 = vrot.slane %v1394, 2
      %v1758 = vsel %vm1685, %v1756, %v1757
      %v1759 = vrot.slane %v1650, 2
      %v1760 = vrot.slane %v1395, 2
      %v1761 = vsel %vm1685, %v1759, %v1760
      %v1762 = vrot.slane %v1651, 2
      %v1763 = vsel %vm1685, %v1757, %v1762
      %v1764 = vrot.slane %v1652, 2
      %v1765 = vsel %vm1685, %v1760, %v1764
      %v1798 = vmax.f32 %v1589, %v1688
      %v1799 = vmax.f32 %v1590, %v1691
      %v1800 = vmax.f32 %v1591, %v1693
      %v1801 = vmax.f32 %v1592, %v1695
      %v1802 = vmax.f32 %v1593, %v1698
      %v1803 = vmax.f32 %v1594, %v1701
      %v1804 = vmax.f32 %v1595, %v1703
      %v1805 = vmax.f32 %v1596, %v1705
      %v1806 = vmax.f32 %v1597, %v1708
      %v1807 = vmax.f32 %v1598, %v1711
      %v1808 = vmax.f32 %v1599, %v1713
      %v1809 = vmax.f32 %v1600, %v1715
      %v1810 = vmax.f32 %v1601, %v1718
      %v1811 = vmax.f32 %v1602, %v1721
      %v1812 = vmax.f32 %v1603, %v1723
      %v1813 = vmax.f32 %v1604, %v1725
      %v1814 = vmax.f32 %v1605, %v1728
      %v1815 = vmax.f32 %v1606, %v1731
      %v1816 = vmax.f32 %v1607, %v1733
      %v1817 = vmax.f32 %v1608, %v1735
      %v1818 = vmax.f32 %v1609, %v1738
      %v1819 = vmax.f32 %v1610, %v1741
      %v1820 = vmax.f32 %v1611, %v1743
      %v1821 = vmax.f32 %v1612, %v1745
      %v1822 = vmax.f32 %v1613, %v1748
      %v1823 = vmax.f32 %v1614, %v1751
      %v1824 = vmax.f32 %v1615, %v1753
      %v1825 = vmax.f32 %v1616, %v1755
      %v1826 = vmax.f32 %v1617, %v1758
      %v1827 = vmax.f32 %v1618, %v1761
      %v1828 = vmax.f32 %v1619, %v1763
      %v1829 = vmax.f32 %v1620, %v1765
      %1862 = vrot.lane.b32.xlu0 %v1798, 120
      %v1863 = vpop.permute.xlu0 %1862
      %1864 = vrot.lane.b32.xlu0 %v1799, 120
      %v1865 = vpop.permute.xlu0 %1864
      %1866 = vrot.lane.b32.xlu0 %v1800, 120
      %v1867 = vpop.permute.xlu0 %1866
      %1868 = vrot.lane.b32.xlu0 %v1801, 120
      %v1869 = vpop.permute.xlu0 %1868
      %1870 = vrot.lane.b32.xlu0 %v1802, 120
      %v1871 = vpop.permute.xlu0 %1870
      %1872 = vrot.lane.b32.xlu0 %v1803, 120
      %v1873 = vpop.permute.xlu0 %1872
      %1874 = vrot.lane.b32.xlu0 %v1804, 120
      %v1875 = vpop.permute.xlu0 %1874
      %1876 = vrot.lane.b32.xlu0 %v1805, 120
      %v1877 = vpop.permute.xlu0 %1876
      %1878 = vrot.lane.b32.xlu0 %v1806, 120
      %v1879 = vpop.permute.xlu0 %1878
      %1880 = vrot.lane.b32.xlu0 %v1807, 120
      %v1881 = vpop.permute.xlu0 %1880
      %1882 = vrot.lane.b32.xlu0 %v1808, 120
      %v1883 = vpop.permute.xlu0 %1882
      %1884 = vrot.lane.b32.xlu0 %v1809, 120
      %v1885 = vpop.permute.xlu0 %1884
      %1886 = vrot.lane.b32.xlu0 %v1810, 120
      %v1887 = vpop.permute.xlu0 %1886
      %1888 = vrot.lane.b32.xlu0 %v1811, 120
      %v1889 = vpop.permute.xlu0 %1888
      %1890 = vrot.lane.b32.xlu0 %v1812, 120
      %v1891 = vpop.permute.xlu0 %1890
      %1892 = vrot.lane.b32.xlu0 %v1813, 120
      %v1893 = vpop.permute.xlu0 %1892
      %1894 = vrot.lane.b32.xlu0 %v1814, 120
      %v1895 = vpop.permute.xlu0 %1894
      %1896 = vrot.lane.b32.xlu0 %v1815, 120
      %v1897 = vpop.permute.xlu0 %1896
      %1898 = vrot.lane.b32.xlu0 %v1816, 120
      %v1899 = vpop.permute.xlu0 %1898
      %1900 = vrot.lane.b32.xlu0 %v1817, 120
      %v1901 = vpop.permute.xlu0 %1900
      %1902 = vrot.lane.b32.xlu0 %v1818, 120
      %v1903 = vpop.permute.xlu0 %1902
      %1904 = vrot.lane.b32.xlu0 %v1819, 120
      %v1905 = vpop.permute.xlu0 %1904
      %1906 = vrot.lane.b32.xlu0 %v1820, 120
      %v1907 = vpop.permute.xlu0 %1906
      %1908 = vrot.lane.b32.xlu0 %v1821, 120
      %v1909 = vpop.permute.xlu0 %1908
      %1910 = vrot.lane.b32.xlu0 %v1822, 120
      %v1911 = vpop.permute.xlu0 %1910
      %1912 = vrot.lane.b32.xlu0 %v1823, 120
      %v1913 = vpop.permute.xlu0 %1912
      %1914 = vrot.lane.b32.xlu0 %v1824, 120
      %v1915 = vpop.permute.xlu0 %1914
      %1916 = vrot.lane.b32.xlu0 %v1825, 120
      %v1917 = vpop.permute.xlu0 %1916
      %1918 = vrot.lane.b32.xlu0 %v1826, 120
      %v1919 = vpop.permute.xlu0 %1918
      %1920 = vrot.lane.b32.xlu0 %v1827, 120
      %v1921 = vpop.permute.xlu0 %1920
      %1922 = vrot.lane.b32.xlu0 %v1828, 120
      %v1923 = vpop.permute.xlu0 %1922
      %1924 = vrot.lane.b32.xlu0 %v1829, 120
      %v1925 = vpop.permute.xlu0 %1924
      %vm1926 = vcmask 982016
      %v1927 = vsel %vm1926, %v1863, %v1865
      %v1928 = vsel %vm1926, %v1867, %v1869
      %v1929 = vsel %vm1926, %v1871, %v1873
      %v1930 = vsel %vm1926, %v1875, %v1877
      %v1931 = vsel %vm1926, %v1879, %v1881
      %v1932 = vsel %vm1926, %v1883, %v1885
      %v1933 = vsel %vm1926, %v1887, %v1889
      %v1934 = vsel %vm1926, %v1891, %v1893
      %v1935 = vsel %vm1926, %v1895, %v1897
      %v1936 = vsel %vm1926, %v1899, %v1901
      %v1937 = vsel %vm1926, %v1903, %v1905
      %v1938 = vsel %vm1926, %v1907, %v1909
      %v1939 = vsel %vm1926, %v1911, %v1913
      %v1940 = vsel %vm1926, %v1915, %v1917
      %v1941 = vsel %vm1926, %v1919, %v1921
      %v1942 = vsel %vm1926, %v1923, %v1925
      %v1959 = vmax.f32 %v1798, %v1927
      %v1960 = vmax.f32 %v1800, %v1928
      %v1961 = vmax.f32 %v1802, %v1929
      %v1962 = vmax.f32 %v1804, %v1930
      %v1963 = vmax.f32 %v1806, %v1931
      %v1964 = vmax.f32 %v1808, %v1932
      %v1965 = vmax.f32 %v1810, %v1933
      %v1966 = vmax.f32 %v1812, %v1934
      %v1967 = vmax.f32 %v1814, %v1935
      %v1968 = vmax.f32 %v1816, %v1936
      %v1969 = vmax.f32 %v1818, %v1937
      %v1970 = vmax.f32 %v1820, %v1938
      %v1971 = vmax.f32 %v1822, %v1939
      %v1972 = vmax.f32 %v1824, %v1940
      %v1973 = vmax.f32 %v1826, %v1941
      %v1974 = vmax.f32 %v1828, %v1942
      %1975 = vrot.lane.b32.xlu0 %v1798, 112
      %v1976 = vpop.permute.xlu0 %1975
      %1977 = vrot.lane.b32.xlu0 %v1799, 112
      %v1978 = vpop.permute.xlu0 %1977
      %1979 = vrot.lane.b32.xlu0 %v1800, 112
      %v1980 = vpop.permute.xlu0 %1979
      %1981 = vrot.lane.b32.xlu0 %v1801, 112
      %v1982 = vpop.permute.xlu0 %1981
      %1983 = vrot.lane.b32.xlu0 %v1802, 112
      %v1984 = vpop.permute.xlu0 %1983
      %1985 = vrot.lane.b32.xlu0 %v1803, 112
      %v1986 = vpop.permute.xlu0 %1985
      %1987 = vrot.lane.b32.xlu0 %v1804, 112
      %v1988 = vpop.permute.xlu0 %1987
      %1989 = vrot.lane.b32.xlu0 %v1805, 112
      %v1990 = vpop.permute.xlu0 %1989
      %1991 = vrot.lane.b32.xlu0 %v1806, 112
      %v1992 = vpop.permute.xlu0 %1991
      %1993 = vrot.lane.b32.xlu0 %v1807, 112
      %v1994 = vpop.permute.xlu0 %1993
      %1995 = vrot.lane.b32.xlu0 %v1808, 112
      %v1996 = vpop.permute.xlu0 %1995
      %1997 = vrot.lane.b32.xlu0 %v1809, 112
      %v1998 = vpop.permute.xlu0 %1997
      %1999 = vrot.lane.b32.xlu0 %v1810, 112
      %v2000 = vpop.permute.xlu0 %1999
      %2001 = vrot.lane.b32.xlu0 %v1811, 112
      %v2002 = vpop.permute.xlu0 %2001
      %2003 = vrot.lane.b32.xlu0 %v1812, 112
      %v2004 = vpop.permute.xlu0 %2003
      %2005 = vrot.lane.b32.xlu0 %v1813, 112
      %v2006 = vpop.permute.xlu0 %2005
      %2007 = vrot.lane.b32.xlu0 %v1814, 112
      %v2008 = vpop.permute.xlu0 %2007
      %2009 = vrot.lane.b32.xlu0 %v1815, 112
      %v2010 = vpop.permute.xlu0 %2009
      %2011 = vrot.lane.b32.xlu0 %v1816, 112
      %v2012 = vpop.permute.xlu0 %2011
      %2013 = vrot.lane.b32.xlu0 %v1817, 112
      %v2014 = vpop.permute.xlu0 %2013
      %2015 = vrot.lane.b32.xlu0 %v1818, 112
      %v2016 = vpop.permute.xlu0 %2015
      %2017 = vrot.lane.b32.xlu0 %v1819, 112
      %v2018 = vpop.permute.xlu0 %2017
      %2019 = vrot.lane.b32.xlu0 %v1820, 112
      %v2020 = vpop.permute.xlu0 %2019
      %2021 = vrot.lane.b32.xlu0 %v1821, 112
      %v2022 = vpop.permute.xlu0 %2021
      %2023 = vrot.lane.b32.xlu0 %v1822, 112
      %v2024 = vpop.permute.xlu0 %2023
      %2025 = vrot.lane.b32.xlu0 %v1823, 112
      %v2026 = vpop.permute.xlu0 %2025
      %2027 = vrot.lane.b32.xlu0 %v1824, 112
      %v2028 = vpop.permute.xlu0 %2027
      %2029 = vrot.lane.b32.xlu0 %v1825, 112
      %v2030 = vpop.permute.xlu0 %2029
      %2031 = vrot.lane.b32.xlu0 %v1826, 112
      %v2032 = vpop.permute.xlu0 %2031
      %2033 = vrot.lane.b32.xlu0 %v1827, 112
      %v2034 = vpop.permute.xlu0 %2033
      %2035 = vrot.lane.b32.xlu0 %v1828, 112
      %v2036 = vpop.permute.xlu0 %2035
      %2037 = vrot.lane.b32.xlu0 %v1829, 112
      %v2038 = vpop.permute.xlu0 %2037
      %vm2039 = vcmask 916480
      %v2040 = vsel %vm2039, %v1976, %v1978
      %v2041 = vsel %vm2039, %v1980, %v1982
      %v2042 = vsel %vm2039, %v1984, %v1986
      %v2043 = vsel %vm2039, %v1988, %v1990
      %v2044 = vsel %vm2039, %v1992, %v1994
      %v2045 = vsel %vm2039, %v1996, %v1998
      %v2046 = vsel %vm2039, %v2000, %v2002
      %v2047 = vsel %vm2039, %v2004, %v2006
      %v2048 = vsel %vm2039, %v2008, %v2010
      %v2049 = vsel %vm2039, %v2012, %v2014
      %v2050 = vsel %vm2039, %v2016, %v2018
      %v2051 = vsel %vm2039, %v2020, %v2022
      %v2052 = vsel %vm2039, %v2024, %v2026
      %v2053 = vsel %vm2039, %v2028, %v2030
      %v2054 = vsel %vm2039, %v2032, %v2034
      %v2055 = vsel %vm2039, %v2036, %v2038
      %v2072 = vmax.f32 %v1959, %v2040
      %v2073 = vmax.f32 %v1960, %v2041
      %v2074 = vmax.f32 %v1961, %v2042
      %v2075 = vmax.f32 %v1962, %v2043
      %v2076 = vmax.f32 %v1963, %v2044
      %v2077 = vmax.f32 %v1964, %v2045
      %v2078 = vmax.f32 %v1965, %v2046
      %v2079 = vmax.f32 %v1966, %v2047
      %v2080 = vmax.f32 %v1967, %v2048
      %v2081 = vmax.f32 %v1968, %v2049
      %v2082 = vmax.f32 %v1969, %v2050
      %v2083 = vmax.f32 %v1970, %v2051
      %v2084 = vmax.f32 %v1971, %v2052
      %v2085 = vmax.f32 %v1972, %v2053
      %v2086 = vmax.f32 %v1973, %v2054
      %v2087 = vmax.f32 %v1974, %v2055
      %2088 = vst.msk [vmem:[#allocation4] ss:$8 sm:$0x3] %vm1101, 0.0
      %2089 = vst.msk [vmem:[#allocation4] ss:$8 sm:$0x0] %vm1101, 0.0
      %s2090 = scalar_lea.vmem [#allocation4], 48
      %2091 = vst.msk [vmem:[%s2090] ss:$8 sm:$0x3] %vm1101, 0.0
      %2092 = vst.msk [vmem:[%s2090] ss:$8 sm:$0x0] %vm1101, 0.0
      %s2093 = scalar_lea.vmem [#allocation4], 96
      %2094 = vst.msk [vmem:[%s2093] ss:$8 sm:$0x3] %vm1101, 0.0
      %2095 = vst.msk [vmem:[%s2093] ss:$8 sm:$0x0] %vm1101, 0.0
      %s2096 = scalar_lea.vmem [#allocation4], 144
      %2097 = vst.msk [vmem:[%s2096] ss:$8 sm:$0x3] %vm1101, 0.0
      %2098 = vst.msk [vmem:[%s2096] ss:$8 sm:$0x0] %vm1101, 0.0
      %s2099 = scalar_lea.vmem [#allocation4], 192
      %2100 = vst.msk [vmem:[%s2099] ss:$8 sm:$0x3] %vm1101, 0.0
      %2101 = vst.msk [vmem:[%s2099] ss:$8 sm:$0x0] %vm1101, 0.0
      %s2102 = scalar_lea.vmem [#allocation4], 240
      %2103 = vst.msk [vmem:[%s2102] ss:$8 sm:$0x3] %vm1101, 0.0
      %2104 = vst.msk [vmem:[%s2102] ss:$8 sm:$0x0] %vm1101, 0.0
      %s2105 = scalar_lea.vmem [#allocation4], 288
      %2106 = vst.msk [vmem:[%s2105] ss:$8 sm:$0x3] %vm1101, 0.0
      %2107 = vst.msk [vmem:[%s2105] ss:$8 sm:$0x0] %vm1101, 0.0
      %s2108 = scalar_lea.vmem [#allocation4], 336
      %2109 = vst.msk [vmem:[%s2108] ss:$8 sm:$0x3] %vm1101, 0.0
      %2110 = vst.msk [vmem:[%s2108] ss:$8 sm:$0x0] %vm1101, 0.0
      %s2111 = scalar_lea.vmem [#allocation4], 33
      %2112 = vst.msk [vmem:[%s2111] ss:$8 sm:$0x3] %vm1101, 0.0
      %2113 = vst.msk [vmem:[%s2111] ss:$8 sm:$0x0] %vm1101, 0.0
      %s2114 = scalar_lea.vmem [#allocation4], 81
      %2115 = vst.msk [vmem:[%s2114] ss:$8 sm:$0x3] %vm1101, 0.0
      %2116 = vst.msk [vmem:[%s2114] ss:$8 sm:$0x0] %vm1101, 0.0
      %s2117 = scalar_lea.vmem [#allocation4], 129
      %2118 = vst.msk [vmem:[%s2117] ss:$8 sm:$0x3] %vm1101, 0.0
      %2119 = vst.msk [vmem:[%s2117] ss:$8 sm:$0x0] %vm1101, 0.0
      %s2120 = scalar_lea.vmem [#allocation4], 177
      %2121 = vst.msk [vmem:[%s2120] ss:$8 sm:$0x3] %vm1101, 0.0
      %2122 = vst.msk [vmem:[%s2120] ss:$8 sm:$0x0] %vm1101, 0.0
      %s2123 = scalar_lea.vmem [#allocation4], 225
      %2124 = vst.msk [vmem:[%s2123] ss:$8 sm:$0x3] %vm1101, 0.0
      %2125 = vst.msk [vmem:[%s2123] ss:$8 sm:$0x0] %vm1101, 0.0
      %s2126 = scalar_lea.vmem [#allocation4], 273
      %2127 = vst.msk [vmem:[%s2126] ss:$8 sm:$0x3] %vm1101, 0.0
      %2128 = vst.msk [vmem:[%s2126] ss:$8 sm:$0x0] %vm1101, 0.0
      %s2129 = scalar_lea.vmem [#allocation4], 321
      %2130 = vst.msk [vmem:[%s2129] ss:$8 sm:$0x3] %vm1101, 0.0
      %2131 = vst.msk [vmem:[%s2129] ss:$8 sm:$0x0] %vm1101, 0.0
      %s2132 = scalar_lea.vmem [#allocation4], 369
      %2133 = vst.msk [vmem:[%s2132] ss:$8 sm:$0x3] %vm1101, 0.0
      %2134 = vst.msk [vmem:[%s2132] ss:$8 sm:$0x0] %vm1101, 0.0
      %2135 = vst.msk [vmem:[#allocation4] sm:$0xfe] %vm1149, 0.0
      %2136 = vst.msk [vmem:[#allocation4 + $0x10] sm:$0xff] %vm1151, 0.0
      %2137 = vst.msk [vmem:[#allocation4 + $0x20] sm:$0x1] %vm1153, 0.0
      %2138 = vst.msk [vmem:[#allocation4 + $0x30] sm:$0xfe] %vm1149, 0.0
      %2139 = vst.msk [vmem:[#allocation4 + $0x40] sm:$0xff] %vm1151, 0.0
      %2140 = vst.msk [vmem:[#allocation4 + $0x50] sm:$0x1] %vm1153, 0.0
      %2141 = vst.msk [vmem:[#allocation4 + $0x60] sm:$0xfe] %vm1149, 0.0
      %2142 = vst.msk [vmem:[#allocation4 + $0x70] sm:$0xff] %vm1151, 0.0
      %2143 = vst.msk [vmem:[#allocation4 + $0x80] sm:$0x1] %vm1153, 0.0
      %2144 = vst.msk [vmem:[#allocation4 + $0x90] sm:$0xfe] %vm1149, 0.0
      %2145 = vst.msk [vmem:[#allocation4 + $0xa0] sm:$0xff] %vm1151, 0.0
      %2146 = vst.msk [vmem:[#allocation4 + $0xb0] sm:$0x1] %vm1153, 0.0
      %2147 = vst.msk [vmem:[#allocation4 + $0xc0] sm:$0xfe] %vm1149, 0.0
      %2148 = vst.msk [vmem:[#allocation4 + $0xd0] sm:$0xff] %vm1151, 0.0
      %2149 = vst.msk [vmem:[#allocation4 + $0xe0] sm:$0x1] %vm1153, 0.0
      %2150 = vst.msk [vmem:[#allocation4 + $0xf0] sm:$0xfe] %vm1149, 0.0
      %2151 = vst.msk [vmem:[#allocation4 + $0x100] sm:$0xff] %vm1151, 0.0
      %2152 = vst.msk [vmem:[#allocation4 + $0x110] sm:$0x1] %vm1153, 0.0
      %2153 = vst.msk [vmem:[#allocation4 + $0x120] sm:$0xfe] %vm1149, 0.0
      %2154 = vst.msk [vmem:[#allocation4 + $0x130] sm:$0xff] %vm1151, 0.0
      %2155 = vst.msk [vmem:[#allocation4 + $0x140] sm:$0x1] %vm1153, 0.0
      %2156 = vst.msk [vmem:[#allocation4 + $0x150] sm:$0xfe] %vm1149, 0.0
      %2157 = vst.msk [vmem:[#allocation4 + $0x160] sm:$0xff] %vm1151, 0.0
      %2158 = vst.msk [vmem:[#allocation4 + $0x170] sm:$0x1] %vm1153, 0.0
      %2159 = vst.msk [vmem:[#allocation4 + $0x8] sm:$0xfe] %vm1176, 0.0
      %2160 = vst.msk [vmem:[#allocation4 + $0x18] sm:$0xff] %vm1178, 0.0
      %2161 = vst.msk [vmem:[#allocation4 + $0x28] sm:$0x1] %vm1180, 0.0
      %2162 = vst.msk [vmem:[#allocation4 + $0x38] sm:$0xfe] %vm1176, 0.0
      %2163 = vst.msk [vmem:[#allocation4 + $0x48] sm:$0xff] %vm1178, 0.0
      %2164 = vst.msk [vmem:[#allocation4 + $0x58] sm:$0x1] %vm1180, 0.0
      %2165 = vst.msk [vmem:[#allocation4 + $0x68] sm:$0xfe] %vm1176, 0.0
      %2166 = vst.msk [vmem:[#allocation4 + $0x78] sm:$0xff] %vm1178, 0.0
      %2167 = vst.msk [vmem:[#allocation4 + $0x88] sm:$0x1] %vm1180, 0.0
      %2168 = vst.msk [vmem:[#allocation4 + $0x98] sm:$0xfe] %vm1176, 0.0
      %2169 = vst.msk [vmem:[#allocation4 + $0xa8] sm:$0xff] %vm1178, 0.0
      %2170 = vst.msk [vmem:[#allocation4 + $0xb8] sm:$0x1] %vm1180, 0.0
      %2171 = vst.msk [vmem:[#allocation4 + $0xc8] sm:$0xfe] %vm1176, 0.0
      %2172 = vst.msk [vmem:[#allocation4 + $0xd8] sm:$0xff] %vm1178, 0.0
      %2173 = vst.msk [vmem:[#allocation4 + $0xe8] sm:$0x1] %vm1180, 0.0
      %2174 = vst.msk [vmem:[#allocation4 + $0xf8] sm:$0xfe] %vm1176, 0.0
      %2175 = vst.msk [vmem:[#allocation4 + $0x108] sm:$0xff] %vm1178, 0.0
      %2176 = vst.msk [vmem:[#allocation4 + $0x118] sm:$0x1] %vm1180, 0.0
      %2177 = vst.msk [vmem:[#allocation4 + $0x128] sm:$0xfe] %vm1176, 0.0
      %2178 = vst.msk [vmem:[#allocation4 + $0x138] sm:$0xff] %vm1178, 0.0
      %2179 = vst.msk [vmem:[#allocation4 + $0x148] sm:$0x1] %vm1180, 0.0
      %2180 = vst.msk [vmem:[#allocation4 + $0x158] sm:$0xfe] %vm1176, 0.0
      %2181 = vst.msk [vmem:[#allocation4 + $0x168] sm:$0xff] %vm1178, 0.0
      %2182 = vst.msk [vmem:[#allocation4 + $0x178] sm:$0x1] %vm1180, 0.0
      %v2199 = vrot.slane %v2072, 7
      %v2200 = vrot.slane %v2073, 7
      %v2201 = vsel %vm1219, %v2199, %v2200
      %v2202 = vrot.slane %v2074, 7
      %v2203 = vrot.slane %v2075, 7
      %v2204 = vsel %vm1219, %v2202, %v2203
      %v2205 = vrot.slane %v2076, 7
      %v2206 = vrot.slane %v2077, 7
      %v2207 = vsel %vm1219, %v2205, %v2206
      %v2208 = vrot.slane %v2078, 7
      %v2209 = vrot.slane %v2079, 7
      %v2210 = vsel %vm1219, %v2208, %v2209
      %v2211 = vrot.slane %v2080, 7
      %v2212 = vrot.slane %v2081, 7
      %v2213 = vsel %vm1219, %v2211, %v2212
      %v2214 = vrot.slane %v2082, 7
      %v2215 = vrot.slane %v2083, 7
      %v2216 = vsel %vm1219, %v2214, %v2215
      %v2217 = vrot.slane %v2084, 7
      %v2218 = vrot.slane %v2085, 7
      %v2219 = vsel %vm1219, %v2217, %v2218
      %v2220 = vrot.slane %v2086, 7
      %v2221 = vrot.slane %v2087, 7
      %v2222 = vsel %vm1219, %v2220, %v2221
      %2223 = vrot.lane.b32.xlu0 %v2199, 8
      %v2224 = vpop.permute.xlu0 %2223
      %2225 = vrot.lane.b32.xlu0 %v2201, 8
      %v2226 = vpop.permute.xlu0 %2225
      %2227 = vrot.lane.b32.xlu0 %v2200, 8
      %v2228 = vpop.permute.xlu0 %2227
      %2229 = vrot.lane.b32.xlu0 %v2202, 8
      %v2230 = vpop.permute.xlu0 %2229
      %2231 = vrot.lane.b32.xlu0 %v2204, 8
      %v2232 = vpop.permute.xlu0 %2231
      %2233 = vrot.lane.b32.xlu0 %v2203, 8
      %v2234 = vpop.permute.xlu0 %2233
      %2235 = vrot.lane.b32.xlu0 %v2205, 8
      %v2236 = vpop.permute.xlu0 %2235
      %2237 = vrot.lane.b32.xlu0 %v2207, 8
      %v2238 = vpop.permute.xlu0 %2237
      %2239 = vrot.lane.b32.xlu0 %v2206, 8
      %v2240 = vpop.permute.xlu0 %2239
      %2241 = vrot.lane.b32.xlu0 %v2208, 8
      %v2242 = vpop.permute.xlu0 %2241
      %2243 = vrot.lane.b32.xlu0 %v2210, 8
      %v2244 = vpop.permute.xlu0 %2243
      %2245 = vrot.lane.b32.xlu0 %v2209, 8
      %v2246 = vpop.permute.xlu0 %2245
      %2247 = vrot.lane.b32.xlu0 %v2211, 8
      %v2248 = vpop.permute.xlu0 %2247
      %2249 = vrot.lane.b32.xlu0 %v2213, 8
      %v2250 = vpop.permute.xlu0 %2249
      %2251 = vrot.lane.b32.xlu0 %v2212, 8
      %v2252 = vpop.permute.xlu0 %2251
      %2253 = vrot.lane.b32.xlu0 %v2214, 8
      %v2254 = vpop.permute.xlu0 %2253
      %2255 = vrot.lane.b32.xlu0 %v2216, 8
      %v2256 = vpop.permute.xlu0 %2255
      %2257 = vrot.lane.b32.xlu0 %v2215, 8
      %v2258 = vpop.permute.xlu0 %2257
      %2259 = vrot.lane.b32.xlu0 %v2217, 8
      %v2260 = vpop.permute.xlu0 %2259
      %2261 = vrot.lane.b32.xlu0 %v2219, 8
      %v2262 = vpop.permute.xlu0 %2261
      %2263 = vrot.lane.b32.xlu0 %v2218, 8
      %v2264 = vpop.permute.xlu0 %2263
      %2265 = vrot.lane.b32.xlu0 %v2220, 8
      %v2266 = vpop.permute.xlu0 %2265
      %2267 = vrot.lane.b32.xlu0 %v2222, 8
      %v2268 = vpop.permute.xlu0 %2267
      %2269 = vrot.lane.b32.xlu0 %v2221, 8
      %v2270 = vpop.permute.xlu0 %2269
      %2295 = vst.msk [vmem:[#allocation4] sm:$0xfe] %vm1176, %v2224
      %2296 = vst.msk [vmem:[#allocation4 + $0x8] sm:$0xfe] %vm1149, %v2224
      %2297 = vst.msk [vmem:[#allocation4 + $0x10] sm:$0xff] %vm1178, %v2226
      %2298 = vst.msk [vmem:[#allocation4 + $0x18] sm:$0xff] %vm1151, %v2226
      %2299 = vst.msk [vmem:[#allocation4 + $0x20] sm:$0x1] %vm1180, %v2228
      %2300 = vst.msk [vmem:[#allocation4 + $0x28] sm:$0x1] %vm1153, %v2228
      %2301 = vst.msk [vmem:[#allocation4 + $0x30] sm:$0xfe] %vm1176, %v2230
      %2302 = vst.msk [vmem:[#allocation4 + $0x38] sm:$0xfe] %vm1149, %v2230
      %2303 = vst.msk [vmem:[#allocation4 + $0x40] sm:$0xff] %vm1178, %v2232
      %2304 = vst.msk [vmem:[#allocation4 + $0x48] sm:$0xff] %vm1151, %v2232
      %2305 = vst.msk [vmem:[#allocation4 + $0x50] sm:$0x1] %vm1180, %v2234
      %2306 = vst.msk [vmem:[#allocation4 + $0x58] sm:$0x1] %vm1153, %v2234
      %2307 = vst.msk [vmem:[#allocation4 + $0x60] sm:$0xfe] %vm1176, %v2236
      %2308 = vst.msk [vmem:[#allocation4 + $0x68] sm:$0xfe] %vm1149, %v2236
      %2309 = vst.msk [vmem:[#allocation4 + $0x70] sm:$0xff] %vm1178, %v2238
      %2310 = vst.msk [vmem:[#allocation4 + $0x78] sm:$0xff] %vm1151, %v2238
      %2311 = vst.msk [vmem:[#allocation4 + $0x80] sm:$0x1] %vm1180, %v2240
      %2312 = vst.msk [vmem:[#allocation4 + $0x88] sm:$0x1] %vm1153, %v2240
      %2313 = vst.msk [vmem:[#allocation4 + $0x90] sm:$0xfe] %vm1176, %v2242
      %2314 = vst.msk [vmem:[#allocation4 + $0x98] sm:$0xfe] %vm1149, %v2242
      %2315 = vst.msk [vmem:[#allocation4 + $0xa0] sm:$0xff] %vm1178, %v2244
      %2316 = vst.msk [vmem:[#allocation4 + $0xa8] sm:$0xff] %vm1151, %v2244
      %2317 = vst.msk [vmem:[#allocation4 + $0xb0] sm:$0x1] %vm1180, %v2246
      %2318 = vst.msk [vmem:[#allocation4 + $0xb8] sm:$0x1] %vm1153, %v2246
      %2319 = vst.msk [vmem:[#allocation4 + $0xc0] sm:$0xfe] %vm1176, %v2248
      %2320 = vst.msk [vmem:[#allocation4 + $0xc8] sm:$0xfe] %vm1149, %v2248
      %2321 = vst.msk [vmem:[#allocation4 + $0xd0] sm:$0xff] %vm1178, %v2250
      %2322 = vst.msk [vmem:[#allocation4 + $0xd8] sm:$0xff] %vm1151, %v2250
      %2323 = vst.msk [vmem:[#allocation4 + $0xe0] sm:$0x1] %vm1180, %v2252
      %2324 = vst.msk [vmem:[#allocation4 + $0xe8] sm:$0x1] %vm1153, %v2252
      %2325 = vst.msk [vmem:[#allocation4 + $0xf0] sm:$0xfe] %vm1176, %v2254
      %2326 = vst.msk [vmem:[#allocation4 + $0xf8] sm:$0xfe] %vm1149, %v2254
      %2327 = vst.msk [vmem:[#allocation4 + $0x100] sm:$0xff] %vm1178, %v2256
      %2328 = vst.msk [vmem:[#allocation4 + $0x108] sm:$0xff] %vm1151, %v2256
      %2329 = vst.msk [vmem:[#allocation4 + $0x110] sm:$0x1] %vm1180, %v2258
      %2330 = vst.msk [vmem:[#allocation4 + $0x118] sm:$0x1] %vm1153, %v2258
      %2331 = vst.msk [vmem:[#allocation4 + $0x120] sm:$0xfe] %vm1176, %v2260
      %2332 = vst.msk [vmem:[#allocation4 + $0x128] sm:$0xfe] %vm1149, %v2260
      %2333 = vst.msk [vmem:[#allocation4 + $0x130] sm:$0xff] %vm1178, %v2262
      %2334 = vst.msk [vmem:[#allocation4 + $0x138] sm:$0xff] %vm1151, %v2262
      %2335 = vst.msk [vmem:[#allocation4 + $0x140] sm:$0x1] %vm1180, %v2264
      %2336 = vst.msk [vmem:[#allocation4 + $0x148] sm:$0x1] %vm1153, %v2264
      %2337 = vst.msk [vmem:[#allocation4 + $0x150] sm:$0xfe] %vm1176, %v2266
      %2338 = vst.msk [vmem:[#allocation4 + $0x158] sm:$0xfe] %vm1149, %v2266
      %2339 = vst.msk [vmem:[#allocation4 + $0x160] sm:$0xff] %vm1178, %v2268
      %2340 = vst.msk [vmem:[#allocation4 + $0x168] sm:$0xff] %vm1151, %v2268
      %2341 = vst.msk [vmem:[#allocation4 + $0x170] sm:$0x1] %vm1180, %v2270
      %2342 = vst.msk [vmem:[#allocation4 + $0x178] sm:$0x1] %vm1153, %v2270
      %v2343 = vld [vmem:[#allocation4] sm:$0xff]
      %v2344 = vld [vmem:[#allocation4 + $0x8] sm:$0xff]
      %v2345 = vld [vmem:[#allocation4 + $0x10] sm:$0xff]
      %v2346 = vld [vmem:[#allocation4 + $0x18] sm:$0xff]
      %v2347 = vld [vmem:[#allocation4 + $0x30] sm:$0xff]
      %v2348 = vld [vmem:[#allocation4 + $0x38] sm:$0xff]
      %v2349 = vld [vmem:[#allocation4 + $0x40] sm:$0xff]
      %v2350 = vld [vmem:[#allocation4 + $0x48] sm:$0xff]
      %v2351 = vld [vmem:[#allocation4 + $0x60] sm:$0xff]
      %v2352 = vld [vmem:[#allocation4 + $0x68] sm:$0xff]
      %v2353 = vld [vmem:[#allocation4 + $0x70] sm:$0xff]
      %v2354 = vld [vmem:[#allocation4 + $0x78] sm:$0xff]
      %v2355 = vld [vmem:[#allocation4 + $0x90] sm:$0xff]
      %v2356 = vld [vmem:[#allocation4 + $0x98] sm:$0xff]
      %v2357 = vld [vmem:[#allocation4 + $0xa0] sm:$0xff]
      %v2358 = vld [vmem:[#allocation4 + $0xa8] sm:$0xff]
      %v2359 = vld [vmem:[#allocation4 + $0xc0] sm:$0xff]
      %v2360 = vld [vmem:[#allocation4 + $0xc8] sm:$0xff]
      %v2361 = vld [vmem:[#allocation4 + $0xd0] sm:$0xff]
      %v2362 = vld [vmem:[#allocation4 + $0xd8] sm:$0xff]
      %v2363 = vld [vmem:[#allocation4 + $0xf0] sm:$0xff]
      %v2364 = vld [vmem:[#allocation4 + $0xf8] sm:$0xff]
      %v2365 = vld [vmem:[#allocation4 + $0x100] sm:$0xff]
      %v2366 = vld [vmem:[#allocation4 + $0x108] sm:$0xff]
      %v2367 = vld [vmem:[#allocation4 + $0x120] sm:$0xff]
      %v2368 = vld [vmem:[#allocation4 + $0x128] sm:$0xff]
      %v2369 = vld [vmem:[#allocation4 + $0x130] sm:$0xff]
      %v2370 = vld [vmem:[#allocation4 + $0x138] sm:$0xff]
      %v2371 = vld [vmem:[#allocation4 + $0x150] sm:$0xff]
      %v2372 = vld [vmem:[#allocation4 + $0x158] sm:$0xff]
      %v2373 = vld [vmem:[#allocation4 + $0x160] sm:$0xff]
      %v2374 = vld [vmem:[#allocation4 + $0x168] sm:$0xff]
      %v2375 = vpack.c.bf16 %v2345, %v2343
      %v2376 = vpack.c.bf16 %v2346, %v2344
      %v2377 = vpack.c.bf16 %v2349, %v2347
      %v2378 = vpack.c.bf16 %v2350, %v2348
      %v2379 = vpack.c.bf16 %v2353, %v2351
      %v2380 = vpack.c.bf16 %v2354, %v2352
      %v2381 = vpack.c.bf16 %v2357, %v2355
      %v2382 = vpack.c.bf16 %v2358, %v2356
      %v2383 = vpack.c.bf16 %v2361, %v2359
      %v2384 = vpack.c.bf16 %v2362, %v2360
      %v2385 = vpack.c.bf16 %v2365, %v2363
      %v2386 = vpack.c.bf16 %v2366, %v2364
      %v2387 = vpack.c.bf16 %v2369, %v2367
      %v2388 = vpack.c.bf16 %v2370, %v2368
      %v2389 = vpack.c.bf16 %v2373, %v2371
      %v2390 = vpack.c.bf16 %v2374, %v2372
      %v2391 = vld [vmem:[%s5] sm:$0xff]
      %v2392 = vld [vmem:[%s5 + $0x8] sm:$0xff]
      %v2393 = vld [vmem:[%s5 + $0x10] sm:$0xff]
      %v2394 = vld [vmem:[%s5 + $0x18] sm:$0xff]
      %v2395 = vld [vmem:[%s5 + $0x20] sm:$0xff]
      %v2396 = vld [vmem:[%s5 + $0x28] sm:$0xff]
      %v2397 = vld [vmem:[%s5 + $0x30] sm:$0xff]
      %v2398 = vld [vmem:[%s5 + $0x38] sm:$0xff]
      %v2399 = vld [vmem:[%s5 + $0x40] sm:$0xff]
      %v2400 = vld [vmem:[%s5 + $0x48] sm:$0xff]
      %v2401 = vld [vmem:[%s5 + $0x50] sm:$0xff]
      %v2402 = vld [vmem:[%s5 + $0x58] sm:$0xff]
      %v2403 = vld [vmem:[%s5 + $0x60] sm:$0xff]
      %v2404 = vld [vmem:[%s5 + $0x68] sm:$0xff]
      %v2405 = vld [vmem:[%s5 + $0x70] sm:$0xff]
      %v2406 = vld [vmem:[%s5 + $0x78] sm:$0xff]
      %v2407 = vld [vmem:[%s5 + $0x80] sm:$0xff]
      %v2408 = vld [vmem:[%s5 + $0x88] sm:$0xff]
      %v2409 = vld [vmem:[%s5 + $0x90] sm:$0xff]
      %v2410 = vld [vmem:[%s5 + $0x98] sm:$0xff]
      %v2411 = vld [vmem:[%s5 + $0xa0] sm:$0xff]
      %v2412 = vld [vmem:[%s5 + $0xa8] sm:$0xff]
      %v2413 = vld [vmem:[%s5 + $0xb0] sm:$0xff]
      %v2414 = vld [vmem:[%s5 + $0xb8] sm:$0xff]
      %v2415 = vld [vmem:[%s5 + $0xc0] sm:$0xff]
      %v2416 = vld [vmem:[%s5 + $0xc8] sm:$0xff]
      %v2417 = vld [vmem:[%s5 + $0xd0] sm:$0xff]
      %v2418 = vld [vmem:[%s5 + $0xd8] sm:$0xff]
      %v2419 = vld [vmem:[%s5 + $0xe0] sm:$0xff]
      %v2420 = vld [vmem:[%s5 + $0xe8] sm:$0xff]
      %v2421 = vld [vmem:[%s5 + $0xf0] sm:$0xff]
      %v2422 = vld [vmem:[%s5 + $0xf8] sm:$0xff]
      %v2423 = vld [vmem:[#allocation4] sm:$0xfe]
      %v2424 = vld [vmem:[#allocation4 + $0x8] sm:$0xfe]
      %v2425 = vld [vmem:[#allocation4 + $0x20] sm:$0x1]
      %v2426 = vld [vmem:[#allocation4 + $0x28] sm:$0x1]
      %v2427 = vld [vmem:[#allocation4 + $0x30] sm:$0xfe]
      %v2428 = vld [vmem:[#allocation4 + $0x38] sm:$0xfe]
      %v2429 = vld [vmem:[#allocation4 + $0x50] sm:$0x1]
      %v2430 = vld [vmem:[#allocation4 + $0x58] sm:$0x1]
      %v2431 = vld [vmem:[#allocation4 + $0x60] sm:$0xfe]
      %v2432 = vld [vmem:[#allocation4 + $0x68] sm:$0xfe]
      %v2433 = vld [vmem:[#allocation4 + $0x80] sm:$0x1]
      %v2434 = vld [vmem:[#allocation4 + $0x88] sm:$0x1]
      %v2435 = vld [vmem:[#allocation4 + $0x90] sm:$0xfe]
      %v2436 = vld [vmem:[#allocation4 + $0x98] sm:$0xfe]
      %v2437 = vld [vmem:[#allocation4 + $0xb0] sm:$0x1]
      %v2438 = vld [vmem:[#allocation4 + $0xb8] sm:$0x1]
      %v2439 = vld [vmem:[#allocation4 + $0xc0] sm:$0xfe]
      %v2440 = vld [vmem:[#allocation4 + $0xc8] sm:$0xfe]
      %v2441 = vld [vmem:[#allocation4 + $0xe0] sm:$0x1]
      %v2442 = vld [vmem:[#allocation4 + $0xe8] sm:$0x1]
      %v2443 = vld [vmem:[#allocation4 + $0xf0] sm:$0xfe]
      %v2444 = vld [vmem:[#allocation4 + $0xf8] sm:$0xfe]
      %v2445 = vld [vmem:[#allocation4 + $0x110] sm:$0x1]
      %v2446 = vld [vmem:[#allocation4 + $0x118] sm:$0x1]
      %v2447 = vld [vmem:[#allocation4 + $0x120] sm:$0xfe]
      %v2448 = vld [vmem:[#allocation4 + $0x128] sm:$0xfe]
      %v2449 = vld [vmem:[#allocation4 + $0x140] sm:$0x1]
      %v2450 = vld [vmem:[#allocation4 + $0x148] sm:$0x1]
      %v2451 = vld [vmem:[#allocation4 + $0x150] sm:$0xfe]
      %v2452 = vld [vmem:[#allocation4 + $0x158] sm:$0xfe]
      %v2453 = vld [vmem:[#allocation4 + $0x170] sm:$0x1]
      %v2454 = vld [vmem:[#allocation4 + $0x178] sm:$0x1]
      %v2503 = vrot.slane %v2423, 1
      %v2504 = vrot.slane %v2345, 1
      %v2505 = vsel %vm1476, %v2503, %v2504
      %v2506 = vrot.slane %v2424, 1
      %v2507 = vrot.slane %v2346, 1
      %v2508 = vsel %vm1476, %v2506, %v2507
      %v2509 = vrot.slane %v2425, 1
      %v2510 = vsel %vm1476, %v2504, %v2509
      %v2511 = vrot.slane %v2426, 1
      %v2512 = vsel %vm1476, %v2507, %v2511
      %v2513 = vrot.slane %v2427, 1
      %v2514 = vrot.slane %v2349, 1
      %v2515 = vsel %vm1476, %v2513, %v2514
      %v2516 = vrot.slane %v2428, 1
      %v2517 = vrot.slane %v2350, 1
      %v2518 = vsel %vm1476, %v2516, %v2517
      %v2519 = vrot.slane %v2429, 1
      %v2520 = vsel %vm1476, %v2514, %v2519
      %v2521 = vrot.slane %v2430, 1
      %v2522 = vsel %vm1476, %v2517, %v2521
      %v2523 = vrot.slane %v2431, 1
      %v2524 = vrot.slane %v2353, 1
      %v2525 = vsel %vm1476, %v2523, %v2524
      %v2526 = vrot.slane %v2432, 1
      %v2527 = vrot.slane %v2354, 1
      %v2528 = vsel %vm1476, %v2526, %v2527
      %v2529 = vrot.slane %v2433, 1
      %v2530 = vsel %vm1476, %v2524, %v2529
      %v2531 = vrot.slane %v2434, 1
      %v2532 = vsel %vm1476, %v2527, %v2531
      %v2533 = vrot.slane %v2435, 1
      %v2534 = vrot.slane %v2357, 1
      %v2535 = vsel %vm1476, %v2533, %v2534
      %v2536 = vrot.slane %v2436, 1
      %v2537 = vrot.slane %v2358, 1
      %v2538 = vsel %vm1476, %v2536, %v2537
      %v2539 = vrot.slane %v2437, 1
      %v2540 = vsel %vm1476, %v2534, %v2539
      %v2541 = vrot.slane %v2438, 1
      %v2542 = vsel %vm1476, %v2537, %v2541
      %v2543 = vrot.slane %v2439, 1
      %v2544 = vrot.slane %v2361, 1
      %v2545 = vsel %vm1476, %v2543, %v2544
      %v2546 = vrot.slane %v2440, 1
      %v2547 = vrot.slane %v2362, 1
      %v2548 = vsel %vm1476, %v2546, %v2547
      %v2549 = vrot.slane %v2441, 1
      %v2550 = vsel %vm1476, %v2544, %v2549
      %v2551 = vrot.slane %v2442, 1
      %v2552 = vsel %vm1476, %v2547, %v2551
      %v2553 = vrot.slane %v2443, 1
      %v2554 = vrot.slane %v2365, 1
      %v2555 = vsel %vm1476, %v2553, %v2554
      %v2556 = vrot.slane %v2444, 1
      %v2557 = vrot.slane %v2366, 1
      %v2558 = vsel %vm1476, %v2556, %v2557
      %v2559 = vrot.slane %v2445, 1
      %v2560 = vsel %vm1476, %v2554, %v2559
      %v2561 = vrot.slane %v2446, 1
      %v2562 = vsel %vm1476, %v2557, %v2561
      %v2563 = vrot.slane %v2447, 1
      %v2564 = vrot.slane %v2369, 1
      %v2565 = vsel %vm1476, %v2563, %v2564
      %v2566 = vrot.slane %v2448, 1
      %v2567 = vrot.slane %v2370, 1
      %v2568 = vsel %vm1476, %v2566, %v2567
      %v2569 = vrot.slane %v2449, 1
      %v2570 = vsel %vm1476, %v2564, %v2569
      %v2571 = vrot.slane %v2450, 1
      %v2572 = vsel %vm1476, %v2567, %v2571
      %v2573 = vrot.slane %v2451, 1
      %v2574 = vrot.slane %v2373, 1
      %v2575 = vsel %vm1476, %v2573, %v2574
      %v2576 = vrot.slane %v2452, 1
      %v2577 = vrot.slane %v2374, 1
      %v2578 = vsel %vm1476, %v2576, %v2577
      %v2579 = vrot.slane %v2453, 1
      %v2580 = vsel %vm1476, %v2574, %v2579
      %v2581 = vrot.slane %v2454, 1
      %v2582 = vsel %vm1476, %v2577, %v2581
      %v2615 = vpack.c.bf16 %v2510, %v2505
      %v2616 = vpack.c.bf16 %v2512, %v2508
      %v2617 = vpack.c.bf16 %v2520, %v2515
      %v2618 = vpack.c.bf16 %v2522, %v2518
      %v2619 = vpack.c.bf16 %v2530, %v2525
      %v2620 = vpack.c.bf16 %v2532, %v2528
      %v2621 = vpack.c.bf16 %v2540, %v2535
      %v2622 = vpack.c.bf16 %v2542, %v2538
      %v2623 = vpack.c.bf16 %v2550, %v2545
      %v2624 = vpack.c.bf16 %v2552, %v2548
      %v2625 = vpack.c.bf16 %v2560, %v2555
      %v2626 = vpack.c.bf16 %v2562, %v2558
      %v2627 = vpack.c.bf16 %v2570, %v2565
      %v2628 = vpack.c.bf16 %v2572, %v2568
      %v2629 = vpack.c.bf16 %v2580, %v2575
      %v2630 = vpack.c.bf16 %v2582, %v2578
      %s2631 = scalar_lea.vmem %s5, 256
      %v2632 = vld [vmem:[%s2631] sm:$0xff]
      %v2633 = vld [vmem:[%s2631 + $0x8] sm:$0xff]
      %v2634 = vld [vmem:[%s2631 + $0x10] sm:$0xff]
      %v2635 = vld [vmem:[%s2631 + $0x18] sm:$0xff]
      %v2636 = vld [vmem:[%s2631 + $0x20] sm:$0xff]
      %v2637 = vld [vmem:[%s2631 + $0x28] sm:$0xff]
      %v2638 = vld [vmem:[%s2631 + $0x30] sm:$0xff]
      %v2639 = vld [vmem:[%s2631 + $0x38] sm:$0xff]
      %v2640 = vld [vmem:[%s2631 + $0x40] sm:$0xff]
      %v2641 = vld [vmem:[%s2631 + $0x48] sm:$0xff]
      %v2642 = vld [vmem:[%s2631 + $0x50] sm:$0xff]
      %v2643 = vld [vmem:[%s2631 + $0x58] sm:$0xff]
      %v2644 = vld [vmem:[%s2631 + $0x60] sm:$0xff]
      %v2645 = vld [vmem:[%s2631 + $0x68] sm:$0xff]
      %v2646 = vld [vmem:[%s2631 + $0x70] sm:$0xff]
      %v2647 = vld [vmem:[%s2631 + $0x78] sm:$0xff]
      %v2648 = vld [vmem:[%s2631 + $0x80] sm:$0xff]
      %v2649 = vld [vmem:[%s2631 + $0x88] sm:$0xff]
      %v2650 = vld [vmem:[%s2631 + $0x90] sm:$0xff]
      %v2651 = vld [vmem:[%s2631 + $0x98] sm:$0xff]
      %v2652 = vld [vmem:[%s2631 + $0xa0] sm:$0xff]
      %v2653 = vld [vmem:[%s2631 + $0xa8] sm:$0xff]
      %v2654 = vld [vmem:[%s2631 + $0xb0] sm:$0xff]
      %v2655 = vld [vmem:[%s2631 + $0xb8] sm:$0xff]
      %v2656 = vld [vmem:[%s2631 + $0xc0] sm:$0xff]
      %v2657 = vld [vmem:[%s2631 + $0xc8] sm:$0xff]
      %v2658 = vld [vmem:[%s2631 + $0xd0] sm:$0xff]
      %v2659 = vld [vmem:[%s2631 + $0xd8] sm:$0xff]
      %v2660 = vld [vmem:[%s2631 + $0xe0] sm:$0xff]
      %v2661 = vld [vmem:[%s2631 + $0xe8] sm:$0xff]
      %v2662 = vld [vmem:[%s2631 + $0xf0] sm:$0xff]
      %v2663 = vld [vmem:[%s2631 + $0xf8] sm:$0xff]
      %v2696 = vunpack.c.l.b16 %v2632
      %v2697 = vunpack.c.h.b16 %v2632
      %v2698 = vunpack.c.l.b16 %v2633
      %v2699 = vunpack.c.h.b16 %v2633
      %v2700 = vunpack.c.l.b16 %v2634
      %v2701 = vunpack.c.h.b16 %v2634
      %v2702 = vunpack.c.l.b16 %v2635
      %v2703 = vunpack.c.h.b16 %v2635
      %v2704 = vunpack.c.l.b16 %v2636
      %v2705 = vunpack.c.h.b16 %v2636
      %v2706 = vunpack.c.l.b16 %v2637
      %v2707 = vunpack.c.h.b16 %v2637
      %v2708 = vunpack.c.l.b16 %v2638
      %v2709 = vunpack.c.h.b16 %v2638
      %v2710 = vunpack.c.l.b16 %v2639
      %v2711 = vunpack.c.h.b16 %v2639
      %v2712 = vunpack.c.l.b16 %v2640
      %v2713 = vunpack.c.h.b16 %v2640
      %v2714 = vunpack.c.l.b16 %v2641
      %v2715 = vunpack.c.h.b16 %v2641
      %v2716 = vunpack.c.l.b16 %v2642
      %v2717 = vunpack.c.h.b16 %v2642
      %v2718 = vunpack.c.l.b16 %v2643
      %v2719 = vunpack.c.h.b16 %v2643
      %v2720 = vunpack.c.l.b16 %v2644
      %v2721 = vunpack.c.h.b16 %v2644
      %v2722 = vunpack.c.l.b16 %v2645
      %v2723 = vunpack.c.h.b16 %v2645
      %v2724 = vunpack.c.l.b16 %v2646
      %v2725 = vunpack.c.h.b16 %v2646
      %v2726 = vunpack.c.l.b16 %v2647
      %v2727 = vunpack.c.h.b16 %v2647
      %v2728 = vunpack.c.l.b16 %v2648
      %v2729 = vunpack.c.h.b16 %v2648
      %v2730 = vunpack.c.l.b16 %v2649
      %v2731 = vunpack.c.h.b16 %v2649
      %v2732 = vunpack.c.l.b16 %v2650
      %v2733 = vunpack.c.h.b16 %v2650
      %v2734 = vunpack.c.l.b16 %v2651
      %v2735 = vunpack.c.h.b16 %v2651
      %v2736 = vunpack.c.l.b16 %v2652
      %v2737 = vunpack.c.h.b16 %v2652
      %v2738 = vunpack.c.l.b16 %v2653
      %v2739 = vunpack.c.h.b16 %v2653
      %v2740 = vunpack.c.l.b16 %v2654
      %v2741 = vunpack.c.h.b16 %v2654
      %v2742 = vunpack.c.l.b16 %v2655
      %v2743 = vunpack.c.h.b16 %v2655
      %v2744 = vunpack.c.l.b16 %v2656
      %v2745 = vunpack.c.h.b16 %v2656
      %v2746 = vunpack.c.l.b16 %v2657
      %v2747 = vunpack.c.h.b16 %v2657
      %v2748 = vunpack.c.l.b16 %v2658
      %v2749 = vunpack.c.h.b16 %v2658
      %v2750 = vunpack.c.l.b16 %v2659
      %v2751 = vunpack.c.h.b16 %v2659
      %v2752 = vunpack.c.l.b16 %v2660
      %v2753 = vunpack.c.h.b16 %v2660
      %v2754 = vunpack.c.l.b16 %v2661
      %v2755 = vunpack.c.h.b16 %v2661
      %v2756 = vunpack.c.l.b16 %v2662
      %v2757 = vunpack.c.h.b16 %v2662
      %v2758 = vunpack.c.l.b16 %v2663
      %v2759 = vunpack.c.h.b16 %v2663
      %v2760 = vpack.c.b16 %v2698, %v2696
      %v2761 = vpack.c.b16 %v2699, %v2697
      %v2762 = vpack.c.b16 %v2702, %v2700
      %v2763 = vpack.c.b16 %v2703, %v2701
      %v2764 = vpack.c.b16 %v2706, %v2704
      %v2765 = vpack.c.b16 %v2707, %v2705
      %v2766 = vpack.c.b16 %v2710, %v2708
      %v2767 = vpack.c.b16 %v2711, %v2709
      %v2768 = vpack.c.b16 %v2714, %v2712
      %v2769 = vpack.c.b16 %v2715, %v2713
      %v2770 = vpack.c.b16 %v2718, %v2716
      %v2771 = vpack.c.b16 %v2719, %v2717
      %v2772 = vpack.c.b16 %v2722, %v2720
      %v2773 = vpack.c.b16 %v2723, %v2721
      %v2774 = vpack.c.b16 %v2726, %v2724
      %v2775 = vpack.c.b16 %v2727, %v2725
      %v2776 = vpack.c.b16 %v2730, %v2728
      %v2777 = vpack.c.b16 %v2731, %v2729
      %v2778 = vpack.c.b16 %v2734, %v2732
      %v2779 = vpack.c.b16 %v2735, %v2733
      %v2780 = vpack.c.b16 %v2738, %v2736
      %v2781 = vpack.c.b16 %v2739, %v2737
      %v2782 = vpack.c.b16 %v2742, %v2740
      %v2783 = vpack.c.b16 %v2743, %v2741
      %v2784 = vpack.c.b16 %v2746, %v2744
      %v2785 = vpack.c.b16 %v2747, %v2745
      %v2786 = vpack.c.b16 %v2750, %v2748
      %v2787 = vpack.c.b16 %v2751, %v2749
      %v2788 = vpack.c.b16 %v2754, %v2752
      %v2789 = vpack.c.b16 %v2755, %v2753
      %v2790 = vpack.c.b16 %v2758, %v2756
      %v2791 = vpack.c.b16 %v2759, %v2757
      %2824 = vmatpush.bf16.msra.mxu0 %v2774
      %2825 = vmatpush.bf16.msra.mxu0 %v2772
      %2826 = vmatpush.bf16.msra.mxu0 %v2770
      %2827 = vmatpush.bf16.msra.mxu0 %v2768
      %2828 = vmatpush.bf16.msra.mxu0 %v2766
      %2829 = vmatpush.bf16.msra.mxu0 %v2764
      %2830 = vmatpush.bf16.msra.mxu0 %v2762
      %2831 = vmatpush.bf16.msra.mxu0 %v2760
      %2832 = vmatmul.bf16.gmra.mxu0 %v2615
      %v2833 = vpop.f32.mrf.mxu0
      %v2834 = vadd.f32 0.0, %v2833
      %v2835 = vpop.f32.mrf.mxu0
      %v2836 = vadd.f32 0.0, %v2835
      %2837 = vmatmul.bf16.gmra.mxu0 %v2617
      %v2838 = vpop.f32.mrf.mxu0
      %v2839 = vadd.f32 0.0, %v2838
      %v2840 = vpop.f32.mrf.mxu0
      %v2841 = vadd.f32 0.0, %v2840
      %2842 = vmatmul.bf16.gmra.mxu0 %v2619
      %v2843 = vpop.f32.mrf.mxu0
      %v2844 = vadd.f32 0.0, %v2843
      %v2845 = vpop.f32.mrf.mxu0
      %v2846 = vadd.f32 0.0, %v2845
      %2847 = vmatmul.bf16.gmra.mxu0 %v2621
      %v2848 = vpop.f32.mrf.mxu0
      %v2849 = vadd.f32 0.0, %v2848
      %v2850 = vpop.f32.mrf.mxu0
      %v2851 = vadd.f32 0.0, %v2850
      %2852 = vmatmul.bf16.gmra.mxu0 %v2623
      %v2853 = vpop.f32.mrf.mxu0
      %v2854 = vadd.f32 0.0, %v2853
      %v2855 = vpop.f32.mrf.mxu0
      %v2856 = vadd.f32 0.0, %v2855
      %2857 = vmatmul.bf16.gmra.mxu0 %v2625
      %v2858 = vpop.f32.mrf.mxu0
      %v2859 = vadd.f32 0.0, %v2858
      %v2860 = vpop.f32.mrf.mxu0
      %v2861 = vadd.f32 0.0, %v2860
      %2862 = vmatmul.bf16.gmra.mxu0 %v2627
      %v2863 = vpop.f32.mrf.mxu0
      %v2864 = vadd.f32 0.0, %v2863
      %v2865 = vpop.f32.mrf.mxu0
      %v2866 = vadd.f32 0.0, %v2865
      %2867 = vmatmul.bf16.gmra.mxu0 %v2629
      %v2868 = vpop.f32.mrf.mxu0
      %v2869 = vadd.f32 0.0, %v2868
      %v2870 = vpop.f32.mrf.mxu0
      %v2871 = vadd.f32 0.0, %v2870
      %2872 = vdwg.mxu0
      %2873 = vmatpush.bf16.msra.mxu0 %v2790
      %2874 = vmatpush.bf16.msra.mxu0 %v2788
      %2875 = vmatpush.bf16.msra.mxu0 %v2786
      %2876 = vmatpush.bf16.msra.mxu0 %v2784
      %2877 = vmatpush.bf16.msra.mxu0 %v2782
      %2878 = vmatpush.bf16.msra.mxu0 %v2780
      %2879 = vmatpush.bf16.msra.mxu0 %v2778
      %2880 = vmatpush.bf16.msra.mxu0 %v2776
      %2881 = vmatmul.bf16.gmra.mxu0 %v2616
      %v2882 = vpop.f32.mrf.mxu0
      %v2883 = vadd.f32 %v2834, %v2882
      %v2884 = vpop.f32.mrf.mxu0
      %v2885 = vadd.f32 %v2836, %v2884
      %2886 = vmatmul.bf16.gmra.mxu0 %v2618
      %v2887 = vpop.f32.mrf.mxu0
      %v2888 = vadd.f32 %v2839, %v2887
      %v2889 = vpop.f32.mrf.mxu0
      %v2890 = vadd.f32 %v2841, %v2889
      %2891 = vmatmul.bf16.gmra.mxu0 %v2620
      %v2892 = vpop.f32.mrf.mxu0
      %v2893 = vadd.f32 %v2844, %v2892
      %v2894 = vpop.f32.mrf.mxu0
      %v2895 = vadd.f32 %v2846, %v2894
      %2896 = vmatmul.bf16.gmra.mxu0 %v2622
      %v2897 = vpop.f32.mrf.mxu0
      %v2898 = vadd.f32 %v2849, %v2897
      %v2899 = vpop.f32.mrf.mxu0
      %v2900 = vadd.f32 %v2851, %v2899
      %2901 = vmatmul.bf16.gmra.mxu0 %v2624
      %v2902 = vpop.f32.mrf.mxu0
      %v2903 = vadd.f32 %v2854, %v2902
      %v2904 = vpop.f32.mrf.mxu0
      %v2905 = vadd.f32 %v2856, %v2904
      %2906 = vmatmul.bf16.gmra.mxu0 %v2626
      %v2907 = vpop.f32.mrf.mxu0
      %v2908 = vadd.f32 %v2859, %v2907
      %v2909 = vpop.f32.mrf.mxu0
      %v2910 = vadd.f32 %v2861, %v2909
      %2911 = vmatmul.bf16.gmra.mxu0 %v2628
      %v2912 = vpop.f32.mrf.mxu0
      %v2913 = vadd.f32 %v2864, %v2912
      %v2914 = vpop.f32.mrf.mxu0
      %v2915 = vadd.f32 %v2866, %v2914
      %2916 = vmatmul.bf16.gmra.mxu0 %v2630
      %v2917 = vpop.f32.mrf.mxu0
      %v2918 = vadd.f32 %v2869, %v2917
      %v2919 = vpop.f32.mrf.mxu0
      %v2920 = vadd.f32 %v2871, %v2919
      %2921 = vdwg.mxu0
      %2922 = vmatpush.bf16.msra.mxu0 %v2775
      %2923 = vmatpush.bf16.msra.mxu0 %v2773
      %2924 = vmatpush.bf16.msra.mxu0 %v2771
      %2925 = vmatpush.bf16.msra.mxu0 %v2769
      %2926 = vmatpush.bf16.msra.mxu0 %v2767
      %2927 = vmatpush.bf16.msra.mxu0 %v2765
      %2928 = vmatpush.bf16.msra.mxu0 %v2763
      %2929 = vmatpush.bf16.msra.mxu0 %v2761
      %2930 = vmatmul.bf16.gmra.mxu0 %v2615
      %v2931 = vpop.f32.mrf.mxu0
      %v2932 = vadd.f32 0.0, %v2931
      %v2933 = vpop.f32.mrf.mxu0
      %v2934 = vadd.f32 0.0, %v2933
      %2935 = vmatmul.bf16.gmra.mxu0 %v2617
      %v2936 = vpop.f32.mrf.mxu0
      %v2937 = vadd.f32 0.0, %v2936
      %v2938 = vpop.f32.mrf.mxu0
      %v2939 = vadd.f32 0.0, %v2938
      %2940 = vmatmul.bf16.gmra.mxu0 %v2619
      %v2941 = vpop.f32.mrf.mxu0
      %v2942 = vadd.f32 0.0, %v2941
      %v2943 = vpop.f32.mrf.mxu0
      %v2944 = vadd.f32 0.0, %v2943
      %2945 = vmatmul.bf16.gmra.mxu0 %v2621
      %v2946 = vpop.f32.mrf.mxu0
      %v2947 = vadd.f32 0.0, %v2946
      %v2948 = vpop.f32.mrf.mxu0
      %v2949 = vadd.f32 0.0, %v2948
      %2950 = vmatmul.bf16.gmra.mxu0 %v2623
      %v2951 = vpop.f32.mrf.mxu0
      %v2952 = vadd.f32 0.0, %v2951
      %v2953 = vpop.f32.mrf.mxu0
      %v2954 = vadd.f32 0.0, %v2953
      %2955 = vmatmul.bf16.gmra.mxu0 %v2625
      %v2956 = vpop.f32.mrf.mxu0
      %v2957 = vadd.f32 0.0, %v2956
      %v2958 = vpop.f32.mrf.mxu0
      %v2959 = vadd.f32 0.0, %v2958
      %2960 = vmatmul.bf16.gmra.mxu0 %v2627
      %v2961 = vpop.f32.mrf.mxu0
      %v2962 = vadd.f32 0.0, %v2961
      %v2963 = vpop.f32.mrf.mxu0
      %v2964 = vadd.f32 0.0, %v2963
      %2965 = vmatmul.bf16.gmra.mxu0 %v2629
      %v2966 = vpop.f32.mrf.mxu0
      %v2967 = vadd.f32 0.0, %v2966
      %v2968 = vpop.f32.mrf.mxu0
      %v2969 = vadd.f32 0.0, %v2968
      %2970 = vdwg.mxu0
      %2971 = vmatpush.bf16.msra.mxu0 %v2791
      %2972 = vmatpush.bf16.msra.mxu0 %v2789
      %2973 = vmatpush.bf16.msra.mxu0 %v2787
      %2974 = vmatpush.bf16.msra.mxu0 %v2785
      %2975 = vmatpush.bf16.msra.mxu0 %v2783
      %2976 = vmatpush.bf16.msra.mxu0 %v2781
      %2977 = vmatpush.bf16.msra.mxu0 %v2779
      %2978 = vmatpush.bf16.msra.mxu0 %v2777
      %2979 = vmatmul.bf16.gmra.mxu0 %v2616
      %v2980 = vpop.f32.mrf.mxu0
      %v2981 = vadd.f32 %v2932, %v2980
      %v2982 = vpop.f32.mrf.mxu0
      %v2983 = vadd.f32 %v2934, %v2982
      %2984 = vmatmul.bf16.gmra.mxu0 %v2618
      %v2985 = vpop.f32.mrf.mxu0
      %v2986 = vadd.f32 %v2937, %v2985
      %v2987 = vpop.f32.mrf.mxu0
      %v2988 = vadd.f32 %v2939, %v2987
      %2989 = vmatmul.bf16.gmra.mxu0 %v2620
      %v2990 = vpop.f32.mrf.mxu0
      %v2991 = vadd.f32 %v2942, %v2990
      %v2992 = vpop.f32.mrf.mxu0
      %v2993 = vadd.f32 %v2944, %v2992
      %2994 = vmatmul.bf16.gmra.mxu0 %v2622
      %v2995 = vpop.f32.mrf.mxu0
      %v2996 = vadd.f32 %v2947, %v2995
      %v2997 = vpop.f32.mrf.mxu0
      %v2998 = vadd.f32 %v2949, %v2997
      %2999 = vmatmul.bf16.gmra.mxu0 %v2624
      %v3000 = vpop.f32.mrf.mxu0
      %v3001 = vadd.f32 %v2952, %v3000
      %v3002 = vpop.f32.mrf.mxu0
      %v3003 = vadd.f32 %v2954, %v3002
      %3004 = vmatmul.bf16.gmra.mxu0 %v2626
      %v3005 = vpop.f32.mrf.mxu0
      %v3006 = vadd.f32 %v2957, %v3005
      %v3007 = vpop.f32.mrf.mxu0
      %v3008 = vadd.f32 %v2959, %v3007
      %3009 = vmatmul.bf16.gmra.mxu0 %v2628
      %v3010 = vpop.f32.mrf.mxu0
      %v3011 = vadd.f32 %v2962, %v3010
      %v3012 = vpop.f32.mrf.mxu0
      %v3013 = vadd.f32 %v2964, %v3012
      %3014 = vmatmul.bf16.gmra.mxu0 %v2630
      %v3015 = vpop.f32.mrf.mxu0
      %v3016 = vadd.f32 %v2967, %v3015
      %v3017 = vpop.f32.mrf.mxu0
      %v3018 = vadd.f32 %v2969, %v3017
      %3019 = vdwg.mxu0
      %v3052 = vunpack.c.l.b16 %v2391
      %v3053 = vunpack.c.h.b16 %v2391
      %v3054 = vunpack.c.l.b16 %v2392
      %v3055 = vunpack.c.h.b16 %v2392
      %v3056 = vunpack.c.l.b16 %v2393
      %v3057 = vunpack.c.h.b16 %v2393
      %v3058 = vunpack.c.l.b16 %v2394
      %v3059 = vunpack.c.h.b16 %v2394
      %v3060 = vunpack.c.l.b16 %v2395
      %v3061 = vunpack.c.h.b16 %v2395
      %v3062 = vunpack.c.l.b16 %v2396
      %v3063 = vunpack.c.h.b16 %v2396
      %v3064 = vunpack.c.l.b16 %v2397
      %v3065 = vunpack.c.h.b16 %v2397
      %v3066 = vunpack.c.l.b16 %v2398
      %v3067 = vunpack.c.h.b16 %v2398
      %v3068 = vunpack.c.l.b16 %v2399
      %v3069 = vunpack.c.h.b16 %v2399
      %v3070 = vunpack.c.l.b16 %v2400
      %v3071 = vunpack.c.h.b16 %v2400
      %v3072 = vunpack.c.l.b16 %v2401
      %v3073 = vunpack.c.h.b16 %v2401
      %v3074 = vunpack.c.l.b16 %v2402
      %v3075 = vunpack.c.h.b16 %v2402
      %v3076 = vunpack.c.l.b16 %v2403
      %v3077 = vunpack.c.h.b16 %v2403
      %v3078 = vunpack.c.l.b16 %v2404
      %v3079 = vunpack.c.h.b16 %v2404
      %v3080 = vunpack.c.l.b16 %v2405
      %v3081 = vunpack.c.h.b16 %v2405
      %v3082 = vunpack.c.l.b16 %v2406
      %v3083 = vunpack.c.h.b16 %v2406
      %v3084 = vunpack.c.l.b16 %v2407
      %v3085 = vunpack.c.h.b16 %v2407
      %v3086 = vunpack.c.l.b16 %v2408
      %v3087 = vunpack.c.h.b16 %v2408
      %v3088 = vunpack.c.l.b16 %v2409
      %v3089 = vunpack.c.h.b16 %v2409
      %v3090 = vunpack.c.l.b16 %v2410
      %v3091 = vunpack.c.h.b16 %v2410
      %v3092 = vunpack.c.l.b16 %v2411
      %v3093 = vunpack.c.h.b16 %v2411
      %v3094 = vunpack.c.l.b16 %v2412
      %v3095 = vunpack.c.h.b16 %v2412
      %v3096 = vunpack.c.l.b16 %v2413
      %v3097 = vunpack.c.h.b16 %v2413
      %v3098 = vunpack.c.l.b16 %v2414
      %v3099 = vunpack.c.h.b16 %v2414
      %v3100 = vunpack.c.l.b16 %v2415
      %v3101 = vunpack.c.h.b16 %v2415
      %v3102 = vunpack.c.l.b16 %v2416
      %v3103 = vunpack.c.h.b16 %v2416
      %v3104 = vunpack.c.l.b16 %v2417
      %v3105 = vunpack.c.h.b16 %v2417
      %v3106 = vunpack.c.l.b16 %v2418
      %v3107 = vunpack.c.h.b16 %v2418
      %v3108 = vunpack.c.l.b16 %v2419
      %v3109 = vunpack.c.h.b16 %v2419
      %v3110 = vunpack.c.l.b16 %v2420
      %v3111 = vunpack.c.h.b16 %v2420
      %v3112 = vunpack.c.l.b16 %v2421
      %v3113 = vunpack.c.h.b16 %v2421
      %v3114 = vunpack.c.l.b16 %v2422
      %v3115 = vunpack.c.h.b16 %v2422
      %v3116 = vpack.c.b16 %v3054, %v3052
      %v3117 = vpack.c.b16 %v3055, %v3053
      %v3118 = vpack.c.b16 %v3058, %v3056
      %v3119 = vpack.c.b16 %v3059, %v3057
      %v3120 = vpack.c.b16 %v3062, %v3060
      %v3121 = vpack.c.b16 %v3063, %v3061
      %v3122 = vpack.c.b16 %v3066, %v3064
      %v3123 = vpack.c.b16 %v3067, %v3065
      %v3124 = vpack.c.b16 %v3070, %v3068
      %v3125 = vpack.c.b16 %v3071, %v3069
      %v3126 = vpack.c.b16 %v3074, %v3072
      %v3127 = vpack.c.b16 %v3075, %v3073
      %v3128 = vpack.c.b16 %v3078, %v3076
      %v3129 = vpack.c.b16 %v3079, %v3077
      %v3130 = vpack.c.b16 %v3082, %v3080
      %v3131 = vpack.c.b16 %v3083, %v3081
      %v3132 = vpack.c.b16 %v3086, %v3084
      %v3133 = vpack.c.b16 %v3087, %v3085
      %v3134 = vpack.c.b16 %v3090, %v3088
      %v3135 = vpack.c.b16 %v3091, %v3089
      %v3136 = vpack.c.b16 %v3094, %v3092
      %v3137 = vpack.c.b16 %v3095, %v3093
      %v3138 = vpack.c.b16 %v3098, %v3096
      %v3139 = vpack.c.b16 %v3099, %v3097
      %v3140 = vpack.c.b16 %v3102, %v3100
      %v3141 = vpack.c.b16 %v3103, %v3101
      %v3142 = vpack.c.b16 %v3106, %v3104
      %v3143 = vpack.c.b16 %v3107, %v3105
      %v3144 = vpack.c.b16 %v3110, %v3108
      %v3145 = vpack.c.b16 %v3111, %v3109
      %v3146 = vpack.c.b16 %v3114, %v3112
      %v3147 = vpack.c.b16 %v3115, %v3113
      %3180 = vmatpush.bf16.msra.mxu0 %v3130
      %3181 = vmatpush.bf16.msra.mxu0 %v3128
      %3182 = vmatpush.bf16.msra.mxu0 %v3126
      %3183 = vmatpush.bf16.msra.mxu0 %v3124
      %3184 = vmatpush.bf16.msra.mxu0 %v3122
      %3185 = vmatpush.bf16.msra.mxu0 %v3120
      %3186 = vmatpush.bf16.msra.mxu0 %v3118
      %3187 = vmatpush.bf16.msra.mxu0 %v3116
      %3188 = vmatmul.bf16.gmra.mxu0 %v2375
      %v3189 = vpop.f32.mrf.mxu0
      %v3190 = vadd.f32 %v2883, %v3189
      %v3191 = vpop.f32.mrf.mxu0
      %v3192 = vadd.f32 %v2885, %v3191
      %3193 = vmatmul.bf16.gmra.mxu0 %v2377
      %v3194 = vpop.f32.mrf.mxu0
      %v3195 = vadd.f32 %v2888, %v3194
      %v3196 = vpop.f32.mrf.mxu0
      %v3197 = vadd.f32 %v2890, %v3196
      %3198 = vmatmul.bf16.gmra.mxu0 %v2379
      %v3199 = vpop.f32.mrf.mxu0
      %v3200 = vadd.f32 %v2893, %v3199
      %v3201 = vpop.f32.mrf.mxu0
      %v3202 = vadd.f32 %v2895, %v3201
      %3203 = vmatmul.bf16.gmra.mxu0 %v2381
      %v3204 = vpop.f32.mrf.mxu0
      %v3205 = vadd.f32 %v2898, %v3204
      %v3206 = vpop.f32.mrf.mxu0
      %v3207 = vadd.f32 %v2900, %v3206
      %3208 = vmatmul.bf16.gmra.mxu0 %v2383
      %v3209 = vpop.f32.mrf.mxu0
      %v3210 = vadd.f32 %v2903, %v3209
      %v3211 = vpop.f32.mrf.mxu0
      %v3212 = vadd.f32 %v2905, %v3211
      %3213 = vmatmul.bf16.gmra.mxu0 %v2385
      %v3214 = vpop.f32.mrf.mxu0
      %v3215 = vadd.f32 %v2908, %v3214
      %v3216 = vpop.f32.mrf.mxu0
      %v3217 = vadd.f32 %v2910, %v3216
      %3218 = vmatmul.bf16.gmra.mxu0 %v2387
      %v3219 = vpop.f32.mrf.mxu0
      %v3220 = vadd.f32 %v2913, %v3219
      %v3221 = vpop.f32.mrf.mxu0
      %v3222 = vadd.f32 %v2915, %v3221
      %3223 = vmatmul.bf16.gmra.mxu0 %v2389
      %v3224 = vpop.f32.mrf.mxu0
      %v3225 = vadd.f32 %v2918, %v3224
      %v3226 = vpop.f32.mrf.mxu0
      %v3227 = vadd.f32 %v2920, %v3226
      %3228 = vdwg.mxu0
      %3229 = vmatpush.bf16.msra.mxu0 %v3146
      %3230 = vmatpush.bf16.msra.mxu0 %v3144
      %3231 = vmatpush.bf16.msra.mxu0 %v3142
      %3232 = vmatpush.bf16.msra.mxu0 %v3140
      %3233 = vmatpush.bf16.msra.mxu0 %v3138
      %3234 = vmatpush.bf16.msra.mxu0 %v3136
      %3235 = vmatpush.bf16.msra.mxu0 %v3134
      %3236 = vmatpush.bf16.msra.mxu0 %v3132
      %3237 = vmatmul.bf16.gmra.mxu0 %v2376
      %v3238 = vpop.f32.mrf.mxu0
      %v3239 = vadd.f32 %v3190, %v3238
      %v3240 = vpop.f32.mrf.mxu0
      %v3241 = vadd.f32 %v3192, %v3240
      %3242 = vmatmul.bf16.gmra.mxu0 %v2378
      %v3243 = vpop.f32.mrf.mxu0
      %v3244 = vadd.f32 %v3195, %v3243
      %v3245 = vpop.f32.mrf.mxu0
      %v3246 = vadd.f32 %v3197, %v3245
      %3247 = vmatmul.bf16.gmra.mxu0 %v2380
      %v3248 = vpop.f32.mrf.mxu0
      %v3249 = vadd.f32 %v3200, %v3248
      %v3250 = vpop.f32.mrf.mxu0
      %v3251 = vadd.f32 %v3202, %v3250
      %3252 = vmatmul.bf16.gmra.mxu0 %v2382
      %v3253 = vpop.f32.mrf.mxu0
      %v3254 = vadd.f32 %v3205, %v3253
      %v3255 = vpop.f32.mrf.mxu0
      %v3256 = vadd.f32 %v3207, %v3255
      %3257 = vmatmul.bf16.gmra.mxu0 %v2384
      %v3258 = vpop.f32.mrf.mxu0
      %v3259 = vadd.f32 %v3210, %v3258
      %v3260 = vpop.f32.mrf.mxu0
      %v3261 = vadd.f32 %v3212, %v3260
      %3262 = vmatmul.bf16.gmra.mxu0 %v2386
      %v3263 = vpop.f32.mrf.mxu0
      %v3264 = vadd.f32 %v3215, %v3263
      %v3265 = vpop.f32.mrf.mxu0
      %v3266 = vadd.f32 %v3217, %v3265
      %3267 = vmatmul.bf16.gmra.mxu0 %v2388
      %v3268 = vpop.f32.mrf.mxu0
      %v3269 = vadd.f32 %v3220, %v3268
      %v3270 = vpop.f32.mrf.mxu0
      %v3271 = vadd.f32 %v3222, %v3270
      %3272 = vmatmul.bf16.gmra.mxu0 %v2390
      %v3273 = vpop.f32.mrf.mxu0
      %v3274 = vadd.f32 %v3225, %v3273
      %v3275 = vpop.f32.mrf.mxu0
      %v3276 = vadd.f32 %v3227, %v3275
      %3277 = vdwg.mxu0
      %3278 = vmatpush.bf16.msra.mxu0 %v3131
      %3279 = vmatpush.bf16.msra.mxu0 %v3129
      %3280 = vmatpush.bf16.msra.mxu0 %v3127
      %3281 = vmatpush.bf16.msra.mxu0 %v3125
      %3282 = vmatpush.bf16.msra.mxu0 %v3123
      %3283 = vmatpush.bf16.msra.mxu0 %v3121
      %3284 = vmatpush.bf16.msra.mxu0 %v3119
      %3285 = vmatpush.bf16.msra.mxu0 %v3117
      %3286 = vmatmul.bf16.gmra.mxu0 %v2375
      %v3287 = vpop.f32.mrf.mxu0
      %v3288 = vadd.f32 %v2981, %v3287
      %v3289 = vpop.f32.mrf.mxu0
      %v3290 = vadd.f32 %v2983, %v3289
      %3291 = vmatmul.bf16.gmra.mxu0 %v2377
      %v3292 = vpop.f32.mrf.mxu0
      %v3293 = vadd.f32 %v2986, %v3292
      %v3294 = vpop.f32.mrf.mxu0
      %v3295 = vadd.f32 %v2988, %v3294
      %3296 = vmatmul.bf16.gmra.mxu0 %v2379
      %v3297 = vpop.f32.mrf.mxu0
      %v3298 = vadd.f32 %v2991, %v3297
      %v3299 = vpop.f32.mrf.mxu0
      %v3300 = vadd.f32 %v2993, %v3299
      %3301 = vmatmul.bf16.gmra.mxu0 %v2381
      %v3302 = vpop.f32.mrf.mxu0
      %v3303 = vadd.f32 %v2996, %v3302
      %v3304 = vpop.f32.mrf.mxu0
      %v3305 = vadd.f32 %v2998, %v3304
      %3306 = vmatmul.bf16.gmra.mxu0 %v2383
      %v3307 = vpop.f32.mrf.mxu0
      %v3308 = vadd.f32 %v3001, %v3307
      %v3309 = vpop.f32.mrf.mxu0
      %v3310 = vadd.f32 %v3003, %v3309
      %3311 = vmatmul.bf16.gmra.mxu0 %v2385
      %v3312 = vpop.f32.mrf.mxu0
      %v3313 = vadd.f32 %v3006, %v3312
      %v3314 = vpop.f32.mrf.mxu0
      %v3315 = vadd.f32 %v3008, %v3314
      %3316 = vmatmul.bf16.gmra.mxu0 %v2387
      %v3317 = vpop.f32.mrf.mxu0
      %v3318 = vadd.f32 %v3011, %v3317
      %v3319 = vpop.f32.mrf.mxu0
      %v3320 = vadd.f32 %v3013, %v3319
      %3321 = vmatmul.bf16.gmra.mxu0 %v2389
      %v3322 = vpop.f32.mrf.mxu0
      %v3323 = vadd.f32 %v3016, %v3322
      %v3324 = vpop.f32.mrf.mxu0
      %v3325 = vadd.f32 %v3018, %v3324
      %3326 = vdwg.mxu0
      %3327 = vmatpush.bf16.msra.mxu0 %v3147
      %3328 = vmatpush.bf16.msra.mxu0 %v3145
      %3329 = vmatpush.bf16.msra.mxu0 %v3143
      %3330 = vmatpush.bf16.msra.mxu0 %v3141
      %3331 = vmatpush.bf16.msra.mxu0 %v3139
      %3332 = vmatpush.bf16.msra.mxu0 %v3137
      %3333 = vmatpush.bf16.msra.mxu0 %v3135
      %3334 = vmatpush.bf16.msra.mxu0 %v3133
      %3335 = vmatmul.bf16.gmra.mxu0 %v2376
      %v3336 = vpop.f32.mrf.mxu0
      %v3337 = vadd.f32 %v3288, %v3336
      %v3338 = vpop.f32.mrf.mxu0
      %v3339 = vadd.f32 %v3290, %v3338
      %3340 = vmatmul.bf16.gmra.mxu0 %v2378
      %v3341 = vpop.f32.mrf.mxu0
      %v3342 = vadd.f32 %v3293, %v3341
      %v3343 = vpop.f32.mrf.mxu0
      %v3344 = vadd.f32 %v3295, %v3343
      %3345 = vmatmul.bf16.gmra.mxu0 %v2380
      %v3346 = vpop.f32.mrf.mxu0
      %v3347 = vadd.f32 %v3298, %v3346
      %v3348 = vpop.f32.mrf.mxu0
      %v3349 = vadd.f32 %v3300, %v3348
      %3350 = vmatmul.bf16.gmra.mxu0 %v2382
      %v3351 = vpop.f32.mrf.mxu0
      %v3352 = vadd.f32 %v3303, %v3351
      %v3353 = vpop.f32.mrf.mxu0
      %v3354 = vadd.f32 %v3305, %v3353
      %3355 = vmatmul.bf16.gmra.mxu0 %v2384
      %v3356 = vpop.f32.mrf.mxu0
      %v3357 = vadd.f32 %v3308, %v3356
      %v3358 = vpop.f32.mrf.mxu0
      %v3359 = vadd.f32 %v3310, %v3358
      %3360 = vmatmul.bf16.gmra.mxu0 %v2386
      %v3361 = vpop.f32.mrf.mxu0
      %v3362 = vadd.f32 %v3313, %v3361
      %v3363 = vpop.f32.mrf.mxu0
      %v3364 = vadd.f32 %v3315, %v3363
      %3365 = vmatmul.bf16.gmra.mxu0 %v2388
      %v3366 = vpop.f32.mrf.mxu0
      %v3367 = vadd.f32 %v3318, %v3366
      %v3368 = vpop.f32.mrf.mxu0
      %v3369 = vadd.f32 %v3320, %v3368
      %3370 = vmatmul.bf16.gmra.mxu0 %v2390
      %v3371 = vpop.f32.mrf.mxu0
      %v3372 = vadd.f32 %v3323, %v3371
      %v3373 = vpop.f32.mrf.mxu0
      %v3374 = vadd.f32 %v3325, %v3373
      %3375 = vdwg.mxu0
      %v3376 = vld [vmem:[#allocation4] sm:$0xfc]
      %v3377 = vld [vmem:[#allocation4 + $0x8] sm:$0xfc]
      %v3378 = vld [vmem:[#allocation4 + $0x20] sm:$0x3]
      %v3379 = vld [vmem:[#allocation4 + $0x28] sm:$0x3]
      %v3380 = vld [vmem:[#allocation4 + $0x30] sm:$0xfc]
      %v3381 = vld [vmem:[#allocation4 + $0x38] sm:$0xfc]
      %v3382 = vld [vmem:[#allocation4 + $0x50] sm:$0x3]
      %v3383 = vld [vmem:[#allocation4 + $0x58] sm:$0x3]
      %v3384 = vld [vmem:[#allocation4 + $0x60] sm:$0xfc]
      %v3385 = vld [vmem:[#allocation4 + $0x68] sm:$0xfc]
      %v3386 = vld [vmem:[#allocation4 + $0x80] sm:$0x3]
      %v3387 = vld [vmem:[#allocation4 + $0x88] sm:$0x3]
      %v3388 = vld [vmem:[#allocation4 + $0x90] sm:$0xfc]
      %v3389 = vld [vmem:[#allocation4 + $0x98] sm:$0xfc]
      %v3390 = vld [vmem:[#allocation4 + $0xb0] sm:$0x3]
      %v3391 = vld [vmem:[#allocation4 + $0xb8] sm:$0x3]
      %v3392 = vld [vmem:[#allocation4 + $0xc0] sm:$0xfc]
      %v3393 = vld [vmem:[#allocation4 + $0xc8] sm:$0xfc]
      %v3394 = vld [vmem:[#allocation4 + $0xe0] sm:$0x3]
      %v3395 = vld [vmem:[#allocation4 + $0xe8] sm:$0x3]
      %v3396 = vld [vmem:[#allocation4 + $0xf0] sm:$0xfc]
      %v3397 = vld [vmem:[#allocation4 + $0xf8] sm:$0xfc]
      %v3398 = vld [vmem:[#allocation4 + $0x110] sm:$0x3]
      %v3399 = vld [vmem:[#allocation4 + $0x118] sm:$0x3]
      %v3400 = vld [vmem:[#allocation4 + $0x120] sm:$0xfc]
      %v3401 = vld [vmem:[#allocation4 + $0x128] sm:$0xfc]
      %v3402 = vld [vmem:[#allocation4 + $0x140] sm:$0x3]
      %v3403 = vld [vmem:[#allocation4 + $0x148] sm:$0x3]
      %v3404 = vld [vmem:[#allocation4 + $0x150] sm:$0xfc]
      %v3405 = vld [vmem:[#allocation4 + $0x158] sm:$0xfc]
      %v3406 = vld [vmem:[#allocation4 + $0x170] sm:$0x3]
      %v3407 = vld [vmem:[#allocation4 + $0x178] sm:$0x3]
      %v3440 = vrot.slane %v3376, 2
      %v3441 = vrot.slane %v2345, 2
      %v3442 = vsel %vm1685, %v3440, %v3441
      %v3443 = vrot.slane %v3377, 2
      %v3444 = vrot.slane %v2346, 2
      %v3445 = vsel %vm1685, %v3443, %v3444
      %v3446 = vrot.slane %v3378, 2
      %v3447 = vsel %vm1685, %v3441, %v3446
      %v3448 = vrot.slane %v3379, 2
      %v3449 = vsel %vm1685, %v3444, %v3448
      %v3450 = vrot.slane %v3380, 2
      %v3451 = vrot.slane %v2349, 2
      %v3452 = vsel %vm1685, %v3450, %v3451
      %v3453 = vrot.slane %v3381, 2
      %v3454 = vrot.slane %v2350, 2
      %v3455 = vsel %vm1685, %v3453, %v3454
      %v3456 = vrot.slane %v3382, 2
      %v3457 = vsel %vm1685, %v3451, %v3456
      %v3458 = vrot.slane %v3383, 2
      %v3459 = vsel %vm1685, %v3454, %v3458
      %v3460 = vrot.slane %v3384, 2
      %v3461 = vrot.slane %v2353, 2
      %v3462 = vsel %vm1685, %v3460, %v3461
      %v3463 = vrot.slane %v3385, 2
      %v3464 = vrot.slane %v2354, 2
      %v3465 = vsel %vm1685, %v3463, %v3464
      %v3466 = vrot.slane %v3386, 2
      %v3467 = vsel %vm1685, %v3461, %v3466
      %v3468 = vrot.slane %v3387, 2
      %v3469 = vsel %vm1685, %v3464, %v3468
      %v3470 = vrot.slane %v3388, 2
      %v3471 = vrot.slane %v2357, 2
      %v3472 = vsel %vm1685, %v3470, %v3471
      %v3473 = vrot.slane %v3389, 2
      %v3474 = vrot.slane %v2358, 2
      %v3475 = vsel %vm1685, %v3473, %v3474
      %v3476 = vrot.slane %v3390, 2
      %v3477 = vsel %vm1685, %v3471, %v3476
      %v3478 = vrot.slane %v3391, 2
      %v3479 = vsel %vm1685, %v3474, %v3478
      %v3480 = vrot.slane %v3392, 2
      %v3481 = vrot.slane %v2361, 2
      %v3482 = vsel %vm1685, %v3480, %v3481
      %v3483 = vrot.slane %v3393, 2
      %v3484 = vrot.slane %v2362, 2
      %v3485 = vsel %vm1685, %v3483, %v3484
      %v3486 = vrot.slane %v3394, 2
      %v3487 = vsel %vm1685, %v3481, %v3486
      %v3488 = vrot.slane %v3395, 2
      %v3489 = vsel %vm1685, %v3484, %v3488
      %v3490 = vrot.slane %v3396, 2
      %v3491 = vrot.slane %v2365, 2
      %v3492 = vsel %vm1685, %v3490, %v3491
      %v3493 = vrot.slane %v3397, 2
      %v3494 = vrot.slane %v2366, 2
      %v3495 = vsel %vm1685, %v3493, %v3494
      %v3496 = vrot.slane %v3398, 2
      %v3497 = vsel %vm1685, %v3491, %v3496
      %v3498 = vrot.slane %v3399, 2
      %v3499 = vsel %vm1685, %v3494, %v3498
      %v3500 = vrot.slane %v3400, 2
      %v3501 = vrot.slane %v2369, 2
      %v3502 = vsel %vm1685, %v3500, %v3501
      %v3503 = vrot.slane %v3401, 2
      %v3504 = vrot.slane %v2370, 2
      %v3505 = vsel %vm1685, %v3503, %v3504
      %v3506 = vrot.slane %v3402, 2
      %v3507 = vsel %vm1685, %v3501, %v3506
      %v3508 = vrot.slane %v3403, 2
      %v3509 = vsel %vm1685, %v3504, %v3508
      %v3510 = vrot.slane %v3404, 2
      %v3511 = vrot.slane %v2373, 2
      %v3512 = vsel %vm1685, %v3510, %v3511
      %v3513 = vrot.slane %v3405, 2
      %v3514 = vrot.slane %v2374, 2
      %v3515 = vsel %vm1685, %v3513, %v3514
      %v3516 = vrot.slane %v3406, 2
      %v3517 = vsel %vm1685, %v3511, %v3516
      %v3518 = vrot.slane %v3407, 2
      %v3519 = vsel %vm1685, %v3514, %v3518
      %v3552 = vpack.c.bf16 %v3447, %v3442
      %v3553 = vpack.c.bf16 %v3449, %v3445
      %v3554 = vpack.c.bf16 %v3457, %v3452
      %v3555 = vpack.c.bf16 %v3459, %v3455
      %v3556 = vpack.c.bf16 %v3467, %v3462
      %v3557 = vpack.c.bf16 %v3469, %v3465
      %v3558 = vpack.c.bf16 %v3477, %v3472
      %v3559 = vpack.c.bf16 %v3479, %v3475
      %v3560 = vpack.c.bf16 %v3487, %v3482
      %v3561 = vpack.c.bf16 %v3489, %v3485
      %v3562 = vpack.c.bf16 %v3497, %v3492
      %v3563 = vpack.c.bf16 %v3499, %v3495
      %v3564 = vpack.c.bf16 %v3507, %v3502
      %v3565 = vpack.c.bf16 %v3509, %v3505
      %v3566 = vpack.c.bf16 %v3517, %v3512
      %v3567 = vpack.c.bf16 %v3519, %v3515
      %s3568 = scalar_lea.vmem %s5, 512
      %v3569 = vld [vmem:[%s3568] sm:$0xff]
      %v3570 = vld [vmem:[%s3568 + $0x8] sm:$0xff]
      %v3571 = vld [vmem:[%s3568 + $0x10] sm:$0xff]
      %v3572 = vld [vmem:[%s3568 + $0x18] sm:$0xff]
      %v3573 = vld [vmem:[%s3568 + $0x20] sm:$0xff]
      %v3574 = vld [vmem:[%s3568 + $0x28] sm:$0xff]
      %v3575 = vld [vmem:[%s3568 + $0x30] sm:$0xff]
      %v3576 = vld [vmem:[%s3568 + $0x38] sm:$0xff]
      %v3577 = vld [vmem:[%s3568 + $0x40] sm:$0xff]
      %v3578 = vld [vmem:[%s3568 + $0x48] sm:$0xff]
      %v3579 = vld [vmem:[%s3568 + $0x50] sm:$0xff]
      %v3580 = vld [vmem:[%s3568 + $0x58] sm:$0xff]
      %v3581 = vld [vmem:[%s3568 + $0x60] sm:$0xff]
      %v3582 = vld [vmem:[%s3568 + $0x68] sm:$0xff]
      %v3583 = vld [vmem:[%s3568 + $0x70] sm:$0xff]
      %v3584 = vld [vmem:[%s3568 + $0x78] sm:$0xff]
      %v3585 = vld [vmem:[%s3568 + $0x80] sm:$0xff]
      %v3586 = vld [vmem:[%s3568 + $0x88] sm:$0xff]
      %v3587 = vld [vmem:[%s3568 + $0x90] sm:$0xff]
      %v3588 = vld [vmem:[%s3568 + $0x98] sm:$0xff]
      %v3589 = vld [vmem:[%s3568 + $0xa0] sm:$0xff]
      %v3590 = vld [vmem:[%s3568 + $0xa8] sm:$0xff]
      %v3591 = vld [vmem:[%s3568 + $0xb0] sm:$0xff]
      %v3592 = vld [vmem:[%s3568 + $0xb8] sm:$0xff]
      %v3593 = vld [vmem:[%s3568 + $0xc0] sm:$0xff]
      %v3594 = vld [vmem:[%s3568 + $0xc8] sm:$0xff]
      %v3595 = vld [vmem:[%s3568 + $0xd0] sm:$0xff]
      %v3596 = vld [vmem:[%s3568 + $0xd8] sm:$0xff]
      %v3597 = vld [vmem:[%s3568 + $0xe0] sm:$0xff]
      %v3598 = vld [vmem:[%s3568 + $0xe8] sm:$0xff]
      %v3599 = vld [vmem:[%s3568 + $0xf0] sm:$0xff]
      %v3600 = vld [vmem:[%s3568 + $0xf8] sm:$0xff]
      %v3633 = vunpack.c.l.b16 %v3569
      %v3634 = vunpack.c.h.b16 %v3569
      %v3635 = vunpack.c.l.b16 %v3570
      %v3636 = vunpack.c.h.b16 %v3570
      %v3637 = vunpack.c.l.b16 %v3571
      %v3638 = vunpack.c.h.b16 %v3571
      %v3639 = vunpack.c.l.b16 %v3572
      %v3640 = vunpack.c.h.b16 %v3572
      %v3641 = vunpack.c.l.b16 %v3573
      %v3642 = vunpack.c.h.b16 %v3573
      %v3643 = vunpack.c.l.b16 %v3574
      %v3644 = vunpack.c.h.b16 %v3574
      %v3645 = vunpack.c.l.b16 %v3575
      %v3646 = vunpack.c.h.b16 %v3575
      %v3647 = vunpack.c.l.b16 %v3576
      %v3648 = vunpack.c.h.b16 %v3576
      %v3649 = vunpack.c.l.b16 %v3577
      %v3650 = vunpack.c.h.b16 %v3577
      %v3651 = vunpack.c.l.b16 %v3578
      %v3652 = vunpack.c.h.b16 %v3578
      %v3653 = vunpack.c.l.b16 %v3579
      %v3654 = vunpack.c.h.b16 %v3579
      %v3655 = vunpack.c.l.b16 %v3580
      %v3656 = vunpack.c.h.b16 %v3580
      %v3657 = vunpack.c.l.b16 %v3581
      %v3658 = vunpack.c.h.b16 %v3581
      %v3659 = vunpack.c.l.b16 %v3582
      %v3660 = vunpack.c.h.b16 %v3582
      %v3661 = vunpack.c.l.b16 %v3583
      %v3662 = vunpack.c.h.b16 %v3583
      %v3663 = vunpack.c.l.b16 %v3584
      %v3664 = vunpack.c.h.b16 %v3584
      %v3665 = vunpack.c.l.b16 %v3585
      %v3666 = vunpack.c.h.b16 %v3585
      %v3667 = vunpack.c.l.b16 %v3586
      %v3668 = vunpack.c.h.b16 %v3586
      %v3669 = vunpack.c.l.b16 %v3587
      %v3670 = vunpack.c.h.b16 %v3587
      %v3671 = vunpack.c.l.b16 %v3588
      %v3672 = vunpack.c.h.b16 %v3588
      %v3673 = vunpack.c.l.b16 %v3589
      %v3674 = vunpack.c.h.b16 %v3589
      %v3675 = vunpack.c.l.b16 %v3590
      %v3676 = vunpack.c.h.b16 %v3590
      %v3677 = vunpack.c.l.b16 %v3591
      %v3678 = vunpack.c.h.b16 %v3591
      %v3679 = vunpack.c.l.b16 %v3592
      %v3680 = vunpack.c.h.b16 %v3592
      %v3681 = vunpack.c.l.b16 %v3593
      %v3682 = vunpack.c.h.b16 %v3593
      %v3683 = vunpack.c.l.b16 %v3594
      %v3684 = vunpack.c.h.b16 %v3594
      %v3685 = vunpack.c.l.b16 %v3595
      %v3686 = vunpack.c.h.b16 %v3595
      %v3687 = vunpack.c.l.b16 %v3596
      %v3688 = vunpack.c.h.b16 %v3596
      %v3689 = vunpack.c.l.b16 %v3597
      %v3690 = vunpack.c.h.b16 %v3597
      %v3691 = vunpack.c.l.b16 %v3598
      %v3692 = vunpack.c.h.b16 %v3598
      %v3693 = vunpack.c.l.b16 %v3599
      %v3694 = vunpack.c.h.b16 %v3599
      %v3695 = vunpack.c.l.b16 %v3600
      %v3696 = vunpack.c.h.b16 %v3600
      %v3697 = vpack.c.b16 %v3635, %v3633
      %v3698 = vpack.c.b16 %v3636, %v3634
      %v3699 = vpack.c.b16 %v3639, %v3637
      %v3700 = vpack.c.b16 %v3640, %v3638
      %v3701 = vpack.c.b16 %v3643, %v3641
      %v3702 = vpack.c.b16 %v3644, %v3642
      %v3703 = vpack.c.b16 %v3647, %v3645
      %v3704 = vpack.c.b16 %v3648, %v3646
      %v3705 = vpack.c.b16 %v3651, %v3649
      %v3706 = vpack.c.b16 %v3652, %v3650
      %v3707 = vpack.c.b16 %v3655, %v3653
      %v3708 = vpack.c.b16 %v3656, %v3654
      %v3709 = vpack.c.b16 %v3659, %v3657
      %v3710 = vpack.c.b16 %v3660, %v3658
      %v3711 = vpack.c.b16 %v3663, %v3661
      %v3712 = vpack.c.b16 %v3664, %v3662
      %v3713 = vpack.c.b16 %v3667, %v3665
      %v3714 = vpack.c.b16 %v3668, %v3666
      %v3715 = vpack.c.b16 %v3671, %v3669
      %v3716 = vpack.c.b16 %v3672, %v3670
      %v3717 = vpack.c.b16 %v3675, %v3673
      %v3718 = vpack.c.b16 %v3676, %v3674
      %v3719 = vpack.c.b16 %v3679, %v3677
      %v3720 = vpack.c.b16 %v3680, %v3678
      %v3721 = vpack.c.b16 %v3683, %v3681
      %v3722 = vpack.c.b16 %v3684, %v3682
      %v3723 = vpack.c.b16 %v3687, %v3685
      %v3724 = vpack.c.b16 %v3688, %v3686
      %v3725 = vpack.c.b16 %v3691, %v3689
      %v3726 = vpack.c.b16 %v3692, %v3690
      %v3727 = vpack.c.b16 %v3695, %v3693
      %v3728 = vpack.c.b16 %v3696, %v3694
      %3761 = vmatpush.bf16.msra.mxu0 %v3711
      %3762 = vmatpush.bf16.msra.mxu0 %v3709
      %3763 = vmatpush.bf16.msra.mxu0 %v3707
      %3764 = vmatpush.bf16.msra.mxu0 %v3705
      %3765 = vmatpush.bf16.msra.mxu0 %v3703
      %3766 = vmatpush.bf16.msra.mxu0 %v3701
      %3767 = vmatpush.bf16.msra.mxu0 %v3699
      %3768 = vmatpush.bf16.msra.mxu0 %v3697
      %3769 = vmatmul.bf16.gmra.mxu0 %v3552
      %v3770 = vpop.f32.mrf.mxu0
      %v3771 = vadd.f32 0.0, %v3770
      %v3772 = vpop.f32.mrf.mxu0
      %v3773 = vadd.f32 0.0, %v3772
      %3774 = vmatmul.bf16.gmra.mxu0 %v3554
      %v3775 = vpop.f32.mrf.mxu0
      %v3776 = vadd.f32 0.0, %v3775
      %v3777 = vpop.f32.mrf.mxu0
      %v3778 = vadd.f32 0.0, %v3777
      %3779 = vmatmul.bf16.gmra.mxu0 %v3556
      %v3780 = vpop.f32.mrf.mxu0
      %v3781 = vadd.f32 0.0, %v3780
      %v3782 = vpop.f32.mrf.mxu0
      %v3783 = vadd.f32 0.0, %v3782
      %3784 = vmatmul.bf16.gmra.mxu0 %v3558
      %v3785 = vpop.f32.mrf.mxu0
      %v3786 = vadd.f32 0.0, %v3785
      %v3787 = vpop.f32.mrf.mxu0
      %v3788 = vadd.f32 0.0, %v3787
      %3789 = vmatmul.bf16.gmra.mxu0 %v3560
      %v3790 = vpop.f32.mrf.mxu0
      %v3791 = vadd.f32 0.0, %v3790
      %v3792 = vpop.f32.mrf.mxu0
      %v3793 = vadd.f32 0.0, %v3792
      %3794 = vmatmul.bf16.gmra.mxu0 %v3562
      %v3795 = vpop.f32.mrf.mxu0
      %v3796 = vadd.f32 0.0, %v3795
      %v3797 = vpop.f32.mrf.mxu0
      %v3798 = vadd.f32 0.0, %v3797
      %3799 = vmatmul.bf16.gmra.mxu0 %v3564
      %v3800 = vpop.f32.mrf.mxu0
      %v3801 = vadd.f32 0.0, %v3800
      %v3802 = vpop.f32.mrf.mxu0
      %v3803 = vadd.f32 0.0, %v3802
      %3804 = vmatmul.bf16.gmra.mxu0 %v3566
      %v3805 = vpop.f32.mrf.mxu0
      %v3806 = vadd.f32 0.0, %v3805
      %v3807 = vpop.f32.mrf.mxu0
      %v3808 = vadd.f32 0.0, %v3807
      %3809 = vdwg.mxu0
      %3810 = vmatpush.bf16.msra.mxu0 %v3727
      %3811 = vmatpush.bf16.msra.mxu0 %v3725
      %3812 = vmatpush.bf16.msra.mxu0 %v3723
      %3813 = vmatpush.bf16.msra.mxu0 %v3721
      %3814 = vmatpush.bf16.msra.mxu0 %v3719
      %3815 = vmatpush.bf16.msra.mxu0 %v3717
      %3816 = vmatpush.bf16.msra.mxu0 %v3715
      %3817 = vmatpush.bf16.msra.mxu0 %v3713
      %3818 = vmatmul.bf16.gmra.mxu0 %v3553
      %v3819 = vpop.f32.mrf.mxu0
      %v3820 = vadd.f32 %v3771, %v3819
      %v3821 = vpop.f32.mrf.mxu0
      %v3822 = vadd.f32 %v3773, %v3821
      %3823 = vmatmul.bf16.gmra.mxu0 %v3555
      %v3824 = vpop.f32.mrf.mxu0
      %v3825 = vadd.f32 %v3776, %v3824
      %v3826 = vpop.f32.mrf.mxu0
      %v3827 = vadd.f32 %v3778, %v3826
      %3828 = vmatmul.bf16.gmra.mxu0 %v3557
      %v3829 = vpop.f32.mrf.mxu0
      %v3830 = vadd.f32 %v3781, %v3829
      %v3831 = vpop.f32.mrf.mxu0
      %v3832 = vadd.f32 %v3783, %v3831
      %3833 = vmatmul.bf16.gmra.mxu0 %v3559
      %v3834 = vpop.f32.mrf.mxu0
      %v3835 = vadd.f32 %v3786, %v3834
      %v3836 = vpop.f32.mrf.mxu0
      %v3837 = vadd.f32 %v3788, %v3836
      %3838 = vmatmul.bf16.gmra.mxu0 %v3561
      %v3839 = vpop.f32.mrf.mxu0
      %v3840 = vadd.f32 %v3791, %v3839
      %v3841 = vpop.f32.mrf.mxu0
      %v3842 = vadd.f32 %v3793, %v3841
      %3843 = vmatmul.bf16.gmra.mxu0 %v3563
      %v3844 = vpop.f32.mrf.mxu0
      %v3845 = vadd.f32 %v3796, %v3844
      %v3846 = vpop.f32.mrf.mxu0
      %v3847 = vadd.f32 %v3798, %v3846
      %3848 = vmatmul.bf16.gmra.mxu0 %v3565
      %v3849 = vpop.f32.mrf.mxu0
      %v3850 = vadd.f32 %v3801, %v3849
      %v3851 = vpop.f32.mrf.mxu0
      %v3852 = vadd.f32 %v3803, %v3851
      %3853 = vmatmul.bf16.gmra.mxu0 %v3567
      %v3854 = vpop.f32.mrf.mxu0
      %v3855 = vadd.f32 %v3806, %v3854
      %v3856 = vpop.f32.mrf.mxu0
      %v3857 = vadd.f32 %v3808, %v3856
      %3858 = vdwg.mxu0
      %3859 = vmatpush.bf16.msra.mxu0 %v3712
      %3860 = vmatpush.bf16.msra.mxu0 %v3710
      %3861 = vmatpush.bf16.msra.mxu0 %v3708
      %3862 = vmatpush.bf16.msra.mxu0 %v3706
      %3863 = vmatpush.bf16.msra.mxu0 %v3704
      %3864 = vmatpush.bf16.msra.mxu0 %v3702
      %3865 = vmatpush.bf16.msra.mxu0 %v3700
      %3866 = vmatpush.bf16.msra.mxu0 %v3698
      %3867 = vmatmul.bf16.gmra.mxu0 %v3552
      %v3868 = vpop.f32.mrf.mxu0
      %v3869 = vadd.f32 0.0, %v3868
      %v3870 = vpop.f32.mrf.mxu0
      %v3871 = vadd.f32 0.0, %v3870
      %3872 = vmatmul.bf16.gmra.mxu0 %v3554
      %v3873 = vpop.f32.mrf.mxu0
      %v3874 = vadd.f32 0.0, %v3873
      %v3875 = vpop.f32.mrf.mxu0
      %v3876 = vadd.f32 0.0, %v3875
      %3877 = vmatmul.bf16.gmra.mxu0 %v3556
      %v3878 = vpop.f32.mrf.mxu0
      %v3879 = vadd.f32 0.0, %v3878
      %v3880 = vpop.f32.mrf.mxu0
      %v3881 = vadd.f32 0.0, %v3880
      %3882 = vmatmul.bf16.gmra.mxu0 %v3558
      %v3883 = vpop.f32.mrf.mxu0
      %v3884 = vadd.f32 0.0, %v3883
      %v3885 = vpop.f32.mrf.mxu0
      %v3886 = vadd.f32 0.0, %v3885
      %3887 = vmatmul.bf16.gmra.mxu0 %v3560
      %v3888 = vpop.f32.mrf.mxu0
      %v3889 = vadd.f32 0.0, %v3888
      %v3890 = vpop.f32.mrf.mxu0
      %v3891 = vadd.f32 0.0, %v3890
      %3892 = vmatmul.bf16.gmra.mxu0 %v3562
      %v3893 = vpop.f32.mrf.mxu0
      %v3894 = vadd.f32 0.0, %v3893
      %v3895 = vpop.f32.mrf.mxu0
      %v3896 = vadd.f32 0.0, %v3895
      %3897 = vmatmul.bf16.gmra.mxu0 %v3564
      %v3898 = vpop.f32.mrf.mxu0
      %v3899 = vadd.f32 0.0, %v3898
      %v3900 = vpop.f32.mrf.mxu0
      %v3901 = vadd.f32 0.0, %v3900
      %3902 = vmatmul.bf16.gmra.mxu0 %v3566
      %v3903 = vpop.f32.mrf.mxu0
      %v3904 = vadd.f32 0.0, %v3903
      %v3905 = vpop.f32.mrf.mxu0
      %v3906 = vadd.f32 0.0, %v3905
      %3907 = vdwg.mxu0
      %3908 = vmatpush.bf16.msra.mxu0 %v3728
      %3909 = vmatpush.bf16.msra.mxu0 %v3726
      %3910 = vmatpush.bf16.msra.mxu0 %v3724
      %3911 = vmatpush.bf16.msra.mxu0 %v3722
      %3912 = vmatpush.bf16.msra.mxu0 %v3720
      %3913 = vmatpush.bf16.msra.mxu0 %v3718
      %3914 = vmatpush.bf16.msra.mxu0 %v3716
      %3915 = vmatpush.bf16.msra.mxu0 %v3714
      %3916 = vmatmul.bf16.gmra.mxu0 %v3553
      %v3917 = vpop.f32.mrf.mxu0
      %v3918 = vadd.f32 %v3869, %v3917
      %v3919 = vpop.f32.mrf.mxu0
      %v3920 = vadd.f32 %v3871, %v3919
      %3921 = vmatmul.bf16.gmra.mxu0 %v3555
      %v3922 = vpop.f32.mrf.mxu0
      %v3923 = vadd.f32 %v3874, %v3922
      %v3924 = vpop.f32.mrf.mxu0
      %v3925 = vadd.f32 %v3876, %v3924
      %3926 = vmatmul.bf16.gmra.mxu0 %v3557
      %v3927 = vpop.f32.mrf.mxu0
      %v3928 = vadd.f32 %v3879, %v3927
      %v3929 = vpop.f32.mrf.mxu0
      %v3930 = vadd.f32 %v3881, %v3929
      %3931 = vmatmul.bf16.gmra.mxu0 %v3559
      %v3932 = vpop.f32.mrf.mxu0
      %v3933 = vadd.f32 %v3884, %v3932
      %v3934 = vpop.f32.mrf.mxu0
      %v3935 = vadd.f32 %v3886, %v3934
      %3936 = vmatmul.bf16.gmra.mxu0 %v3561
      %v3937 = vpop.f32.mrf.mxu0
      %v3938 = vadd.f32 %v3889, %v3937
      %v3939 = vpop.f32.mrf.mxu0
      %v3940 = vadd.f32 %v3891, %v3939
      %3941 = vmatmul.bf16.gmra.mxu0 %v3563
      %v3942 = vpop.f32.mrf.mxu0
      %v3943 = vadd.f32 %v3894, %v3942
      %v3944 = vpop.f32.mrf.mxu0
      %v3945 = vadd.f32 %v3896, %v3944
      %3946 = vmatmul.bf16.gmra.mxu0 %v3565
      %v3947 = vpop.f32.mrf.mxu0
      %v3948 = vadd.f32 %v3899, %v3947
      %v3949 = vpop.f32.mrf.mxu0
      %v3950 = vadd.f32 %v3901, %v3949
      %3951 = vmatmul.bf16.gmra.mxu0 %v3567
      %v3952 = vpop.f32.mrf.mxu0
      %v3953 = vadd.f32 %v3904, %v3952
      %v3954 = vpop.f32.mrf.mxu0
      %v3955 = vadd.f32 %v3906, %v3954
      %3956 = vdwg.mxu0
      %v3957 = vadd.f32 %v3239, %v3820
      %v3958 = vadd.f32 %v3337, %v3918
      %v3959 = vadd.f32 %v3241, %v3822
      %v3960 = vadd.f32 %v3339, %v3920
      %v3961 = vadd.f32 %v3244, %v3825
      %v3962 = vadd.f32 %v3342, %v3923
      %v3963 = vadd.f32 %v3246, %v3827
      %v3964 = vadd.f32 %v3344, %v3925
      %v3965 = vadd.f32 %v3249, %v3830
      %v3966 = vadd.f32 %v3347, %v3928
      %v3967 = vadd.f32 %v3251, %v3832
      %v3968 = vadd.f32 %v3349, %v3930
      %v3969 = vadd.f32 %v3254, %v3835
      %v3970 = vadd.f32 %v3352, %v3933
      %v3971 = vadd.f32 %v3256, %v3837
      %v3972 = vadd.f32 %v3354, %v3935
      %v3973 = vadd.f32 %v3259, %v3840
      %v3974 = vadd.f32 %v3357, %v3938
      %v3975 = vadd.f32 %v3261, %v3842
      %v3976 = vadd.f32 %v3359, %v3940
      %v3977 = vadd.f32 %v3264, %v3845
      %v3978 = vadd.f32 %v3362, %v3943
      %v3979 = vadd.f32 %v3266, %v3847
      %v3980 = vadd.f32 %v3364, %v3945
      %v3981 = vadd.f32 %v3269, %v3850
      %v3982 = vadd.f32 %v3367, %v3948
      %v3983 = vadd.f32 %v3271, %v3852
      %v3984 = vadd.f32 %v3369, %v3950
      %v3985 = vadd.f32 %v3274, %v3855
      %v3986 = vadd.f32 %v3372, %v3953
      %v3987 = vadd.f32 %v3276, %v3857
      %v3988 = vadd.f32 %v3374, %v3955
      %v3989 = vld [vmem:[%s6] sm:$0x3]
      %v3991 = vperm.slane %v3989, 0
      %v3992 = vperm.slane %v3989, 1
      %v3995 = vadd.f32 %v3957, %v3991
      %v3996 = vadd.f32 %v3958, %v3992
      %v3997 = vadd.f32 %v3959, %v3991
      %v3998 = vadd.f32 %v3960, %v3992
      %v3999 = vadd.f32 %v3961, %v3991
      %v4000 = vadd.f32 %v3962, %v3992
      %v4001 = vadd.f32 %v3963, %v3991
      %v4002 = vadd.f32 %v3964, %v3992
      %v4003 = vadd.f32 %v3965, %v3991
      %v4004 = vadd.f32 %v3966, %v3992
      %v4005 = vadd.f32 %v3967, %v3991
      %v4006 = vadd.f32 %v3968, %v3992
      %v4007 = vadd.f32 %v3969, %v3991
      %v4008 = vadd.f32 %v3970, %v3992
      %v4009 = vadd.f32 %v3971, %v3991
      %v4010 = vadd.f32 %v3972, %v3992
      %v4011 = vadd.f32 %v3973, %v3991
      %v4012 = vadd.f32 %v3974, %v3992
      %v4013 = vadd.f32 %v3975, %v3991
      %v4014 = vadd.f32 %v3976, %v3992
      %v4015 = vadd.f32 %v3977, %v3991
      %v4016 = vadd.f32 %v3978, %v3992
      %v4017 = vadd.f32 %v3979, %v3991
      %v4018 = vadd.f32 %v3980, %v3992
      %v4019 = vadd.f32 %v3981, %v3991
      %v4020 = vadd.f32 %v3982, %v3992
      %v4021 = vadd.f32 %v3983, %v3991
      %v4022 = vadd.f32 %v3984, %v3992
      %v4023 = vadd.f32 %v3985, %v3991
      %v4024 = vadd.f32 %v3986, %v3992
      %v4025 = vadd.f32 %v3987, %v3991
      %v4026 = vadd.f32 %v3988, %v3992
      %v4027 = vmax.f32 %v3995, 0.0
      %v4028 = vmax.f32 %v3996, 0.0
      %v4029 = vmax.f32 %v3997, 0.0
      %v4030 = vmax.f32 %v3998, 0.0
      %v4031 = vmax.f32 %v3999, 0.0
      %v4032 = vmax.f32 %v4000, 0.0
      %v4033 = vmax.f32 %v4001, 0.0
      %v4034 = vmax.f32 %v4002, 0.0
      %v4035 = vmax.f32 %v4003, 0.0
      %v4036 = vmax.f32 %v4004, 0.0
      %v4037 = vmax.f32 %v4005, 0.0
      %v4038 = vmax.f32 %v4006, 0.0
      %v4039 = vmax.f32 %v4007, 0.0
      %v4040 = vmax.f32 %v4008, 0.0
      %v4041 = vmax.f32 %v4009, 0.0
      %v4042 = vmax.f32 %v4010, 0.0
      %v4043 = vmax.f32 %v4011, 0.0
      %v4044 = vmax.f32 %v4012, 0.0
      %v4045 = vmax.f32 %v4013, 0.0
      %v4046 = vmax.f32 %v4014, 0.0
      %v4047 = vmax.f32 %v4015, 0.0
      %v4048 = vmax.f32 %v4016, 0.0
      %v4049 = vmax.f32 %v4017, 0.0
      %v4050 = vmax.f32 %v4018, 0.0
      %v4051 = vmax.f32 %v4019, 0.0
      %v4052 = vmax.f32 %v4020, 0.0
      %v4053 = vmax.f32 %v4021, 0.0
      %v4054 = vmax.f32 %v4022, 0.0
      %v4055 = vmax.f32 %v4023, 0.0
      %v4056 = vmax.f32 %v4024, 0.0
      %v4057 = vmax.f32 %v4025, 0.0
      %v4058 = vmax.f32 %v4026, 0.0
      %v4059 = vld [vmem:[%s7] sm:$0x3]
      %v4061 = vperm.slane %v4059, 0
      %v4062 = vperm.slane %v4059, 1
      %v4065 = vmul.f32 %v4027, %v4061
      %v4066 = vmul.f32 %v4028, %v4062
      %v4067 = vmul.f32 %v4029, %v4061
      %v4068 = vmul.f32 %v4030, %v4062
      %v4069 = vmul.f32 %v4031, %v4061
      %v4070 = vmul.f32 %v4032, %v4062
      %v4071 = vmul.f32 %v4033, %v4061
      %v4072 = vmul.f32 %v4034, %v4062
      %v4073 = vmul.f32 %v4035, %v4061
      %v4074 = vmul.f32 %v4036, %v4062
      %v4075 = vmul.f32 %v4037, %v4061
      %v4076 = vmul.f32 %v4038, %v4062
      %v4077 = vmul.f32 %v4039, %v4061
      %v4078 = vmul.f32 %v4040, %v4062
      %v4079 = vmul.f32 %v4041, %v4061
      %v4080 = vmul.f32 %v4042, %v4062
      %v4081 = vmul.f32 %v4043, %v4061
      %v4082 = vmul.f32 %v4044, %v4062
      %v4083 = vmul.f32 %v4045, %v4061
      %v4084 = vmul.f32 %v4046, %v4062
      %v4085 = vmul.f32 %v4047, %v4061
      %v4086 = vmul.f32 %v4048, %v4062
      %v4087 = vmul.f32 %v4049, %v4061
      %v4088 = vmul.f32 %v4050, %v4062
      %v4089 = vmul.f32 %v4051, %v4061
      %v4090 = vmul.f32 %v4052, %v4062
      %v4091 = vmul.f32 %v4053, %v4061
      %v4092 = vmul.f32 %v4054, %v4062
      %v4093 = vmul.f32 %v4055, %v4061
      %v4094 = vmul.f32 %v4056, %v4062
      %v4095 = vmul.f32 %v4057, %v4061
      %v4096 = vmul.f32 %v4058, %v4062
      %v4097 = vld [vmem:[%s8] sm:$0x3]
      %v4099 = vperm.slane %v4097, 0
      %v4100 = vperm.slane %v4097, 1
      %v4103 = vadd.f32 %v4065, %v4099
      %v4104 = vadd.f32 %v4066, %v4100
      %v4105 = vadd.f32 %v4067, %v4099
      %v4106 = vadd.f32 %v4068, %v4100
      %v4107 = vadd.f32 %v4069, %v4099
      %v4108 = vadd.f32 %v4070, %v4100
      %v4109 = vadd.f32 %v4071, %v4099
      %v4110 = vadd.f32 %v4072, %v4100
      %v4111 = vadd.f32 %v4073, %v4099
      %v4112 = vadd.f32 %v4074, %v4100
      %v4113 = vadd.f32 %v4075, %v4099
      %v4114 = vadd.f32 %v4076, %v4100
      %v4115 = vadd.f32 %v4077, %v4099
      %v4116 = vadd.f32 %v4078, %v4100
      %v4117 = vadd.f32 %v4079, %v4099
      %v4118 = vadd.f32 %v4080, %v4100
      %v4119 = vadd.f32 %v4081, %v4099
      %v4120 = vadd.f32 %v4082, %v4100
      %v4121 = vadd.f32 %v4083, %v4099
      %v4122 = vadd.f32 %v4084, %v4100
      %v4123 = vadd.f32 %v4085, %v4099
      %v4124 = vadd.f32 %v4086, %v4100
      %v4125 = vadd.f32 %v4087, %v4099
      %v4126 = vadd.f32 %v4088, %v4100
      %v4127 = vadd.f32 %v4089, %v4099
      %v4128 = vadd.f32 %v4090, %v4100
      %v4129 = vadd.f32 %v4091, %v4099
      %v4130 = vadd.f32 %v4092, %v4100
      %v4131 = vadd.f32 %v4093, %v4099
      %v4132 = vadd.f32 %v4094, %v4100
      %v4133 = vadd.f32 %v4095, %v4099
      %v4134 = vadd.f32 %v4096, %v4100
      %vm4135 = vcmp.lt.s32.totalorder %v1098, 384
      %vm4136 = vmand %vm1099, %vm4135
      %4137 = vst.msk [vmem:[#allocation5] ss:$8 sm:$0x7] %vm4136, -inf
      %4138 = vst.msk [vmem:[#allocation5] ss:$8 sm:$0x0] %vm4136, -inf
      %s4139 = scalar_lea.vmem [#allocation5], 72
      %4140 = vst.msk [vmem:[%s4139] ss:$8 sm:$0x7] %vm4136, -inf
      %4141 = vst.msk [vmem:[%s4139] ss:$8 sm:$0x0] %vm4136, -inf
      %s4142 = scalar_lea.vmem [#allocation5], 144
      %4143 = vst.msk [vmem:[%s4142] ss:$8 sm:$0x7] %vm4136, -inf
      %4144 = vst.msk [vmem:[%s4142] ss:$8 sm:$0x0] %vm4136, -inf
      %s4145 = scalar_lea.vmem [#allocation5], 216
      %4146 = vst.msk [vmem:[%s4145] ss:$8 sm:$0x7] %vm4136, -inf
      %4147 = vst.msk [vmem:[%s4145] ss:$8 sm:$0x0] %vm4136, -inf
      %s4148 = scalar_lea.vmem [#allocation5], 288
      %4149 = vst.msk [vmem:[%s4148] ss:$8 sm:$0x7] %vm4136, -inf
      %4150 = vst.msk [vmem:[%s4148] ss:$8 sm:$0x0] %vm4136, -inf
      %s4151 = scalar_lea.vmem [#allocation5], 360
      %4152 = vst.msk [vmem:[%s4151] ss:$8 sm:$0x7] %vm4136, -inf
      %4153 = vst.msk [vmem:[%s4151] ss:$8 sm:$0x0] %vm4136, -inf
      %s4154 = scalar_lea.vmem [#allocation5], 432
      %4155 = vst.msk [vmem:[%s4154] ss:$8 sm:$0x7] %vm4136, -inf
      %4156 = vst.msk [vmem:[%s4154] ss:$8 sm:$0x0] %vm4136, -inf
      %s4157 = scalar_lea.vmem [#allocation5], 504
      %4158 = vst.msk [vmem:[%s4157] ss:$8 sm:$0x7] %vm4136, -inf
      %4159 = vst.msk [vmem:[%s4157] ss:$8 sm:$0x0] %vm4136, -inf
      %s4160 = scalar_lea.vmem [#allocation5], 49
      %4161 = vst.msk [vmem:[%s4160] ss:$8 sm:$0x7] %vm4136, -inf
      %4162 = vst.msk [vmem:[%s4160] ss:$8 sm:$0x0] %vm4136, -inf
      %s4163 = scalar_lea.vmem [#allocation5], 121
      %4164 = vst.msk [vmem:[%s4163] ss:$8 sm:$0x7] %vm4136, -inf
      %4165 = vst.msk [vmem:[%s4163] ss:$8 sm:$0x0] %vm4136, -inf
      %s4166 = scalar_lea.vmem [#allocation5], 193
      %4167 = vst.msk [vmem:[%s4166] ss:$8 sm:$0x7] %vm4136, -inf
      %4168 = vst.msk [vmem:[%s4166] ss:$8 sm:$0x0] %vm4136, -inf
      %s4169 = scalar_lea.vmem [#allocation5], 265
      %4170 = vst.msk [vmem:[%s4169] ss:$8 sm:$0x7] %vm4136, -inf
      %4171 = vst.msk [vmem:[%s4169] ss:$8 sm:$0x0] %vm4136, -inf
      %s4172 = scalar_lea.vmem [#allocation5], 337
      %4173 = vst.msk [vmem:[%s4172] ss:$8 sm:$0x7] %vm4136, -inf
      %4174 = vst.msk [vmem:[%s4172] ss:$8 sm:$0x0] %vm4136, -inf
      %s4175 = scalar_lea.vmem [#allocation5], 409
      %4176 = vst.msk [vmem:[%s4175] ss:$8 sm:$0x7] %vm4136, -inf
      %4177 = vst.msk [vmem:[%s4175] ss:$8 sm:$0x0] %vm4136, -inf
      %s4178 = scalar_lea.vmem [#allocation5], 481
      %4179 = vst.msk [vmem:[%s4178] ss:$8 sm:$0x7] %vm4136, -inf
      %4180 = vst.msk [vmem:[%s4178] ss:$8 sm:$0x0] %vm4136, -inf
      %s4181 = scalar_lea.vmem [#allocation5], 553
      %4182 = vst.msk [vmem:[%s4181] ss:$8 sm:$0x7] %vm4136, -inf
      %4183 = vst.msk [vmem:[%s4181] ss:$8 sm:$0x0] %vm4136, -inf
      %vm4184 = vcmask 130049
      %4185 = vst.msk [vmem:[#allocation5] sm:$0xfe] %vm4184, -inf
      %vm4186 = vcmask 130048
      %4187 = vst.msk [vmem:[#allocation5 + $0x18] sm:$0xff] %vm4186, -inf
      %vm4188 = vcmask 122880
      %4189 = vst.msk [vmem:[#allocation5 + $0x30] sm:$0x1] %vm4188, -inf
      %4190 = vst.msk [vmem:[#allocation5 + $0x48] sm:$0xfe] %vm4184, -inf
      %4191 = vst.msk [vmem:[#allocation5 + $0x60] sm:$0xff] %vm4186, -inf
      %4192 = vst.msk [vmem:[#allocation5 + $0x78] sm:$0x1] %vm4188, -inf
      %4193 = vst.msk [vmem:[#allocation5 + $0x90] sm:$0xfe] %vm4184, -inf
      %4194 = vst.msk [vmem:[#allocation5 + $0xa8] sm:$0xff] %vm4186, -inf
      %4195 = vst.msk [vmem:[#allocation5 + $0xc0] sm:$0x1] %vm4188, -inf
      %4196 = vst.msk [vmem:[#allocation5 + $0xd8] sm:$0xfe] %vm4184, -inf
      %4197 = vst.msk [vmem:[#allocation5 + $0xf0] sm:$0xff] %vm4186, -inf
      %4198 = vst.msk [vmem:[#allocation5 + $0x108] sm:$0x1] %vm4188, -inf
      %4199 = vst.msk [vmem:[#allocation5 + $0x120] sm:$0xfe] %vm4184, -inf
      %4200 = vst.msk [vmem:[#allocation5 + $0x138] sm:$0xff] %vm4186, -inf
      %4201 = vst.msk [vmem:[#allocation5 + $0x150] sm:$0x1] %vm4188, -inf
      %4202 = vst.msk [vmem:[#allocation5 + $0x168] sm:$0xfe] %vm4184, -inf
      %4203 = vst.msk [vmem:[#allocation5 + $0x180] sm:$0xff] %vm4186, -inf
      %4204 = vst.msk [vmem:[#allocation5 + $0x198] sm:$0x1] %vm4188, -inf
      %4205 = vst.msk [vmem:[#allocation5 + $0x1b0] sm:$0xfe] %vm4184, -inf
      %4206 = vst.msk [vmem:[#allocation5 + $0x1c8] sm:$0xff] %vm4186, -inf
      %4207 = vst.msk [vmem:[#allocation5 + $0x1e0] sm:$0x1] %vm4188, -inf
      %4208 = vst.msk [vmem:[#allocation5 + $0x1f8] sm:$0xfe] %vm4184, -inf
      %4209 = vst.msk [vmem:[#allocation5 + $0x210] sm:$0xff] %vm4186, -inf
      %4210 = vst.msk [vmem:[#allocation5 + $0x228] sm:$0x1] %vm4188, -inf
      %vm4211 = vcmask 1047681
      %4212 = vst.msk [vmem:[#allocation5 + $0x10] sm:$0xfe] %vm4211, -inf
      %vm4213 = vcmask 1047680
      %4214 = vst.msk [vmem:[#allocation5 + $0x28] sm:$0xff] %vm4213, -inf
      %vm4215 = vcmask 1040512
      %4216 = vst.msk [vmem:[#allocation5 + $0x40] sm:$0x1] %vm4215, -inf
      %4217 = vst.msk [vmem:[#allocation5 + $0x58] sm:$0xfe] %vm4211, -inf
      %4218 = vst.msk [vmem:[#allocation5 + $0x70] sm:$0xff] %vm4213, -inf
      %4219 = vst.msk [vmem:[#allocation5 + $0x88] sm:$0x1] %vm4215, -inf
      %4220 = vst.msk [vmem:[#allocation5 + $0xa0] sm:$0xfe] %vm4211, -inf
      %4221 = vst.msk [vmem:[#allocation5 + $0xb8] sm:$0xff] %vm4213, -inf
      %4222 = vst.msk [vmem:[#allocation5 + $0xd0] sm:$0x1] %vm4215, -inf
      %4223 = vst.msk [vmem:[#allocation5 + $0xe8] sm:$0xfe] %vm4211, -inf
      %4224 = vst.msk [vmem:[#allocation5 + $0x100] sm:$0xff] %vm4213, -inf
      %4225 = vst.msk [vmem:[#allocation5 + $0x118] sm:$0x1] %vm4215, -inf
      %4226 = vst.msk [vmem:[#allocation5 + $0x130] sm:$0xfe] %vm4211, -inf
      %4227 = vst.msk [vmem:[#allocation5 + $0x148] sm:$0xff] %vm4213, -inf
      %4228 = vst.msk [vmem:[#allocation5 + $0x160] sm:$0x1] %vm4215, -inf
      %4229 = vst.msk [vmem:[#allocation5 + $0x178] sm:$0xfe] %vm4211, -inf
      %4230 = vst.msk [vmem:[#allocation5 + $0x190] sm:$0xff] %vm4213, -inf
      %4231 = vst.msk [vmem:[#allocation5 + $0x1a8] sm:$0x1] %vm4215, -inf
      %4232 = vst.msk [vmem:[#allocation5 + $0x1c0] sm:$0xfe] %vm4211, -inf
      %4233 = vst.msk [vmem:[#allocation5 + $0x1d8] sm:$0xff] %vm4213, -inf
      %4234 = vst.msk [vmem:[#allocation5 + $0x1f0] sm:$0x1] %vm4215, -inf
      %4235 = vst.msk [vmem:[#allocation5 + $0x208] sm:$0xfe] %vm4211, -inf
      %4236 = vst.msk [vmem:[#allocation5 + $0x220] sm:$0xff] %vm4213, -inf
      %4237 = vst.msk [vmem:[#allocation5 + $0x238] sm:$0x1] %vm4215, -inf
      %v4270 = vrot.slane %v4103, 7
      %v4271 = vrot.slane %v4104, 7
      %v4272 = vrot.slane %v4105, 7
      %v4273 = vsel %vm1219, %v4270, %v4272
      %v4274 = vrot.slane %v4106, 7
      %v4275 = vsel %vm1219, %v4271, %v4274
      %v4276 = vrot.slane %v4107, 7
      %v4277 = vrot.slane %v4108, 7
      %v4278 = vrot.slane %v4109, 7
      %v4279 = vsel %vm1219, %v4276, %v4278
      %v4280 = vrot.slane %v4110, 7
      %v4281 = vsel %vm1219, %v4277, %v4280
      %v4282 = vrot.slane %v4111, 7
      %v4283 = vrot.slane %v4112, 7
      %v4284 = vrot.slane %v4113, 7
      %v4285 = vsel %vm1219, %v4282, %v4284
      %v4286 = vrot.slane %v4114, 7
      %v4287 = vsel %vm1219, %v4283, %v4286
      %v4288 = vrot.slane %v4115, 7
      %v4289 = vrot.slane %v4116, 7
      %v4290 = vrot.slane %v4117, 7
      %v4291 = vsel %vm1219, %v4288, %v4290
      %v4292 = vrot.slane %v4118, 7
      %v4293 = vsel %vm1219, %v4289, %v4292
      %v4294 = vrot.slane %v4119, 7
      %v4295 = vrot.slane %v4120, 7
      %v4296 = vrot.slane %v4121, 7
      %v4297 = vsel %vm1219, %v4294, %v4296
      %v4298 = vrot.slane %v4122, 7
      %v4299 = vsel %vm1219, %v4295, %v4298
      %v4300 = vrot.slane %v4123, 7
      %v4301 = vrot.slane %v4124, 7
      %v4302 = vrot.slane %v4125, 7
      %v4303 = vsel %vm1219, %v4300, %v4302
      %v4304 = vrot.slane %v4126, 7
      %v4305 = vsel %vm1219, %v4301, %v4304
      %v4306 = vrot.slane %v4127, 7
      %v4307 = vrot.slane %v4128, 7
      %v4308 = vrot.slane %v4129, 7
      %v4309 = vsel %vm1219, %v4306, %v4308
      %v4310 = vrot.slane %v4130, 7
      %v4311 = vsel %vm1219, %v4307, %v4310
      %v4312 = vrot.slane %v4131, 7
      %v4313 = vrot.slane %v4132, 7
      %v4314 = vrot.slane %v4133, 7
      %v4315 = vsel %vm1219, %v4312, %v4314
      %v4316 = vrot.slane %v4134, 7
      %v4317 = vsel %vm1219, %v4313, %v4316
      %4318 = vrot.lane.b32.xlu0 %v4270, 16
      %v4319 = vpop.permute.xlu0 %4318
      %4320 = vrot.lane.b32.xlu0 %v4271, 16
      %v4321 = vpop.permute.xlu0 %4320
      %4322 = vrot.lane.b32.xlu0 %v4273, 16
      %v4323 = vpop.permute.xlu0 %4322
      %4324 = vrot.lane.b32.xlu0 %v4275, 16
      %v4325 = vpop.permute.xlu0 %4324
      %4326 = vrot.lane.b32.xlu0 %v4272, 16
      %v4327 = vpop.permute.xlu0 %4326
      %4328 = vrot.lane.b32.xlu0 %v4274, 16
      %v4329 = vpop.permute.xlu0 %4328
      %4330 = vrot.lane.b32.xlu0 %v4276, 16
      %v4331 = vpop.permute.xlu0 %4330
      %4332 = vrot.lane.b32.xlu0 %v4277, 16
      %v4333 = vpop.permute.xlu0 %4332
      %4334 = vrot.lane.b32.xlu0 %v4279, 16
      %v4335 = vpop.permute.xlu0 %4334
      %4336 = vrot.lane.b32.xlu0 %v4281, 16
      %v4337 = vpop.permute.xlu0 %4336
      %4338 = vrot.lane.b32.xlu0 %v4278, 16
      %v4339 = vpop.permute.xlu0 %4338
      %4340 = vrot.lane.b32.xlu0 %v4280, 16
      %v4341 = vpop.permute.xlu0 %4340
      %4342 = vrot.lane.b32.xlu0 %v4282, 16
      %v4343 = vpop.permute.xlu0 %4342
      %4344 = vrot.lane.b32.xlu0 %v4283, 16
      %v4345 = vpop.permute.xlu0 %4344
      %4346 = vrot.lane.b32.xlu0 %v4285, 16
      %v4347 = vpop.permute.xlu0 %4346
      %4348 = vrot.lane.b32.xlu0 %v4287, 16
      %v4349 = vpop.permute.xlu0 %4348
      %4350 = vrot.lane.b32.xlu0 %v4284, 16
      %v4351 = vpop.permute.xlu0 %4350
      %4352 = vrot.lane.b32.xlu0 %v4286, 16
      %v4353 = vpop.permute.xlu0 %4352
      %4354 = vrot.lane.b32.xlu0 %v4288, 16
      %v4355 = vpop.permute.xlu0 %4354
      %4356 = vrot.lane.b32.xlu0 %v4289, 16
      %v4357 = vpop.permute.xlu0 %4356
      %4358 = vrot.lane.b32.xlu0 %v4291, 16
      %v4359 = vpop.permute.xlu0 %4358
      %4360 = vrot.lane.b32.xlu0 %v4293, 16
      %v4361 = vpop.permute.xlu0 %4360
      %4362 = vrot.lane.b32.xlu0 %v4290, 16
      %v4363 = vpop.permute.xlu0 %4362
      %4364 = vrot.lane.b32.xlu0 %v4292, 16
      %v4365 = vpop.permute.xlu0 %4364
      %4366 = vrot.lane.b32.xlu0 %v4294, 16
      %v4367 = vpop.permute.xlu0 %4366
      %4368 = vrot.lane.b32.xlu0 %v4295, 16
      %v4369 = vpop.permute.xlu0 %4368
      %4370 = vrot.lane.b32.xlu0 %v4297, 16
      %v4371 = vpop.permute.xlu0 %4370
      %4372 = vrot.lane.b32.xlu0 %v4299, 16
      %v4373 = vpop.permute.xlu0 %4372
      %4374 = vrot.lane.b32.xlu0 %v4296, 16
      %v4375 = vpop.permute.xlu0 %4374
      %4376 = vrot.lane.b32.xlu0 %v4298, 16
      %v4377 = vpop.permute.xlu0 %4376
      %4378 = vrot.lane.b32.xlu0 %v4300, 16
      %v4379 = vpop.permute.xlu0 %4378
      %4380 = vrot.lane.b32.xlu0 %v4301, 16
      %v4381 = vpop.permute.xlu0 %4380
      %4382 = vrot.lane.b32.xlu0 %v4303, 16
      %v4383 = vpop.permute.xlu0 %4382
      %4384 = vrot.lane.b32.xlu0 %v4305, 16
      %v4385 = vpop.permute.xlu0 %4384
      %4386 = vrot.lane.b32.xlu0 %v4302, 16
      %v4387 = vpop.permute.xlu0 %4386
      %4388 = vrot.lane.b32.xlu0 %v4304, 16
      %v4389 = vpop.permute.xlu0 %4388
      %4390 = vrot.lane.b32.xlu0 %v4306, 16
      %v4391 = vpop.permute.xlu0 %4390
      %4392 = vrot.lane.b32.xlu0 %v4307, 16
      %v4393 = vpop.permute.xlu0 %4392
      %4394 = vrot.lane.b32.xlu0 %v4309, 16
      %v4395 = vpop.permute.xlu0 %4394
      %4396 = vrot.lane.b32.xlu0 %v4311, 16
      %v4397 = vpop.permute.xlu0 %4396
      %4398 = vrot.lane.b32.xlu0 %v4308, 16
      %v4399 = vpop.permute.xlu0 %4398
      %4400 = vrot.lane.b32.xlu0 %v4310, 16
      %v4401 = vpop.permute.xlu0 %4400
      %4402 = vrot.lane.b32.xlu0 %v4312, 16
      %v4403 = vpop.permute.xlu0 %4402
      %4404 = vrot.lane.b32.xlu0 %v4313, 16
      %v4405 = vpop.permute.xlu0 %4404
      %4406 = vrot.lane.b32.xlu0 %v4315, 16
      %v4407 = vpop.permute.xlu0 %4406
      %4408 = vrot.lane.b32.xlu0 %v4317, 16
      %v4409 = vpop.permute.xlu0 %4408
      %4410 = vrot.lane.b32.xlu0 %v4314, 16
      %v4411 = vpop.permute.xlu0 %4410
      %4412 = vrot.lane.b32.xlu0 %v4316, 16
      %v4413 = vpop.permute.xlu0 %4412
      %v4414 = vsel %vm4186, %v4319, %v4321
      %v4415 = vsel %vm4186, %v4323, %v4325
      %v4416 = vsel %vm4186, %v4327, %v4329
      %v4417 = vsel %vm4186, %v4331, %v4333
      %v4418 = vsel %vm4186, %v4335, %v4337
      %v4419 = vsel %vm4186, %v4339, %v4341
      %v4420 = vsel %vm4186, %v4343, %v4345
      %v4421 = vsel %vm4186, %v4347, %v4349
      %v4422 = vsel %vm4186, %v4351, %v4353
      %v4423 = vsel %vm4186, %v4355, %v4357
      %v4424 = vsel %vm4186, %v4359, %v4361
      %v4425 = vsel %vm4186, %v4363, %v4365
      %v4426 = vsel %vm4186, %v4367, %v4369
      %v4427 = vsel %vm4186, %v4371, %v4373
      %v4428 = vsel %vm4186, %v4375, %v4377
      %v4429 = vsel %vm4186, %v4379, %v4381
      %v4430 = vsel %vm4186, %v4383, %v4385
      %v4431 = vsel %vm4186, %v4387, %v4389
      %v4432 = vsel %vm4186, %v4391, %v4393
      %v4433 = vsel %vm4186, %v4395, %v4397
      %v4434 = vsel %vm4186, %v4399, %v4401
      %v4435 = vsel %vm4186, %v4403, %v4405
      %v4436 = vsel %vm4186, %v4407, %v4409
      %v4437 = vsel %vm4186, %v4411, %v4413
      %4510 = vst.msk [vmem:[#allocation5] sm:$0xfe] %vm4211, %v4319
      %4511 = vst [vmem:[#allocation5 + $0x8] sm:$0xfe] %v4414
      %4512 = vst.msk [vmem:[#allocation5 + $0x10] sm:$0xfe] %vm4184, %v4321
      %4513 = vst.msk [vmem:[#allocation5 + $0x18] sm:$0xff] %vm4213, %v4323
      %4514 = vst [vmem:[#allocation5 + $0x20] sm:$0xff] %v4415
      %4515 = vst.msk [vmem:[#allocation5 + $0x28] sm:$0xff] %vm4186, %v4325
      %4516 = vst.msk [vmem:[#allocation5 + $0x30] sm:$0x1] %vm4215, %v4327
      %4517 = vst [vmem:[#allocation5 + $0x38] sm:$0x1] %v4416
      %4518 = vst.msk [vmem:[#allocation5 + $0x40] sm:$0x1] %vm4188, %v4329
      %4519 = vst.msk [vmem:[#allocation5 + $0x48] sm:$0xfe] %vm4211, %v4331
      %4520 = vst [vmem:[#allocation5 + $0x50] sm:$0xfe] %v4417
      %4521 = vst.msk [vmem:[#allocation5 + $0x58] sm:$0xfe] %vm4184, %v4333
      %4522 = vst.msk [vmem:[#allocation5 + $0x60] sm:$0xff] %vm4213, %v4335
      %4523 = vst [vmem:[#allocation5 + $0x68] sm:$0xff] %v4418
      %4524 = vst.msk [vmem:[#allocation5 + $0x70] sm:$0xff] %vm4186, %v4337
      %4525 = vst.msk [vmem:[#allocation5 + $0x78] sm:$0x1] %vm4215, %v4339
      %4526 = vst [vmem:[#allocation5 + $0x80] sm:$0x1] %v4419
      %4527 = vst.msk [vmem:[#allocation5 + $0x88] sm:$0x1] %vm4188, %v4341
      %4528 = vst.msk [vmem:[#allocation5 + $0x90] sm:$0xfe] %vm4211, %v4343
      %4529 = vst [vmem:[#allocation5 + $0x98] sm:$0xfe] %v4420
      %4530 = vst.msk [vmem:[#allocation5 + $0xa0] sm:$0xfe] %vm4184, %v4345
      %4531 = vst.msk [vmem:[#allocation5 + $0xa8] sm:$0xff] %vm4213, %v4347
      %4532 = vst [vmem:[#allocation5 + $0xb0] sm:$0xff] %v4421
      %4533 = vst.msk [vmem:[#allocation5 + $0xb8] sm:$0xff] %vm4186, %v4349
      %4534 = vst.msk [vmem:[#allocation5 + $0xc0] sm:$0x1] %vm4215, %v4351
      %4535 = vst [vmem:[#allocation5 + $0xc8] sm:$0x1] %v4422
      %4536 = vst.msk [vmem:[#allocation5 + $0xd0] sm:$0x1] %vm4188, %v4353
      %4537 = vst.msk [vmem:[#allocation5 + $0xd8] sm:$0xfe] %vm4211, %v4355
      %4538 = vst [vmem:[#allocation5 + $0xe0] sm:$0xfe] %v4423
      %4539 = vst.msk [vmem:[#allocation5 + $0xe8] sm:$0xfe] %vm4184, %v4357
      %4540 = vst.msk [vmem:[#allocation5 + $0xf0] sm:$0xff] %vm4213, %v4359
      %4541 = vst [vmem:[#allocation5 + $0xf8] sm:$0xff] %v4424
      %4542 = vst.msk [vmem:[#allocation5 + $0x100] sm:$0xff] %vm4186, %v4361
      %4543 = vst.msk [vmem:[#allocation5 + $0x108] sm:$0x1] %vm4215, %v4363
      %4544 = vst [vmem:[#allocation5 + $0x110] sm:$0x1] %v4425
      %4545 = vst.msk [vmem:[#allocation5 + $0x118] sm:$0x1] %vm4188, %v4365
      %4546 = vst.msk [vmem:[#allocation5 + $0x120] sm:$0xfe] %vm4211, %v4367
      %4547 = vst [vmem:[#allocation5 + $0x128] sm:$0xfe] %v4426
      %4548 = vst.msk [vmem:[#allocation5 + $0x130] sm:$0xfe] %vm4184, %v4369
      %4549 = vst.msk [vmem:[#allocation5 + $0x138] sm:$0xff] %vm4213, %v4371
      %4550 = vst [vmem:[#allocation5 + $0x140] sm:$0xff] %v4427
      %4551 = vst.msk [vmem:[#allocation5 + $0x148] sm:$0xff] %vm4186, %v4373
      %4552 = vst.msk [vmem:[#allocation5 + $0x150] sm:$0x1] %vm4215, %v4375
      %4553 = vst [vmem:[#allocation5 + $0x158] sm:$0x1] %v4428
      %4554 = vst.msk [vmem:[#allocation5 + $0x160] sm:$0x1] %vm4188, %v4377
      %4555 = vst.msk [vmem:[#allocation5 + $0x168] sm:$0xfe] %vm4211, %v4379
      %4556 = vst [vmem:[#allocation5 + $0x170] sm:$0xfe] %v4429
      %4557 = vst.msk [vmem:[#allocation5 + $0x178] sm:$0xfe] %vm4184, %v4381
      %4558 = vst.msk [vmem:[#allocation5 + $0x180] sm:$0xff] %vm4213, %v4383
      %4559 = vst [vmem:[#allocation5 + $0x188] sm:$0xff] %v4430
      %4560 = vst.msk [vmem:[#allocation5 + $0x190] sm:$0xff] %vm4186, %v4385
      %4561 = vst.msk [vmem:[#allocation5 + $0x198] sm:$0x1] %vm4215, %v4387
      %4562 = vst [vmem:[#allocation5 + $0x1a0] sm:$0x1] %v4431
      %4563 = vst.msk [vmem:[#allocation5 + $0x1a8] sm:$0x1] %vm4188, %v4389
      %4564 = vst.msk [vmem:[#allocation5 + $0x1b0] sm:$0xfe] %vm4211, %v4391
      %4565 = vst [vmem:[#allocation5 + $0x1b8] sm:$0xfe] %v4432
      %4566 = vst.msk [vmem:[#allocation5 + $0x1c0] sm:$0xfe] %vm4184, %v4393
      %4567 = vst.msk [vmem:[#allocation5 + $0x1c8] sm:$0xff] %vm4213, %v4395
      %4568 = vst [vmem:[#allocation5 + $0x1d0] sm:$0xff] %v4433
      %4569 = vst.msk [vmem:[#allocation5 + $0x1d8] sm:$0xff] %vm4186, %v4397
      %4570 = vst.msk [vmem:[#allocation5 + $0x1e0] sm:$0x1] %vm4215, %v4399
      %4571 = vst [vmem:[#allocation5 + $0x1e8] sm:$0x1] %v4434
      %4572 = vst.msk [vmem:[#allocation5 + $0x1f0] sm:$0x1] %vm4188, %v4401
      %4573 = vst.msk [vmem:[#allocation5 + $0x1f8] sm:$0xfe] %vm4211, %v4403
      %4574 = vst [vmem:[#allocation5 + $0x200] sm:$0xfe] %v4435
      %4575 = vst.msk [vmem:[#allocation5 + $0x208] sm:$0xfe] %vm4184, %v4405
      %4576 = vst.msk [vmem:[#allocation5 + $0x210] sm:$0xff] %vm4213, %v4407
      %4577 = vst [vmem:[#allocation5 + $0x218] sm:$0xff] %v4436
      %4578 = vst.msk [vmem:[#allocation5 + $0x220] sm:$0xff] %vm4186, %v4409
      %4579 = vst.msk [vmem:[#allocation5 + $0x228] sm:$0x1] %vm4215, %v4411
      %4580 = vst [vmem:[#allocation5 + $0x230] sm:$0x1] %v4437
      %4581 = vst.msk [vmem:[#allocation5 + $0x238] sm:$0x1] %vm4188, %v4413
      %v4582 = vld [vmem:[#allocation5] sm:$0xff]
      %v4583 = vld [vmem:[#allocation5 + $0x8] sm:$0xff]
      %v4584 = vld [vmem:[#allocation5 + $0x10] sm:$0xff]
      %v4585 = vld [vmem:[#allocation5 + $0x18] sm:$0xff]
      %v4586 = vld [vmem:[#allocation5 + $0x20] sm:$0xff]
      %v4587 = vld [vmem:[#allocation5 + $0x28] sm:$0xff]
      %v4588 = vld [vmem:[#allocation5 + $0x48] sm:$0xff]
      %v4589 = vld [vmem:[#allocation5 + $0x50] sm:$0xff]
      %v4590 = vld [vmem:[#allocation5 + $0x58] sm:$0xff]
      %v4591 = vld [vmem:[#allocation5 + $0x60] sm:$0xff]
      %v4592 = vld [vmem:[#allocation5 + $0x68] sm:$0xff]
      %v4593 = vld [vmem:[#allocation5 + $0x70] sm:$0xff]
      %v4594 = vld [vmem:[#allocation5 + $0x90] sm:$0xff]
      %v4595 = vld [vmem:[#allocation5 + $0x98] sm:$0xff]
      %v4596 = vld [vmem:[#allocation5 + $0xa0] sm:$0xff]
      %v4597 = vld [vmem:[#allocation5 + $0xa8] sm:$0xff]
      %v4598 = vld [vmem:[#allocation5 + $0xb0] sm:$0xff]
      %v4599 = vld [vmem:[#allocation5 + $0xb8] sm:$0xff]
      %v4600 = vld [vmem:[#allocation5 + $0xd8] sm:$0xff]
      %v4601 = vld [vmem:[#allocation5 + $0xe0] sm:$0xff]
      %v4602 = vld [vmem:[#allocation5 + $0xe8] sm:$0xff]
      %v4603 = vld [vmem:[#allocation5 + $0xf0] sm:$0xff]
      %v4604 = vld [vmem:[#allocation5 + $0xf8] sm:$0xff]
      %v4605 = vld [vmem:[#allocation5 + $0x100] sm:$0xff]
      %v4606 = vld [vmem:[#allocation5 + $0x120] sm:$0xff]
      %v4607 = vld [vmem:[#allocation5 + $0x128] sm:$0xff]
      %v4608 = vld [vmem:[#allocation5 + $0x130] sm:$0xff]
      %v4609 = vld [vmem:[#allocation5 + $0x138] sm:$0xff]
      %v4610 = vld [vmem:[#allocation5 + $0x140] sm:$0xff]
      %v4611 = vld [vmem:[#allocation5 + $0x148] sm:$0xff]
      %v4612 = vld [vmem:[#allocation5 + $0x168] sm:$0xff]
      %v4613 = vld [vmem:[#allocation5 + $0x170] sm:$0xff]
      %v4614 = vld [vmem:[#allocation5 + $0x178] sm:$0xff]
      %v4615 = vld [vmem:[#allocation5 + $0x180] sm:$0xff]
      %v4616 = vld [vmem:[#allocation5 + $0x188] sm:$0xff]
      %v4617 = vld [vmem:[#allocation5 + $0x190] sm:$0xff]
      %v4618 = vld [vmem:[#allocation5 + $0x1b0] sm:$0xff]
      %v4619 = vld [vmem:[#allocation5 + $0x1b8] sm:$0xff]
      %v4620 = vld [vmem:[#allocation5 + $0x1c0] sm:$0xff]
      %v4621 = vld [vmem:[#allocation5 + $0x1c8] sm:$0xff]
      %v4622 = vld [vmem:[#allocation5 + $0x1d0] sm:$0xff]
      %v4623 = vld [vmem:[#allocation5 + $0x1d8] sm:$0xff]
      %v4624 = vld [vmem:[#allocation5 + $0x1f8] sm:$0xff]
      %v4625 = vld [vmem:[#allocation5 + $0x200] sm:$0xff]
      %v4626 = vld [vmem:[#allocation5 + $0x208] sm:$0xff]
      %v4627 = vld [vmem:[#allocation5 + $0x210] sm:$0xff]
      %v4628 = vld [vmem:[#allocation5 + $0x218] sm:$0xff]
      %v4629 = vld [vmem:[#allocation5 + $0x220] sm:$0xff]
      %v4630 = vld [vmem:[#allocation5] sm:$0xfe]
      %v4631 = vld [vmem:[#allocation5 + $0x8] sm:$0xfe]
      %v4632 = vld [vmem:[#allocation5 + $0x10] sm:$0xfe]
      %v4633 = vld [vmem:[#allocation5 + $0x30] sm:$0x1]
      %v4634 = vld [vmem:[#allocation5 + $0x38] sm:$0x1]
      %v4635 = vld [vmem:[#allocation5 + $0x40] sm:$0x1]
      %v4636 = vld [vmem:[#allocation5 + $0x48] sm:$0xfe]
      %v4637 = vld [vmem:[#allocation5 + $0x50] sm:$0xfe]
      %v4638 = vld [vmem:[#allocation5 + $0x58] sm:$0xfe]
      %v4639 = vld [vmem:[#allocation5 + $0x78] sm:$0x1]
      %v4640 = vld [vmem:[#allocation5 + $0x80] sm:$0x1]
      %v4641 = vld [vmem:[#allocation5 + $0x88] sm:$0x1]
      %v4642 = vld [vmem:[#allocation5 + $0x90] sm:$0xfe]
      %v4643 = vld [vmem:[#allocation5 + $0x98] sm:$0xfe]
      %v4644 = vld [vmem:[#allocation5 + $0xa0] sm:$0xfe]
      %v4645 = vld [vmem:[#allocation5 + $0xc0] sm:$0x1]
      %v4646 = vld [vmem:[#allocation5 + $0xc8] sm:$0x1]
      %v4647 = vld [vmem:[#allocation5 + $0xd0] sm:$0x1]
      %v4648 = vld [vmem:[#allocation5 + $0xd8] sm:$0xfe]
      %v4649 = vld [vmem:[#allocation5 + $0xe0] sm:$0xfe]
      %v4650 = vld [vmem:[#allocation5 + $0xe8] sm:$0xfe]
      %v4651 = vld [vmem:[#allocation5 + $0x108] sm:$0x1]
      %v4652 = vld [vmem:[#allocation5 + $0x110] sm:$0x1]
      %v4653 = vld [vmem:[#allocation5 + $0x118] sm:$0x1]
      %v4654 = vld [vmem:[#allocation5 + $0x120] sm:$0xfe]
      %v4655 = vld [vmem:[#allocation5 + $0x128] sm:$0xfe]
      %v4656 = vld [vmem:[#allocation5 + $0x130] sm:$0xfe]
      %v4657 = vld [vmem:[#allocation5 + $0x150] sm:$0x1]
      %v4658 = vld [vmem:[#allocation5 + $0x158] sm:$0x1]
      %v4659 = vld [vmem:[#allocation5 + $0x160] sm:$0x1]
      %v4660 = vld [vmem:[#allocation5 + $0x168] sm:$0xfe]
      %v4661 = vld [vmem:[#allocation5 + $0x170] sm:$0xfe]
      %v4662 = vld [vmem:[#allocation5 + $0x178] sm:$0xfe]
      %v4663 = vld [vmem:[#allocation5 + $0x198] sm:$0x1]
      %v4664 = vld [vmem:[#allocation5 + $0x1a0] sm:$0x1]
      %v4665 = vld [vmem:[#allocation5 + $0x1a8] sm:$0x1]
      %v4666 = vld [vmem:[#allocation5 + $0x1b0] sm:$0xfe]
      %v4667 = vld [vmem:[#allocation5 + $0x1b8] sm:$0xfe]
      %v4668 = vld [vmem:[#allocation5 + $0x1c0] sm:$0xfe]
      %v4669 = vld [vmem:[#allocation5 + $0x1e0] sm:$0x1]
      %v4670 = vld [vmem:[#allocation5 + $0x1e8] sm:$0x1]
      %v4671 = vld [vmem:[#allocation5 + $0x1f0] sm:$0x1]
      %v4672 = vld [vmem:[#allocation5 + $0x1f8] sm:$0xfe]
      %v4673 = vld [vmem:[#allocation5 + $0x200] sm:$0xfe]
      %v4674 = vld [vmem:[#allocation5 + $0x208] sm:$0xfe]
      %v4675 = vld [vmem:[#allocation5 + $0x228] sm:$0x1]
      %v4676 = vld [vmem:[#allocation5 + $0x230] sm:$0x1]
      %v4677 = vld [vmem:[#allocation5 + $0x238] sm:$0x1]
      %v4750 = vrot.slane %v4630, 1
      %v4751 = vrot.slane %v4585, 1
      %v4752 = vsel %vm1476, %v4750, %v4751
      %v4753 = vrot.slane %v4631, 1
      %v4754 = vrot.slane %v4586, 1
      %v4755 = vsel %vm1476, %v4753, %v4754
      %v4756 = vrot.slane %v4632, 1
      %v4757 = vrot.slane %v4587, 1
      %v4758 = vsel %vm1476, %v4756, %v4757
      %v4759 = vrot.slane %v4633, 1
      %v4760 = vsel %vm1476, %v4751, %v4759
      %v4761 = vrot.slane %v4634, 1
      %v4762 = vsel %vm1476, %v4754, %v4761
      %v4763 = vrot.slane %v4635, 1
      %v4764 = vsel %vm1476, %v4757, %v4763
      %v4765 = vrot.slane %v4636, 1
      %v4766 = vrot.slane %v4591, 1
      %v4767 = vsel %vm1476, %v4765, %v4766
      %v4768 = vrot.slane %v4637, 1
      %v4769 = vrot.slane %v4592, 1
      %v4770 = vsel %vm1476, %v4768, %v4769
      %v4771 = vrot.slane %v4638, 1
      %v4772 = vrot.slane %v4593, 1
      %v4773 = vsel %vm1476, %v4771, %v4772
      %v4774 = vrot.slane %v4639, 1
      %v4775 = vsel %vm1476, %v4766, %v4774
      %v4776 = vrot.slane %v4640, 1
      %v4777 = vsel %vm1476, %v4769, %v4776
      %v4778 = vrot.slane %v4641, 1
      %v4779 = vsel %vm1476, %v4772, %v4778
      %v4780 = vrot.slane %v4642, 1
      %v4781 = vrot.slane %v4597, 1
      %v4782 = vsel %vm1476, %v4780, %v4781
      %v4783 = vrot.slane %v4643, 1
      %v4784 = vrot.slane %v4598, 1
      %v4785 = vsel %vm1476, %v4783, %v4784
      %v4786 = vrot.slane %v4644, 1
      %v4787 = vrot.slane %v4599, 1
      %v4788 = vsel %vm1476, %v4786, %v4787
      %v4789 = vrot.slane %v4645, 1
      %v4790 = vsel %vm1476, %v4781, %v4789
      %v4791 = vrot.slane %v4646, 1
      %v4792 = vsel %vm1476, %v4784, %v4791
      %v4793 = vrot.slane %v4647, 1
      %v4794 = vsel %vm1476, %v4787, %v4793
      %v4795 = vrot.slane %v4648, 1
      %v4796 = vrot.slane %v4603, 1
      %v4797 = vsel %vm1476, %v4795, %v4796
      %v4798 = vrot.slane %v4649, 1
      %v4799 = vrot.slane %v4604, 1
      %v4800 = vsel %vm1476, %v4798, %v4799
      %v4801 = vrot.slane %v4650, 1
      %v4802 = vrot.slane %v4605, 1
      %v4803 = vsel %vm1476, %v4801, %v4802
      %v4804 = vrot.slane %v4651, 1
      %v4805 = vsel %vm1476, %v4796, %v4804
      %v4806 = vrot.slane %v4652, 1
      %v4807 = vsel %vm1476, %v4799, %v4806
      %v4808 = vrot.slane %v4653, 1
      %v4809 = vsel %vm1476, %v4802, %v4808
      %v4810 = vrot.slane %v4654, 1
      %v4811 = vrot.slane %v4609, 1
      %v4812 = vsel %vm1476, %v4810, %v4811
      %v4813 = vrot.slane %v4655, 1
      %v4814 = vrot.slane %v4610, 1
      %v4815 = vsel %vm1476, %v4813, %v4814
      %v4816 = vrot.slane %v4656, 1
      %v4817 = vrot.slane %v4611, 1
      %v4818 = vsel %vm1476, %v4816, %v4817
      %v4819 = vrot.slane %v4657, 1
      %v4820 = vsel %vm1476, %v4811, %v4819
      %v4821 = vrot.slane %v4658, 1
      %v4822 = vsel %vm1476, %v4814, %v4821
      %v4823 = vrot.slane %v4659, 1
      %v4824 = vsel %vm1476, %v4817, %v4823
      %v4825 = vrot.slane %v4660, 1
      %v4826 = vrot.slane %v4615, 1
      %v4827 = vsel %vm1476, %v4825, %v4826
      %v4828 = vrot.slane %v4661, 1
      %v4829 = vrot.slane %v4616, 1
      %v4830 = vsel %vm1476, %v4828, %v4829
      %v4831 = vrot.slane %v4662, 1
      %v4832 = vrot.slane %v4617, 1
      %v4833 = vsel %vm1476, %v4831, %v4832
      %v4834 = vrot.slane %v4663, 1
      %v4835 = vsel %vm1476, %v4826, %v4834
      %v4836 = vrot.slane %v4664, 1
      %v4837 = vsel %vm1476, %v4829, %v4836
      %v4838 = vrot.slane %v4665, 1
      %v4839 = vsel %vm1476, %v4832, %v4838
      %v4840 = vrot.slane %v4666, 1
      %v4841 = vrot.slane %v4621, 1
      %v4842 = vsel %vm1476, %v4840, %v4841
      %v4843 = vrot.slane %v4667, 1
      %v4844 = vrot.slane %v4622, 1
      %v4845 = vsel %vm1476, %v4843, %v4844
      %v4846 = vrot.slane %v4668, 1
      %v4847 = vrot.slane %v4623, 1
      %v4848 = vsel %vm1476, %v4846, %v4847
      %v4849 = vrot.slane %v4669, 1
      %v4850 = vsel %vm1476, %v4841, %v4849
      %v4851 = vrot.slane %v4670, 1
      %v4852 = vsel %vm1476, %v4844, %v4851
      %v4853 = vrot.slane %v4671, 1
      %v4854 = vsel %vm1476, %v4847, %v4853
      %v4855 = vrot.slane %v4672, 1
      %v4856 = vrot.slane %v4627, 1
      %v4857 = vsel %vm1476, %v4855, %v4856
      %v4858 = vrot.slane %v4673, 1
      %v4859 = vrot.slane %v4628, 1
      %v4860 = vsel %vm1476, %v4858, %v4859
      %v4861 = vrot.slane %v4674, 1
      %v4862 = vrot.slane %v4629, 1
      %v4863 = vsel %vm1476, %v4861, %v4862
      %v4864 = vrot.slane %v4675, 1
      %v4865 = vsel %vm1476, %v4856, %v4864
      %v4866 = vrot.slane %v4676, 1
      %v4867 = vsel %vm1476, %v4859, %v4866
      %v4868 = vrot.slane %v4677, 1
      %v4869 = vsel %vm1476, %v4862, %v4868
      %v4918 = vmax.f32 %v4582, %v4752
      %v4919 = vmax.f32 %v4583, %v4755
      %v4920 = vmax.f32 %v4584, %v4758
      %v4921 = vmax.f32 %v4585, %v4760
      %v4922 = vmax.f32 %v4586, %v4762
      %v4923 = vmax.f32 %v4587, %v4764
      %v4924 = vmax.f32 %v4588, %v4767
      %v4925 = vmax.f32 %v4589, %v4770
      %v4926 = vmax.f32 %v4590, %v4773
      %v4927 = vmax.f32 %v4591, %v4775
      %v4928 = vmax.f32 %v4592, %v4777
      %v4929 = vmax.f32 %v4593, %v4779
      %v4930 = vmax.f32 %v4594, %v4782
      %v4931 = vmax.f32 %v4595, %v4785
      %v4932 = vmax.f32 %v4596, %v4788
      %v4933 = vmax.f32 %v4597, %v4790
      %v4934 = vmax.f32 %v4598, %v4792
      %v4935 = vmax.f32 %v4599, %v4794
      %v4936 = vmax.f32 %v4600, %v4797
      %v4937 = vmax.f32 %v4601, %v4800
      %v4938 = vmax.f32 %v4602, %v4803
      %v4939 = vmax.f32 %v4603, %v4805
      %v4940 = vmax.f32 %v4604, %v4807
      %v4941 = vmax.f32 %v4605, %v4809
      %v4942 = vmax.f32 %v4606, %v4812
      %v4943 = vmax.f32 %v4607, %v4815
      %v4944 = vmax.f32 %v4608, %v4818
      %v4945 = vmax.f32 %v4609, %v4820
      %v4946 = vmax.f32 %v4610, %v4822
      %v4947 = vmax.f32 %v4611, %v4824
      %v4948 = vmax.f32 %v4612, %v4827
      %v4949 = vmax.f32 %v4613, %v4830
      %v4950 = vmax.f32 %v4614, %v4833
      %v4951 = vmax.f32 %v4615, %v4835
      %v4952 = vmax.f32 %v4616, %v4837
      %v4953 = vmax.f32 %v4617, %v4839
      %v4954 = vmax.f32 %v4618, %v4842
      %v4955 = vmax.f32 %v4619, %v4845
      %v4956 = vmax.f32 %v4620, %v4848
      %v4957 = vmax.f32 %v4621, %v4850
      %v4958 = vmax.f32 %v4622, %v4852
      %v4959 = vmax.f32 %v4623, %v4854
      %v4960 = vmax.f32 %v4624, %v4857
      %v4961 = vmax.f32 %v4625, %v4860
      %v4962 = vmax.f32 %v4626, %v4863
      %v4963 = vmax.f32 %v4627, %v4865
      %v4964 = vmax.f32 %v4628, %v4867
      %v4965 = vmax.f32 %v4629, %v4869
      %v4966 = vld [vmem:[#allocation5] sm:$0xfc]
      %v4967 = vld [vmem:[#allocation5 + $0x8] sm:$0xfc]
      %v4968 = vld [vmem:[#allocation5 + $0x10] sm:$0xfc]
      %v4969 = vld [vmem:[#allocation5 + $0x30] sm:$0x3]
      %v4970 = vld [vmem:[#allocation5 + $0x38] sm:$0x3]
      %v4971 = vld [vmem:[#allocation5 + $0x40] sm:$0x3]
      %v4972 = vld [vmem:[#allocation5 + $0x48] sm:$0xfc]
      %v4973 = vld [vmem:[#allocation5 + $0x50] sm:$0xfc]
      %v4974 = vld [vmem:[#allocation5 + $0x58] sm:$0xfc]
      %v4975 = vld [vmem:[#allocation5 + $0x78] sm:$0x3]
      %v4976 = vld [vmem:[#allocation5 + $0x80] sm:$0x3]
      %v4977 = vld [vmem:[#allocation5 + $0x88] sm:$0x3]
      %v4978 = vld [vmem:[#allocation5 + $0x90] sm:$0xfc]
      %v4979 = vld [vmem:[#allocation5 + $0x98] sm:$0xfc]
      %v4980 = vld [vmem:[#allocation5 + $0xa0] sm:$0xfc]
      %v4981 = vld [vmem:[#allocation5 + $0xc0] sm:$0x3]
      %v4982 = vld [vmem:[#allocation5 + $0xc8] sm:$0x3]
      %v4983 = vld [vmem:[#allocation5 + $0xd0] sm:$0x3]
      %v4984 = vld [vmem:[#allocation5 + $0xd8] sm:$0xfc]
      %v4985 = vld [vmem:[#allocation5 + $0xe0] sm:$0xfc]
      %v4986 = vld [vmem:[#allocation5 + $0xe8] sm:$0xfc]
      %v4987 = vld [vmem:[#allocation5 + $0x108] sm:$0x3]
      %v4988 = vld [vmem:[#allocation5 + $0x110] sm:$0x3]
      %v4989 = vld [vmem:[#allocation5 + $0x118] sm:$0x3]
      %v4990 = vld [vmem:[#allocation5 + $0x120] sm:$0xfc]
      %v4991 = vld [vmem:[#allocation5 + $0x128] sm:$0xfc]
      %v4992 = vld [vmem:[#allocation5 + $0x130] sm:$0xfc]
      %v4993 = vld [vmem:[#allocation5 + $0x150] sm:$0x3]
      %v4994 = vld [vmem:[#allocation5 + $0x158] sm:$0x3]
      %v4995 = vld [vmem:[#allocation5 + $0x160] sm:$0x3]
      %v4996 = vld [vmem:[#allocation5 + $0x168] sm:$0xfc]
      %v4997 = vld [vmem:[#allocation5 + $0x170] sm:$0xfc]
      %v4998 = vld [vmem:[#allocation5 + $0x178] sm:$0xfc]
      %v4999 = vld [vmem:[#allocation5 + $0x198] sm:$0x3]
      %v5000 = vld [vmem:[#allocation5 + $0x1a0] sm:$0x3]
      %v5001 = vld [vmem:[#allocation5 + $0x1a8] sm:$0x3]
      %v5002 = vld [vmem:[#allocation5 + $0x1b0] sm:$0xfc]
      %v5003 = vld [vmem:[#allocation5 + $0x1b8] sm:$0xfc]
      %v5004 = vld [vmem:[#allocation5 + $0x1c0] sm:$0xfc]
      %v5005 = vld [vmem:[#allocation5 + $0x1e0] sm:$0x3]
      %v5006 = vld [vmem:[#allocation5 + $0x1e8] sm:$0x3]
      %v5007 = vld [vmem:[#allocation5 + $0x1f0] sm:$0x3]
      %v5008 = vld [vmem:[#allocation5 + $0x1f8] sm:$0xfc]
      %v5009 = vld [vmem:[#allocation5 + $0x200] sm:$0xfc]
      %v5010 = vld [vmem:[#allocation5 + $0x208] sm:$0xfc]
      %v5011 = vld [vmem:[#allocation5 + $0x228] sm:$0x3]
      %v5012 = vld [vmem:[#allocation5 + $0x230] sm:$0x3]
      %v5013 = vld [vmem:[#allocation5 + $0x238] sm:$0x3]
      %v5062 = vrot.slane %v4966, 2
      %v5063 = vrot.slane %v4585, 2
      %v5064 = vsel %vm1685, %v5062, %v5063
      %v5065 = vrot.slane %v4967, 2
      %v5066 = vrot.slane %v4586, 2
      %v5067 = vsel %vm1685, %v5065, %v5066
      %v5068 = vrot.slane %v4968, 2
      %v5069 = vrot.slane %v4587, 2
      %v5070 = vsel %vm1685, %v5068, %v5069
      %v5071 = vrot.slane %v4969, 2
      %v5072 = vsel %vm1685, %v5063, %v5071
      %v5073 = vrot.slane %v4970, 2
      %v5074 = vsel %vm1685, %v5066, %v5073
      %v5075 = vrot.slane %v4971, 2
      %v5076 = vsel %vm1685, %v5069, %v5075
      %v5077 = vrot.slane %v4972, 2
      %v5078 = vrot.slane %v4591, 2
      %v5079 = vsel %vm1685, %v5077, %v5078
      %v5080 = vrot.slane %v4973, 2
      %v5081 = vrot.slane %v4592, 2
      %v5082 = vsel %vm1685, %v5080, %v5081
      %v5083 = vrot.slane %v4974, 2
      %v5084 = vrot.slane %v4593, 2
      %v5085 = vsel %vm1685, %v5083, %v5084
      %v5086 = vrot.slane %v4975, 2
      %v5087 = vsel %vm1685, %v5078, %v5086
      %v5088 = vrot.slane %v4976, 2
      %v5089 = vsel %vm1685, %v5081, %v5088
      %v5090 = vrot.slane %v4977, 2
      %v5091 = vsel %vm1685, %v5084, %v5090
      %v5092 = vrot.slane %v4978, 2
      %v5093 = vrot.slane %v4597, 2
      %v5094 = vsel %vm1685, %v5092, %v5093
      %v5095 = vrot.slane %v4979, 2
      %v5096 = vrot.slane %v4598, 2
      %v5097 = vsel %vm1685, %v5095, %v5096
      %v5098 = vrot.slane %v4980, 2
      %v5099 = vrot.slane %v4599, 2
      %v5100 = vsel %vm1685, %v5098, %v5099
      %v5101 = vrot.slane %v4981, 2
      %v5102 = vsel %vm1685, %v5093, %v5101
      %v5103 = vrot.slane %v4982, 2
      %v5104 = vsel %vm1685, %v5096, %v5103
      %v5105 = vrot.slane %v4983, 2
      %v5106 = vsel %vm1685, %v5099, %v5105
      %v5107 = vrot.slane %v4984, 2
      %v5108 = vrot.slane %v4603, 2
      %v5109 = vsel %vm1685, %v5107, %v5108
      %v5110 = vrot.slane %v4985, 2
      %v5111 = vrot.slane %v4604, 2
      %v5112 = vsel %vm1685, %v5110, %v5111
      %v5113 = vrot.slane %v4986, 2
      %v5114 = vrot.slane %v4605, 2
      %v5115 = vsel %vm1685, %v5113, %v5114
      %v5116 = vrot.slane %v4987, 2
      %v5117 = vsel %vm1685, %v5108, %v5116
      %v5118 = vrot.slane %v4988, 2
      %v5119 = vsel %vm1685, %v5111, %v5118
      %v5120 = vrot.slane %v4989, 2
      %v5121 = vsel %vm1685, %v5114, %v5120
      %v5122 = vrot.slane %v4990, 2
      %v5123 = vrot.slane %v4609, 2
      %v5124 = vsel %vm1685, %v5122, %v5123
      %v5125 = vrot.slane %v4991, 2
      %v5126 = vrot.slane %v4610, 2
      %v5127 = vsel %vm1685, %v5125, %v5126
      %v5128 = vrot.slane %v4992, 2
      %v5129 = vrot.slane %v4611, 2
      %v5130 = vsel %vm1685, %v5128, %v5129
      %v5131 = vrot.slane %v4993, 2
      %v5132 = vsel %vm1685, %v5123, %v5131
      %v5133 = vrot.slane %v4994, 2
      %v5134 = vsel %vm1685, %v5126, %v5133
      %v5135 = vrot.slane %v4995, 2
      %v5136 = vsel %vm1685, %v5129, %v5135
      %v5137 = vrot.slane %v4996, 2
      %v5138 = vrot.slane %v4615, 2
      %v5139 = vsel %vm1685, %v5137, %v5138
      %v5140 = vrot.slane %v4997, 2
      %v5141 = vrot.slane %v4616, 2
      %v5142 = vsel %vm1685, %v5140, %v5141
      %v5143 = vrot.slane %v4998, 2
      %v5144 = vrot.slane %v4617, 2
      %v5145 = vsel %vm1685, %v5143, %v5144
      %v5146 = vrot.slane %v4999, 2
      %v5147 = vsel %vm1685, %v5138, %v5146
      %v5148 = vrot.slane %v5000, 2
      %v5149 = vsel %vm1685, %v5141, %v5148
      %v5150 = vrot.slane %v5001, 2
      %v5151 = vsel %vm1685, %v5144, %v5150
      %v5152 = vrot.slane %v5002, 2
      %v5153 = vrot.slane %v4621, 2
      %v5154 = vsel %vm1685, %v5152, %v5153
      %v5155 = vrot.slane %v5003, 2
      %v5156 = vrot.slane %v4622, 2
      %v5157 = vsel %vm1685, %v5155, %v5156
      %v5158 = vrot.slane %v5004, 2
      %v5159 = vrot.slane %v4623, 2
      %v5160 = vsel %vm1685, %v5158, %v5159
      %v5161 = vrot.slane %v5005, 2
      %v5162 = vsel %vm1685, %v5153, %v5161
      %v5163 = vrot.slane %v5006, 2
      %v5164 = vsel %vm1685, %v5156, %v5163
      %v5165 = vrot.slane %v5007, 2
      %v5166 = vsel %vm1685, %v5159, %v5165
      %v5167 = vrot.slane %v5008, 2
      %v5168 = vrot.slane %v4627, 2
      %v5169 = vsel %vm1685, %v5167, %v5168
      %v5170 = vrot.slane %v5009, 2
      %v5171 = vrot.slane %v4628, 2
      %v5172 = vsel %vm1685, %v5170, %v5171
      %v5173 = vrot.slane %v5010, 2
      %v5174 = vrot.slane %v4629, 2
      %v5175 = vsel %vm1685, %v5173, %v5174
      %v5176 = vrot.slane %v5011, 2
      %v5177 = vsel %vm1685, %v5168, %v5176
      %v5178 = vrot.slane %v5012, 2
      %v5179 = vsel %vm1685, %v5171, %v5178
      %v5180 = vrot.slane %v5013, 2
      %v5181 = vsel %vm1685, %v5174, %v5180
      %v5230 = vmax.f32 %v4918, %v5064
      %v5231 = vmax.f32 %v4919, %v5067
      %v5232 = vmax.f32 %v4920, %v5070
      %v5233 = vmax.f32 %v4921, %v5072
      %v5234 = vmax.f32 %v4922, %v5074
      %v5235 = vmax.f32 %v4923, %v5076
      %v5236 = vmax.f32 %v4924, %v5079
      %v5237 = vmax.f32 %v4925, %v5082
      %v5238 = vmax.f32 %v4926, %v5085
      %v5239 = vmax.f32 %v4927, %v5087
      %v5240 = vmax.f32 %v4928, %v5089
      %v5241 = vmax.f32 %v4929, %v5091
      %v5242 = vmax.f32 %v4930, %v5094
      %v5243 = vmax.f32 %v4931, %v5097
      %v5244 = vmax.f32 %v4932, %v5100
      %v5245 = vmax.f32 %v4933, %v5102
      %v5246 = vmax.f32 %v4934, %v5104
      %v5247 = vmax.f32 %v4935, %v5106
      %v5248 = vmax.f32 %v4936, %v5109
      %v5249 = vmax.f32 %v4937, %v5112
      %v5250 = vmax.f32 %v4938, %v5115
      %v5251 = vmax.f32 %v4939, %v5117
      %v5252 = vmax.f32 %v4940, %v5119
      %v5253 = vmax.f32 %v4941, %v5121
      %v5254 = vmax.f32 %v4942, %v5124
      %v5255 = vmax.f32 %v4943, %v5127
      %v5256 = vmax.f32 %v4944, %v5130
      %v5257 = vmax.f32 %v4945, %v5132
      %v5258 = vmax.f32 %v4946, %v5134
      %v5259 = vmax.f32 %v4947, %v5136
      %v5260 = vmax.f32 %v4948, %v5139
      %v5261 = vmax.f32 %v4949, %v5142
      %v5262 = vmax.f32 %v4950, %v5145
      %v5263 = vmax.f32 %v4951, %v5147
      %v5264 = vmax.f32 %v4952, %v5149
      %v5265 = vmax.f32 %v4953, %v5151
      %v5266 = vmax.f32 %v4954, %v5154
      %v5267 = vmax.f32 %v4955, %v5157
      %v5268 = vmax.f32 %v4956, %v5160
      %v5269 = vmax.f32 %v4957, %v5162
      %v5270 = vmax.f32 %v4958, %v5164
      %v5271 = vmax.f32 %v4959, %v5166
      %v5272 = vmax.f32 %v4960, %v5169
      %v5273 = vmax.f32 %v4961, %v5172
      %v5274 = vmax.f32 %v4962, %v5175
      %v5275 = vmax.f32 %v4963, %v5177
      %v5276 = vmax.f32 %v4964, %v5179
      %v5277 = vmax.f32 %v4965, %v5181
      %5326 = vrot.lane.b32.xlu0 %v5230, 112
      %v5327 = vpop.permute.xlu0 %5326
      %5328 = vrot.lane.b32.xlu0 %v5231, 112
      %v5329 = vpop.permute.xlu0 %5328
      %5330 = vrot.lane.b32.xlu0 %v5232, 112
      %v5331 = vpop.permute.xlu0 %5330
      %5332 = vrot.lane.b32.xlu0 %v5233, 112
      %v5333 = vpop.permute.xlu0 %5332
      %5334 = vrot.lane.b32.xlu0 %v5234, 112
      %v5335 = vpop.permute.xlu0 %5334
      %5336 = vrot.lane.b32.xlu0 %v5235, 112
      %v5337 = vpop.permute.xlu0 %5336
      %5338 = vrot.lane.b32.xlu0 %v5236, 112
      %v5339 = vpop.permute.xlu0 %5338
      %5340 = vrot.lane.b32.xlu0 %v5237, 112
      %v5341 = vpop.permute.xlu0 %5340
      %5342 = vrot.lane.b32.xlu0 %v5238, 112
      %v5343 = vpop.permute.xlu0 %5342
      %5344 = vrot.lane.b32.xlu0 %v5239, 112
      %v5345 = vpop.permute.xlu0 %5344
      %5346 = vrot.lane.b32.xlu0 %v5240, 112
      %v5347 = vpop.permute.xlu0 %5346
      %5348 = vrot.lane.b32.xlu0 %v5241, 112
      %v5349 = vpop.permute.xlu0 %5348
      %5350 = vrot.lane.b32.xlu0 %v5242, 112
      %v5351 = vpop.permute.xlu0 %5350
      %5352 = vrot.lane.b32.xlu0 %v5243, 112
      %v5353 = vpop.permute.xlu0 %5352
      %5354 = vrot.lane.b32.xlu0 %v5244, 112
      %v5355 = vpop.permute.xlu0 %5354
      %5356 = vrot.lane.b32.xlu0 %v5245, 112
      %v5357 = vpop.permute.xlu0 %5356
      %5358 = vrot.lane.b32.xlu0 %v5246, 112
      %v5359 = vpop.permute.xlu0 %5358
      %5360 = vrot.lane.b32.xlu0 %v5247, 112
      %v5361 = vpop.permute.xlu0 %5360
      %5362 = vrot.lane.b32.xlu0 %v5248, 112
      %v5363 = vpop.permute.xlu0 %5362
      %5364 = vrot.lane.b32.xlu0 %v5249, 112
      %v5365 = vpop.permute.xlu0 %5364
      %5366 = vrot.lane.b32.xlu0 %v5250, 112
      %v5367 = vpop.permute.xlu0 %5366
      %5368 = vrot.lane.b32.xlu0 %v5251, 112
      %v5369 = vpop.permute.xlu0 %5368
      %5370 = vrot.lane.b32.xlu0 %v5252, 112
      %v5371 = vpop.permute.xlu0 %5370
      %5372 = vrot.lane.b32.xlu0 %v5253, 112
      %v5373 = vpop.permute.xlu0 %5372
      %5374 = vrot.lane.b32.xlu0 %v5254, 112
      %v5375 = vpop.permute.xlu0 %5374
      %5376 = vrot.lane.b32.xlu0 %v5255, 112
      %v5377 = vpop.permute.xlu0 %5376
      %5378 = vrot.lane.b32.xlu0 %v5256, 112
      %v5379 = vpop.permute.xlu0 %5378
      %5380 = vrot.lane.b32.xlu0 %v5257, 112
      %v5381 = vpop.permute.xlu0 %5380
      %5382 = vrot.lane.b32.xlu0 %v5258, 112
      %v5383 = vpop.permute.xlu0 %5382
      %5384 = vrot.lane.b32.xlu0 %v5259, 112
      %v5385 = vpop.permute.xlu0 %5384
      %5386 = vrot.lane.b32.xlu0 %v5260, 112
      %v5387 = vpop.permute.xlu0 %5386
      %5388 = vrot.lane.b32.xlu0 %v5261, 112
      %v5389 = vpop.permute.xlu0 %5388
      %5390 = vrot.lane.b32.xlu0 %v5262, 112
      %v5391 = vpop.permute.xlu0 %5390
      %5392 = vrot.lane.b32.xlu0 %v5263, 112
      %v5393 = vpop.permute.xlu0 %5392
      %5394 = vrot.lane.b32.xlu0 %v5264, 112
      %v5395 = vpop.permute.xlu0 %5394
      %5396 = vrot.lane.b32.xlu0 %v5265, 112
      %v5397 = vpop.permute.xlu0 %5396
      %5398 = vrot.lane.b32.xlu0 %v5266, 112
      %v5399 = vpop.permute.xlu0 %5398
      %5400 = vrot.lane.b32.xlu0 %v5267, 112
      %v5401 = vpop.permute.xlu0 %5400
      %5402 = vrot.lane.b32.xlu0 %v5268, 112
      %v5403 = vpop.permute.xlu0 %5402
      %5404 = vrot.lane.b32.xlu0 %v5269, 112
      %v5405 = vpop.permute.xlu0 %5404
      %5406 = vrot.lane.b32.xlu0 %v5270, 112
      %v5407 = vpop.permute.xlu0 %5406
      %5408 = vrot.lane.b32.xlu0 %v5271, 112
      %v5409 = vpop.permute.xlu0 %5408
      %5410 = vrot.lane.b32.xlu0 %v5272, 112
      %v5411 = vpop.permute.xlu0 %5410
      %5412 = vrot.lane.b32.xlu0 %v5273, 112
      %v5413 = vpop.permute.xlu0 %5412
      %5414 = vrot.lane.b32.xlu0 %v5274, 112
      %v5415 = vpop.permute.xlu0 %5414
      %5416 = vrot.lane.b32.xlu0 %v5275, 112
      %v5417 = vpop.permute.xlu0 %5416
      %5418 = vrot.lane.b32.xlu0 %v5276, 112
      %v5419 = vpop.permute.xlu0 %5418
      %5420 = vrot.lane.b32.xlu0 %v5277, 112
      %v5421 = vpop.permute.xlu0 %5420
      %v5422 = vsel %vm2039, %v5327, %v5329
      %v5423 = vsel %vm2039, %v5329, %v5331
      %v5424 = vsel %vm2039, %v5333, %v5335
      %v5425 = vsel %vm2039, %v5335, %v5337
      %v5426 = vsel %vm2039, %v5339, %v5341
      %v5427 = vsel %vm2039, %v5341, %v5343
      %v5428 = vsel %vm2039, %v5345, %v5347
      %v5429 = vsel %vm2039, %v5347, %v5349
      %v5430 = vsel %vm2039, %v5351, %v5353
      %v5431 = vsel %vm2039, %v5353, %v5355
      %v5432 = vsel %vm2039, %v5357, %v5359
      %v5433 = vsel %vm2039, %v5359, %v5361
      %v5434 = vsel %vm2039, %v5363, %v5365
      %v5435 = vsel %vm2039, %v5365, %v5367
      %v5436 = vsel %vm2039, %v5369, %v5371
      %v5437 = vsel %vm2039, %v5371, %v5373
      %v5438 = vsel %vm2039, %v5375, %v5377
      %v5439 = vsel %vm2039, %v5377, %v5379
      %v5440 = vsel %vm2039, %v5381, %v5383
      %v5441 = vsel %vm2039, %v5383, %v5385
      %v5442 = vsel %vm2039, %v5387, %v5389
      %v5443 = vsel %vm2039, %v5389, %v5391
      %v5444 = vsel %vm2039, %v5393, %v5395
      %v5445 = vsel %vm2039, %v5395, %v5397
      %v5446 = vsel %vm2039, %v5399, %v5401
      %v5447 = vsel %vm2039, %v5401, %v5403
      %v5448 = vsel %vm2039, %v5405, %v5407
      %v5449 = vsel %vm2039, %v5407, %v5409
      %v5450 = vsel %vm2039, %v5411, %v5413
      %v5451 = vsel %vm2039, %v5413, %v5415
      %v5452 = vsel %vm2039, %v5417, %v5419
      %v5453 = vsel %vm2039, %v5419, %v5421
      %v5486 = vmax.f32 %v5230, %v5422
      %v5487 = vmax.f32 %v5231, %v5423
      %v5488 = vmax.f32 %v5233, %v5424
      %v5489 = vmax.f32 %v5234, %v5425
      %v5490 = vmax.f32 %v5236, %v5426
      %v5491 = vmax.f32 %v5237, %v5427
      %v5492 = vmax.f32 %v5239, %v5428
      %v5493 = vmax.f32 %v5240, %v5429
      %v5494 = vmax.f32 %v5242, %v5430
      %v5495 = vmax.f32 %v5243, %v5431
      %v5496 = vmax.f32 %v5245, %v5432
      %v5497 = vmax.f32 %v5246, %v5433
      %v5498 = vmax.f32 %v5248, %v5434
      %v5499 = vmax.f32 %v5249, %v5435
      %v5500 = vmax.f32 %v5251, %v5436
      %v5501 = vmax.f32 %v5252, %v5437
      %v5502 = vmax.f32 %v5254, %v5438
      %v5503 = vmax.f32 %v5255, %v5439
      %v5504 = vmax.f32 %v5257, %v5440
      %v5505 = vmax.f32 %v5258, %v5441
      %v5506 = vmax.f32 %v5260, %v5442
      %v5507 = vmax.f32 %v5261, %v5443
      %v5508 = vmax.f32 %v5263, %v5444
      %v5509 = vmax.f32 %v5264, %v5445
      %v5510 = vmax.f32 %v5266, %v5446
      %v5511 = vmax.f32 %v5267, %v5447
      %v5512 = vmax.f32 %v5269, %v5448
      %v5513 = vmax.f32 %v5270, %v5449
      %v5514 = vmax.f32 %v5272, %v5450
      %v5515 = vmax.f32 %v5273, %v5451
      %v5516 = vmax.f32 %v5275, %v5452
      %v5517 = vmax.f32 %v5276, %v5453
      %5518 = vrot.lane.b32.xlu0 %v5230, 96
      %v5519 = vpop.permute.xlu0 %5518
      %5520 = vrot.lane.b32.xlu0 %v5231, 96
      %v5521 = vpop.permute.xlu0 %5520
      %5522 = vrot.lane.b32.xlu0 %v5232, 96
      %v5523 = vpop.permute.xlu0 %5522
      %5524 = vrot.lane.b32.xlu0 %v5233, 96
      %v5525 = vpop.permute.xlu0 %5524
      %5526 = vrot.lane.b32.xlu0 %v5234, 96
      %v5527 = vpop.permute.xlu0 %5526
      %5528 = vrot.lane.b32.xlu0 %v5235, 96
      %v5529 = vpop.permute.xlu0 %5528
      %5530 = vrot.lane.b32.xlu0 %v5236, 96
      %v5531 = vpop.permute.xlu0 %5530
      %5532 = vrot.lane.b32.xlu0 %v5237, 96
      %v5533 = vpop.permute.xlu0 %5532
      %5534 = vrot.lane.b32.xlu0 %v5238, 96
      %v5535 = vpop.permute.xlu0 %5534
      %5536 = vrot.lane.b32.xlu0 %v5239, 96
      %v5537 = vpop.permute.xlu0 %5536
      %5538 = vrot.lane.b32.xlu0 %v5240, 96
      %v5539 = vpop.permute.xlu0 %5538
      %5540 = vrot.lane.b32.xlu0 %v5241, 96
      %v5541 = vpop.permute.xlu0 %5540
      %5542 = vrot.lane.b32.xlu0 %v5242, 96
      %v5543 = vpop.permute.xlu0 %5542
      %5544 = vrot.lane.b32.xlu0 %v5243, 96
      %v5545 = vpop.permute.xlu0 %5544
      %5546 = vrot.lane.b32.xlu0 %v5244, 96
      %v5547 = vpop.permute.xlu0 %5546
      %5548 = vrot.lane.b32.xlu0 %v5245, 96
      %v5549 = vpop.permute.xlu0 %5548
      %5550 = vrot.lane.b32.xlu0 %v5246, 96
      %v5551 = vpop.permute.xlu0 %5550
      %5552 = vrot.lane.b32.xlu0 %v5247, 96
      %v5553 = vpop.permute.xlu0 %5552
      %5554 = vrot.lane.b32.xlu0 %v5248, 96
      %v5555 = vpop.permute.xlu0 %5554
      %5556 = vrot.lane.b32.xlu0 %v5249, 96
      %v5557 = vpop.permute.xlu0 %5556
      %5558 = vrot.lane.b32.xlu0 %v5250, 96
      %v5559 = vpop.permute.xlu0 %5558
      %5560 = vrot.lane.b32.xlu0 %v5251, 96
      %v5561 = vpop.permute.xlu0 %5560
      %5562 = vrot.lane.b32.xlu0 %v5252, 96
      %v5563 = vpop.permute.xlu0 %5562
      %5564 = vrot.lane.b32.xlu0 %v5253, 96
      %v5565 = vpop.permute.xlu0 %5564
      %5566 = vrot.lane.b32.xlu0 %v5254, 96
      %v5567 = vpop.permute.xlu0 %5566
      %5568 = vrot.lane.b32.xlu0 %v5255, 96
      %v5569 = vpop.permute.xlu0 %5568
      %5570 = vrot.lane.b32.xlu0 %v5256, 96
      %v5571 = vpop.permute.xlu0 %5570
      %5572 = vrot.lane.b32.xlu0 %v5257, 96
      %v5573 = vpop.permute.xlu0 %5572
      %5574 = vrot.lane.b32.xlu0 %v5258, 96
      %v5575 = vpop.permute.xlu0 %5574
      %5576 = vrot.lane.b32.xlu0 %v5259, 96
      %v5577 = vpop.permute.xlu0 %5576
      %5578 = vrot.lane.b32.xlu0 %v5260, 96
      %v5579 = vpop.permute.xlu0 %5578
      %5580 = vrot.lane.b32.xlu0 %v5261, 96
      %v5581 = vpop.permute.xlu0 %5580
      %5582 = vrot.lane.b32.xlu0 %v5262, 96
      %v5583 = vpop.permute.xlu0 %5582
      %5584 = vrot.lane.b32.xlu0 %v5263, 96
      %v5585 = vpop.permute.xlu0 %5584
      %5586 = vrot.lane.b32.xlu0 %v5264, 96
      %v5587 = vpop.permute.xlu0 %5586
      %5588 = vrot.lane.b32.xlu0 %v5265, 96
      %v5589 = vpop.permute.xlu0 %5588
      %5590 = vrot.lane.b32.xlu0 %v5266, 96
      %v5591 = vpop.permute.xlu0 %5590
      %5592 = vrot.lane.b32.xlu0 %v5267, 96
      %v5593 = vpop.permute.xlu0 %5592
      %5594 = vrot.lane.b32.xlu0 %v5268, 96
      %v5595 = vpop.permute.xlu0 %5594
      %5596 = vrot.lane.b32.xlu0 %v5269, 96
      %v5597 = vpop.permute.xlu0 %5596
      %5598 = vrot.lane.b32.xlu0 %v5270, 96
      %v5599 = vpop.permute.xlu0 %5598
      %5600 = vrot.lane.b32.xlu0 %v5271, 96
      %v5601 = vpop.permute.xlu0 %5600
      %5602 = vrot.lane.b32.xlu0 %v5272, 96
      %v5603 = vpop.permute.xlu0 %5602
      %5604 = vrot.lane.b32.xlu0 %v5273, 96
      %v5605 = vpop.permute.xlu0 %5604
      %5606 = vrot.lane.b32.xlu0 %v5274, 96
      %v5607 = vpop.permute.xlu0 %5606
      %5608 = vrot.lane.b32.xlu0 %v5275, 96
      %v5609 = vpop.permute.xlu0 %5608
      %5610 = vrot.lane.b32.xlu0 %v5276, 96
      %v5611 = vpop.permute.xlu0 %5610
      %5612 = vrot.lane.b32.xlu0 %v5277, 96
      %v5613 = vpop.permute.xlu0 %5612
      %vm5614 = vcmask 785408
      %v5615 = vsel %vm5614, %v5519, %v5521
      %v5616 = vsel %vm5614, %v5521, %v5523
      %v5617 = vsel %vm5614, %v5525, %v5527
      %v5618 = vsel %vm5614, %v5527, %v5529
      %v5619 = vsel %vm5614, %v5531, %v5533
      %v5620 = vsel %vm5614, %v5533, %v5535
      %v5621 = vsel %vm5614, %v5537, %v5539
      %v5622 = vsel %vm5614, %v5539, %v5541
      %v5623 = vsel %vm5614, %v5543, %v5545
      %v5624 = vsel %vm5614, %v5545, %v5547
      %v5625 = vsel %vm5614, %v5549, %v5551
      %v5626 = vsel %vm5614, %v5551, %v5553
      %v5627 = vsel %vm5614, %v5555, %v5557
      %v5628 = vsel %vm5614, %v5557, %v5559
      %v5629 = vsel %vm5614, %v5561, %v5563
      %v5630 = vsel %vm5614, %v5563, %v5565
      %v5631 = vsel %vm5614, %v5567, %v5569
      %v5632 = vsel %vm5614, %v5569, %v5571
      %v5633 = vsel %vm5614, %v5573, %v5575
      %v5634 = vsel %vm5614, %v5575, %v5577
      %v5635 = vsel %vm5614, %v5579, %v5581
      %v5636 = vsel %vm5614, %v5581, %v5583
      %v5637 = vsel %vm5614, %v5585, %v5587
      %v5638 = vsel %vm5614, %v5587, %v5589
      %v5639 = vsel %vm5614, %v5591, %v5593
      %v5640 = vsel %vm5614, %v5593, %v5595
      %v5641 = vsel %vm5614, %v5597, %v5599
      %v5642 = vsel %vm5614, %v5599, %v5601
      %v5643 = vsel %vm5614, %v5603, %v5605
      %v5644 = vsel %vm5614, %v5605, %v5607
      %v5645 = vsel %vm5614, %v5609, %v5611
      %v5646 = vsel %vm5614, %v5611, %v5613
      %v5679 = vmax.f32 %v5486, %v5615
      %v5680 = vmax.f32 %v5487, %v5616
      %v5681 = vmax.f32 %v5488, %v5617
      %v5682 = vmax.f32 %v5489, %v5618
      %v5683 = vmax.f32 %v5490, %v5619
      %v5684 = vmax.f32 %v5491, %v5620
      %v5685 = vmax.f32 %v5492, %v5621
      %v5686 = vmax.f32 %v5493, %v5622
      %v5687 = vmax.f32 %v5494, %v5623
      %v5688 = vmax.f32 %v5495, %v5624
      %v5689 = vmax.f32 %v5496, %v5625
      %v5690 = vmax.f32 %v5497, %v5626
      %v5691 = vmax.f32 %v5498, %v5627
      %v5692 = vmax.f32 %v5499, %v5628
      %v5693 = vmax.f32 %v5500, %v5629
      %v5694 = vmax.f32 %v5501, %v5630
      %v5695 = vmax.f32 %v5502, %v5631
      %v5696 = vmax.f32 %v5503, %v5632
      %v5697 = vmax.f32 %v5504, %v5633
      %v5698 = vmax.f32 %v5505, %v5634
      %v5699 = vmax.f32 %v5506, %v5635
      %v5700 = vmax.f32 %v5507, %v5636
      %v5701 = vmax.f32 %v5508, %v5637
      %v5702 = vmax.f32 %v5509, %v5638
      %v5703 = vmax.f32 %v5510, %v5639
      %v5704 = vmax.f32 %v5511, %v5640
      %v5705 = vmax.f32 %v5512, %v5641
      %v5706 = vmax.f32 %v5513, %v5642
      %v5707 = vmax.f32 %v5514, %v5643
      %v5708 = vmax.f32 %v5515, %v5644
      %v5709 = vmax.f32 %v5516, %v5645
      %v5710 = vmax.f32 %v5517, %v5646
      %v5711 = vadd.f32 %v5679, %v5681
      %v5712 = vrot.slane %v5711, 4
      %v5713 = vadd.f32 %v5711, %v5712
      %v5714 = vrot.slane %v5713, 2
      %v5715 = vadd.f32 %v5713, %v5714
      %v5716 = vrot.slane %v5715, 1
      %v5717 = vadd.f32 %v5715, %v5716
      %v5718 = vadd.f32 %v5680, %v5682
      %v5719 = vrot.slane %v5718, 4
      %v5720 = vadd.f32 %v5718, %v5719
      %v5721 = vrot.slane %v5720, 2
      %v5722 = vadd.f32 %v5720, %v5721
      %v5723 = vrot.slane %v5722, 1
      %v5724 = vadd.f32 %v5722, %v5723
      %v5725 = vadd.f32 %v5683, %v5685
      %v5726 = vrot.slane %v5725, 4
      %v5727 = vadd.f32 %v5725, %v5726
      %v5728 = vrot.slane %v5727, 2
      %v5729 = vadd.f32 %v5727, %v5728
      %v5730 = vrot.slane %v5729, 1
      %v5731 = vadd.f32 %v5729, %v5730
      %v5732 = vadd.f32 %v5684, %v5686
      %v5733 = vrot.slane %v5732, 4
      %v5734 = vadd.f32 %v5732, %v5733
      %v5735 = vrot.slane %v5734, 2
      %v5736 = vadd.f32 %v5734, %v5735
      %v5737 = vrot.slane %v5736, 1
      %v5738 = vadd.f32 %v5736, %v5737
      %v5739 = vadd.f32 %v5687, %v5689
      %v5740 = vrot.slane %v5739, 4
      %v5741 = vadd.f32 %v5739, %v5740
      %v5742 = vrot.slane %v5741, 2
      %v5743 = vadd.f32 %v5741, %v5742
      %v5744 = vrot.slane %v5743, 1
      %v5745 = vadd.f32 %v5743, %v5744
      %v5746 = vadd.f32 %v5688, %v5690
      %v5747 = vrot.slane %v5746, 4
      %v5748 = vadd.f32 %v5746, %v5747
      %v5749 = vrot.slane %v5748, 2
      %v5750 = vadd.f32 %v5748, %v5749
      %v5751 = vrot.slane %v5750, 1
      %v5752 = vadd.f32 %v5750, %v5751
      %v5753 = vadd.f32 %v5691, %v5693
      %v5754 = vrot.slane %v5753, 4
      %v5755 = vadd.f32 %v5753, %v5754
      %v5756 = vrot.slane %v5755, 2
      %v5757 = vadd.f32 %v5755, %v5756
      %v5758 = vrot.slane %v5757, 1
      %v5759 = vadd.f32 %v5757, %v5758
      %v5760 = vadd.f32 %v5692, %v5694
      %v5761 = vrot.slane %v5760, 4
      %v5762 = vadd.f32 %v5760, %v5761
      %v5763 = vrot.slane %v5762, 2
      %v5764 = vadd.f32 %v5762, %v5763
      %v5765 = vrot.slane %v5764, 1
      %v5766 = vadd.f32 %v5764, %v5765
      %v5767 = vadd.f32 %v5695, %v5697
      %v5768 = vrot.slane %v5767, 4
      %v5769 = vadd.f32 %v5767, %v5768
      %v5770 = vrot.slane %v5769, 2
      %v5771 = vadd.f32 %v5769, %v5770
      %v5772 = vrot.slane %v5771, 1
      %v5773 = vadd.f32 %v5771, %v5772
      %v5774 = vadd.f32 %v5696, %v5698
      %v5775 = vrot.slane %v5774, 4
      %v5776 = vadd.f32 %v5774, %v5775
      %v5777 = vrot.slane %v5776, 2
      %v5778 = vadd.f32 %v5776, %v5777
      %v5779 = vrot.slane %v5778, 1
      %v5780 = vadd.f32 %v5778, %v5779
      %v5781 = vadd.f32 %v5699, %v5701
      %v5782 = vrot.slane %v5781, 4
      %v5783 = vadd.f32 %v5781, %v5782
      %v5784 = vrot.slane %v5783, 2
      %v5785 = vadd.f32 %v5783, %v5784
      %v5786 = vrot.slane %v5785, 1
      %v5787 = vadd.f32 %v5785, %v5786
      %v5788 = vadd.f32 %v5700, %v5702
      %v5789 = vrot.slane %v5788, 4
      %v5790 = vadd.f32 %v5788, %v5789
      %v5791 = vrot.slane %v5790, 2
      %v5792 = vadd.f32 %v5790, %v5791
      %v5793 = vrot.slane %v5792, 1
      %v5794 = vadd.f32 %v5792, %v5793
      %v5795 = vadd.f32 %v5703, %v5705
      %v5796 = vrot.slane %v5795, 4
      %v5797 = vadd.f32 %v5795, %v5796
      %v5798 = vrot.slane %v5797, 2
      %v5799 = vadd.f32 %v5797, %v5798
      %v5800 = vrot.slane %v5799, 1
      %v5801 = vadd.f32 %v5799, %v5800
      %v5802 = vadd.f32 %v5704, %v5706
      %v5803 = vrot.slane %v5802, 4
      %v5804 = vadd.f32 %v5802, %v5803
      %v5805 = vrot.slane %v5804, 2
      %v5806 = vadd.f32 %v5804, %v5805
      %v5807 = vrot.slane %v5806, 1
      %v5808 = vadd.f32 %v5806, %v5807
      %v5809 = vadd.f32 %v5707, %v5709
      %v5810 = vrot.slane %v5809, 4
      %v5811 = vadd.f32 %v5809, %v5810
      %v5812 = vrot.slane %v5811, 2
      %v5813 = vadd.f32 %v5811, %v5812
      %v5814 = vrot.slane %v5813, 1
      %v5815 = vadd.f32 %v5813, %v5814
      %v5816 = vadd.f32 %v5708, %v5710
      %v5817 = vrot.slane %v5816, 4
      %v5818 = vadd.f32 %v5816, %v5817
      %v5819 = vrot.slane %v5818, 2
      %v5820 = vadd.f32 %v5818, %v5819
      %v5821 = vrot.slane %v5820, 1
      %v5822 = vadd.f32 %v5820, %v5821
      %v5823 = vrcp.pop 16.0
      %v5824 = vmul.f32 16.0, %v5823
      %v5825 = vsub.f32 1.0, %v5824
      %v5826 = vmul.f32 %v5823, %v5825
      %v5827 = vadd.f32 %v5823, %v5826
      %vm5828 = vweird.f32 %v5823
      %v5829 = vsel %vm5828, %v5823, %v5827
      %v5830 = vmul.f32 %v5717, %v5829
      %v5831 = vmul.f32 %v5724, %v5829
      %v5832 = vmul.f32 %v5731, %v5829
      %v5833 = vmul.f32 %v5738, %v5829
      %v5834 = vmul.f32 %v5745, %v5829
      %v5835 = vmul.f32 %v5752, %v5829
      %v5836 = vmul.f32 %v5759, %v5829
      %v5837 = vmul.f32 %v5766, %v5829
      %v5838 = vmul.f32 %v5773, %v5829
      %v5839 = vmul.f32 %v5780, %v5829
      %v5840 = vmul.f32 %v5787, %v5829
      %v5841 = vmul.f32 %v5794, %v5829
      %v5842 = vmul.f32 %v5801, %v5829
      %v5843 = vmul.f32 %v5808, %v5829
      %v5844 = vmul.f32 %v5815, %v5829
      %v5845 = vmul.f32 %v5822, %v5829
      %v5846 = vpack.c.bf16 %v5830, %v5830
      %v5847 = vpack.c.bf16 %v5831, %v5831
      %v5848 = vpack.c.bf16 %v5832, %v5832
      %v5849 = vpack.c.bf16 %v5833, %v5833
      %v5850 = vpack.c.bf16 %v5834, %v5834
      %v5851 = vpack.c.bf16 %v5835, %v5835
      %v5852 = vpack.c.bf16 %v5836, %v5836
      %v5853 = vpack.c.bf16 %v5837, %v5837
      %v5854 = vpack.c.bf16 %v5838, %v5838
      %v5855 = vpack.c.bf16 %v5839, %v5839
      %v5856 = vpack.c.bf16 %v5840, %v5840
      %v5857 = vpack.c.bf16 %v5841, %v5841
      %v5858 = vpack.c.bf16 %v5842, %v5842
      %v5859 = vpack.c.bf16 %v5843, %v5843
      %v5860 = vpack.c.bf16 %v5844, %v5844
      %v5861 = vpack.c.bf16 %v5845, %v5845
      %v5862 = vld [vmem:[%s9] sm:$0xf]
      %v5863 = vld [vmem:[%s9 + $0x4] sm:$0xf]
      %v5864 = vld [vmem:[%s9 + $0x8] sm:$0xf]
      %v5865 = vld [vmem:[%s9 + $0xc] sm:$0xf]
      %v5866 = vld [vmem:[%s9 + $0x10] sm:$0xf]
      %v5867 = vld [vmem:[%s9 + $0x14] sm:$0xf]
      %v5868 = vld [vmem:[%s9 + $0x18] sm:$0xf]
      %v5869 = vld [vmem:[%s9 + $0x1c] sm:$0xf]
      %v5870 = vld [vmem:[%s9 + $0x20] sm:$0xf]
      %v5871 = vld [vmem:[%s9 + $0x24] sm:$0xf]
      %v5872 = vld [vmem:[%s9 + $0x28] sm:$0xf]
      %v5873 = vld [vmem:[%s9 + $0x2c] sm:$0xf]
      %v5874 = vld [vmem:[%s9 + $0x30] sm:$0xf]
      %v5875 = vld [vmem:[%s9 + $0x34] sm:$0xf]
      %v5876 = vld [vmem:[%s9 + $0x38] sm:$0xf]
      %v5877 = vld [vmem:[%s9 + $0x3c] sm:$0xf]
      %v5878 = vld [vmem:[%s9 + $0x40] sm:$0xf]
      %v5879 = vld [vmem:[%s9 + $0x44] sm:$0xf]
      %v5880 = vld [vmem:[%s9 + $0x48] sm:$0xf]
      %v5881 = vld [vmem:[%s9 + $0x4c] sm:$0xf]
      %v5882 = vld [vmem:[%s9 + $0x50] sm:$0xf]
      %v5883 = vld [vmem:[%s9 + $0x54] sm:$0xf]
      %v5884 = vld [vmem:[%s9 + $0x58] sm:$0xf]
      %v5885 = vld [vmem:[%s9 + $0x5c] sm:$0xf]
      %v5886 = vld [vmem:[%s9 + $0x60] sm:$0xf]
      %v5887 = vld [vmem:[%s9 + $0x64] sm:$0xf]
      %v5888 = vld [vmem:[%s9 + $0x68] sm:$0xf]
      %v5889 = vld [vmem:[%s9 + $0x6c] sm:$0xf]
      %v5890 = vld [vmem:[%s9 + $0x70] sm:$0xf]
      %v5891 = vld [vmem:[%s9 + $0x74] sm:$0xf]
      %v5892 = vld [vmem:[%s9 + $0x78] sm:$0xf]
      %v5893 = vld [vmem:[%s9 + $0x7c] sm:$0xf]
      %v5894 = vld [vmem:[%s10] sm:$0x1]
      %v5896 = vperm.slane %v5894, 0
      %v5914 = vunpack.c.l.b16 %v5846
      %v5915 = vunpack.c.l.b16 %v5847
      %v5916 = vunpack.c.l.b16 %v5848
      %v5917 = vunpack.c.l.b16 %v5849
      %v5918 = vunpack.c.l.b16 %v5850
      %v5919 = vunpack.c.l.b16 %v5851
      %v5920 = vunpack.c.l.b16 %v5852
      %v5921 = vunpack.c.l.b16 %v5853
      %v5922 = vunpack.c.l.b16 %v5854
      %v5923 = vunpack.c.l.b16 %v5855
      %v5924 = vunpack.c.l.b16 %v5856
      %v5925 = vunpack.c.l.b16 %v5857
      %v5926 = vunpack.c.l.b16 %v5858
      %v5927 = vunpack.c.l.b16 %v5859
      %v5928 = vunpack.c.l.b16 %v5860
      %v5929 = vunpack.c.l.b16 %v5861
      %vm5930 = vcmask 1041409
      %v5931 = vsel %vm5930, %v5916, %v5914
      %vm5932 = vcmask 1042434
      %v5933 = vsel %vm5932, %v5918, %v5931
      %vm5934 = vcmask 1043459
      %v5935 = vsel %vm5934, %v5920, %v5933
      %vm5936 = vcmask 1044484
      %v5937 = vsel %vm5936, %v5922, %v5935
      %vm5938 = vcmask 1045509
      %v5939 = vsel %vm5938, %v5924, %v5937
      %vm5940 = vcmask 1046534
      %v5941 = vsel %vm5940, %v5926, %v5939
      %vm5942 = vcmask 1047559
      %v5943 = vsel %vm5942, %v5928, %v5941
      %v5944 = vsel %vm5930, %v5917, %v5915
      %v5945 = vsel %vm5932, %v5919, %v5944
      %v5946 = vsel %vm5934, %v5921, %v5945
      %v5947 = vsel %vm5936, %v5923, %v5946
      %v5948 = vsel %vm5938, %v5925, %v5947
      %v5949 = vsel %vm5940, %v5927, %v5948
      %v5950 = vsel %vm5942, %v5929, %v5949
      %v5951 = vpack.c.b16 %v5943, %v5943
      %v5952 = vpack.c.b16 %v5950, %v5950
      %v5987 = vunpack.c.l.b16 %v5862
      %v5988 = vunpack.c.l.b16 %v5863
      %v5989 = vunpack.c.l.b16 %v5864
      %v5990 = vunpack.c.l.b16 %v5865
      %v5991 = vunpack.c.l.b16 %v5866
      %v5992 = vunpack.c.l.b16 %v5867
      %v5993 = vunpack.c.l.b16 %v5868
      %v5994 = vunpack.c.l.b16 %v5869
      %v5995 = vunpack.c.l.b16 %v5870
      %v5996 = vunpack.c.l.b16 %v5871
      %v5997 = vunpack.c.l.b16 %v5872
      %v5998 = vunpack.c.l.b16 %v5873
      %v5999 = vunpack.c.l.b16 %v5874
      %v6000 = vunpack.c.l.b16 %v5875
      %v6001 = vunpack.c.l.b16 %v5876
      %v6002 = vunpack.c.l.b16 %v5877
      %v6003 = vunpack.c.l.b16 %v5878
      %v6004 = vunpack.c.l.b16 %v5879
      %v6005 = vunpack.c.l.b16 %v5880
      %v6006 = vunpack.c.l.b16 %v5881
      %v6007 = vunpack.c.l.b16 %v5882
      %v6008 = vunpack.c.l.b16 %v5883
      %v6009 = vunpack.c.l.b16 %v5884
      %v6010 = vunpack.c.l.b16 %v5885
      %v6011 = vunpack.c.l.b16 %v5886
      %v6012 = vunpack.c.l.b16 %v5887
      %v6013 = vunpack.c.l.b16 %v5888
      %v6014 = vunpack.c.l.b16 %v5889
      %v6015 = vunpack.c.l.b16 %v5890
      %v6016 = vunpack.c.l.b16 %v5891
      %v6017 = vunpack.c.l.b16 %v5892
      %v6018 = vunpack.c.l.b16 %v5893
      %v6019 = vpack.c.b16 %v5988, %v5987
      %v6020 = vpack.c.b16 %v5990, %v5989
      %v6021 = vpack.c.b16 %v5992, %v5991
      %v6022 = vpack.c.b16 %v5994, %v5993
      %v6023 = vpack.c.b16 %v5996, %v5995
      %v6024 = vpack.c.b16 %v5998, %v5997
      %v6025 = vpack.c.b16 %v6000, %v5999
      %v6026 = vpack.c.b16 %v6002, %v6001
      %v6027 = vpack.c.b16 %v6004, %v6003
      %v6028 = vpack.c.b16 %v6006, %v6005
      %v6029 = vpack.c.b16 %v6008, %v6007
      %v6030 = vpack.c.b16 %v6010, %v6009
      %v6031 = vpack.c.b16 %v6012, %v6011
      %v6032 = vpack.c.b16 %v6014, %v6013
      %v6033 = vpack.c.b16 %v6016, %v6015
      %v6034 = vpack.c.b16 %v6018, %v6017
      %6051 = vmatpush.bf16.msra.mxu0 %v6026
      %6052 = vmatpush.bf16.msra.mxu0 %v6025
      %6053 = vmatpush.bf16.msra.mxu0 %v6024
      %6054 = vmatpush.bf16.msra.mxu0 %v6023
      %6055 = vmatpush.bf16.msra.mxu0 %v6022
      %6056 = vmatpush.bf16.msra.mxu0 %v6021
      %6057 = vmatpush.bf16.msra.mxu0 %v6020
      %6058 = vmatpush.bf16.msra.mxu0 %v6019
      %6059 = vmatmul.bf16.gmra.mxu0 %v5951
      %v6060 = vpop.f32.mrf.mxu0
      %v6061 = vadd.f32 %v5896, %v6060
      %v6062 = vpop.f32.mrf.mxu0
      %6063 = vdwg.mxu0
      %6064 = vmatpush.bf16.msra.mxu0 %v6034
      %6065 = vmatpush.bf16.msra.mxu0 %v6033
      %6066 = vmatpush.bf16.msra.mxu0 %v6032
      %6067 = vmatpush.bf16.msra.mxu0 %v6031
      %6068 = vmatpush.bf16.msra.mxu0 %v6030
      %6069 = vmatpush.bf16.msra.mxu0 %v6029
      %6070 = vmatpush.bf16.msra.mxu0 %v6028
      %6071 = vmatpush.bf16.msra.mxu0 %v6027
      %6072 = vmatmul.bf16.gmra.mxu0 %v5952
      %v6073 = vpop.f32.mrf.mxu0
      %v6074 = vadd.f32 %v6061, %v6073
      %v6075 = vpop.f32.mrf.mxu0
      %6076 = vdwg.mxu0
      %v6077 = vmax.f32 %v6074, 0.0
      %v6078 = vld [vmem:[%s11] sm:$0x1]
      %v6080 = vperm.slane %v6078, 0
      %v6082 = vmul.f32 %v6077, %v6080
      %v6083 = vsel %vm1151, %v6082, 0.0
      %6084 = vadd.xlane.f32.xlu0 %v6083
      %v6085 = vpop.xlane.xlu0 %6084
      %v6086 = vld [vmem:[#allocation6] sm:$0x1]
      %v6088 = vperm.slane %v6086, 0
      %v6090 = vadd.f32 %v6085, %v6088
      %6091 = vst.msk [vmem:[%s445] sm:$0xff] %vm478, %v6090
      %p6092 = scmp.lt.s32.totalorder %s26, 1
      %s6093 = scalar_select %p6092, %s26, 1
      %s6094 = smul.addr %s6093, 8
      %s6095 = scalar_lea.vmem %s13, %s6094
      // Predicated region
      $region73: #{cnn_classifier_forward.1} parent=71 // pred_check
        %p6096 = pneg %p322
      $region74: #{cnn_classifier_forward.1} parent=71 // pred_check_branch
        %6098 = sbr.rel (%p6096) target = $region76
      $region75: #{cnn_classifier_forward.1} parent=71 // pred_region
        _
      $region76: #{cnn_classifier_forward.1} parent=71 // pred_fallthru
        _
    $region72: #{cnn_classifier_forward.1} parent=5 // pred_fallthru
      _
    %p6099 = scmp.le.s32.totalorder 2, %s21
    // Predicated region
    $region77: #{cnn_classifier_forward.1} parent=5 // pred_check
      %p6100 = pneg %p6099
    $region78: #{cnn_classifier_forward.1} parent=5 // pred_check_branch
      %6102 = sbr.rel (%p6100) target = $region80
    $region79: #{cnn_classifier_forward.1} parent=5 // pred_region
      %s6103 = ssub.s32 %s21, 2
      // Predicated region
      $region81: #{cnn_classifier_forward.1} parent=79 // pred_check
        %p6104 = pneg %p328
      $region82: #{cnn_classifier_forward.1} parent=79 // pred_check_branch
        %6106 = sbr.rel (%p6104) target = $region84
      $region83: #{cnn_classifier_forward.1} parent=79 // pred_region
        %p6107 = scmp.lt.s32.totalorder %s27, 1
        %s6108 = scalar_select %p6107, %s27, 1
        %s6109 = smul.addr %s6108, 8
        %s6110 = scalar_lea.vmem %s13, %s6109
      $region84: #{cnn_classifier_forward.1} parent=79 // pred_fallthru
        _
    $region80: #{cnn_classifier_forward.1} parent=5 // pred_fallthru
      _
  $region6: #{cnn_classifier_forward.1} parent=0 // loop_footer
    %s25 = sadd.s32 1, %s21
  $region7: #{cnn_classifier_forward.1} parent=0 // loop_footer_branch
    %20 = sbr.rel target = $region3
  $region8: #{cnn_classifier_forward.1} parent=0 // loop_exit
    _

</llo_original>
